<compile_context>
chip_gen: v5e
topology: v5e:2x2
jax: 0.10.0
libtpu: 0.0.40
codegen_flags: <defaults>
</compile_context>

<pallas_src>
import jax
import jax.numpy as jnp
from jax.experimental import pallas as pl
from jax.experimental.pallas import tpu as pltpu


# ------------------------------------------------------------------
# Pallas kernel: (patches @ weight) [+ bias] [-> tanh], with optional
# BatchNorm sum / sum-of-squares accumulated across the m grid axis.
# ------------------------------------------------------------------
def _make_conv_kernel(has_bias, compute_stats, post_tanh):
    def kernel(*refs):
        it = iter(refs)
        x_ref = next(it)
        w_ref = next(it)
        b_ref = next(it) if has_bias else None
        o_ref = next(it)
        if compute_stats:
            s_ref = next(it)
            q_ref = next(it)

            @pl.when(pl.program_id(1) == 0)
            def _():
                s_ref[...] = jnp.zeros_like(s_ref)
                q_ref[...] = jnp.zeros_like(q_ref)

        y = jnp.dot(x_ref[...], w_ref[...], preferred_element_type=jnp.float32)
        if has_bias:
            y = y + b_ref[...]
        if compute_stats:
            # Pre-norm statistics; the tile is already in vregs so this is near free.
            s_ref[...] += jnp.sum(y, axis=0, keepdims=True)
            q_ref[...] += jnp.sum(y * y, axis=0, keepdims=True)
        if post_tanh:
            y = jnp.tanh(y)
        o_ref[...] = y.astype(o_ref.dtype)

    return kernel


# ------------------------------------------------------------------
# Pallas wrapper: conv-as-matmul with layer-adaptive tiling
# ------------------------------------------------------------------
_TM_CAP = 1024
_VMEM_BUDGET = 12 * 1024 * 1024   # per-call working-set budget (safe on v5e/v6e/v7x)


def _cdiv(a, b):
    return -(-a // b)


def _round8(x):
    return max(8, _cdiv(x, 8) * 8)


def _pick_tm(m, k, n, out_bytes):
    """Largest row tile whose working set (2x-buffered bf16 patches + 2x-buffered bf16
    weights + 2x-buffered output + f32 accumulator) fits the VMEM budget."""
    fixed = 2 * (k * n * 2)                               # weights (double-buffered, bf16)
    per_row = 2 * (k * 2) + 2 * (n * out_bytes) + n * 4   # patches + output + f32 acc
    avail = max(_VMEM_BUDGET - fixed, 1 << 20)
    return max(8, min(_TM_CAP, (avail // per_row) // 8 * 8))


def conv_matmul(patches, weight, *, bias=None, compute_stats=False,
                post_tanh=False, out_dtype=jnp.bfloat16):
    """patches [M, K] (bf16) @ weight [K, N] (bf16), fused bias / tanh / BN stats.

    Returns (y [M, N] out_dtype, sum [chunks, 1, N] f32 | None, sumsq | None)."""
    patches = patches.astype(jnp.bfloat16)
    weight = weight.astype(jnp.bfloat16)
    M, K = patches.shape
    _, N = weight.shape
    out_bytes = jnp.dtype(out_dtype).itemsize

    tm = _pick_tm(M, K, N, out_bytes)
    n_chunks = 2 if M > 8 else 1                 # leading "parallel" axis -> v7x megacore
    tm = min(tm, _round8(_cdiv(M, n_chunks)))
    tpc = _cdiv(_cdiv(M, tm), n_chunks)          # m tiles per chunk
    mp = n_chunks * tpc * tm

    if compute_stats and bias is not None and mp != M:
        # Padded zero rows would contribute `bias` to the BN sums.  Never happens in this
        # network (every BN'd conv is bias-free), but guard against silent corruption.
        raise ValueError("BN stats + bias require M to be a multiple of the tile size")
    if mp != M:
        patches = jnp.pad(patches, ((0, mp - M), (0, 0)))

    in_specs = [
        pl.BlockSpec((tm, K), lambda c, m: (c * tpc + m, 0)),
        pl.BlockSpec((K, N), lambda c, m: (0, 0)),
    ]
    inputs = [patches, weight]
    if bias is not None:
        in_specs.append(pl.BlockSpec((1, N), lambda c, m: (0, 0)))
        inputs.append(bias.reshape(1, N).astype(jnp.float32))

    out_specs = [pl.BlockSpec((tm, N), lambda c, m: (c * tpc + m, 0))]
    out_shape = [jax.ShapeDtypeStruct((mp, N), out_dtype)]
    if compute_stats:
        out_specs += [pl.BlockSpec((None, 1, N), lambda c, m: (c, 0, 0))] * 2
        out_shape += [jax.ShapeDtypeStruct((n_chunks, 1, N), jnp.float32)] * 2

    outs = pl.pallas_call(
        _make_conv_kernel(bias is not None, compute_stats, post_tanh),
        grid=(n_chunks, tpc),
        in_specs=in_specs,
        out_specs=tuple(out_specs),
        out_shape=tuple(out_shape),
        compiler_params=pltpu.CompilerParams(
            dimension_semantics=("parallel", "arbitrary"),
            vmem_limit_bytes=32 * 1024 * 1024),
    )(*inputs)

    if compute_stats:
        y, s, q = outs
        return y[:M], s, q
    y = outs[0] if isinstance(outs, (tuple, list)) else outs
    return y[:M], None, None


# ------------------------------------------------------------------
# Elementwise prep (deferred BN affine + activation, bf16 at source) and im2col
# ------------------------------------------------------------------
_BN_EPS = 1e-5


def _affine_act(z, scale, shift, act):
    """act(z * scale + shift) per channel, emitted in bf16.  Applied once per input
    element, before zero padding / patch extraction -- the exact BN->act->conv order of
    the reference module."""
    x = z.astype(jnp.float32) * scale + shift
    if act == "lrelu":
        x = jnp.where(x > 0, x, 0.2 * x)
    elif act == "relu":
        x = jnp.maximum(x, 0.0)
    return x.astype(jnp.bfloat16)


def _patches_down(x):
    """x [B,H,W,C] bf16 -> im2col patches [B*OH*OW, 16*C] for Conv2d(k=4, s=2, p=1)."""
    B, H, W, C = x.shape
    OH, OW = H // 2, W // 2
    xp = jnp.pad(x, ((0, 0), (1, 1), (1, 1), (0, 0)))
    taps = [xp[:, kh:kh + 2 * OH:2, kw:kw + 2 * OW:2, :]
            for kh in range(4) for kw in range(4)]
    return jnp.stack(taps, axis=3).reshape(B * OH * OW, 16 * C)


def _patches_up_union(x):
    """3x3-union sub-pixel form of ConvTranspose2d(k=4, s=2, p=1): x [B,H,W,C] bf16 ->
    patches [B*H*W, 9*C]; times the zero-structured [9*C, 4*Cout] weight this yields all
    four output-pixel parities per input position in one lane-dense output row."""
    B, H, W, C = x.shape
    xp = jnp.pad(x, ((0, 0), (1, 1), (1, 1), (0, 0)))
    taps = [xp[:, r:r + H, s:s + W, :] for r in range(3) for s in range(3)]
    return jnp.stack(taps, axis=3).reshape(B * H * W, 9 * C)


def _depth_to_space(y, B, H, W, C):
    """y [B*H*W, 4*C] (parity-major lanes) -> [B, 2H, 2W, C]."""
    y = y.reshape(B, H, W, 2, 2, C)
    return jnp.transpose(y, (0, 1, 3, 2, 4, 5)).reshape(B, 2 * H, 2 * W, C)


# ------------------------------------------------------------------
# BatchNorm (train-mode batch statistics) folded into a deferred per-channel affine
# ------------------------------------------------------------------
def _bn_affine(s, q, count, gamma, beta):
    n = gamma.shape[0]
    ts = jnp.sum(s.reshape(-1, n), axis=0)   # reduce chunks (and parity groups for up)
    tq = jnp.sum(q.reshape(-1, n), axis=0)
    mean = ts / count
    var = jnp.maximum(tq / count - mean * mean, 0.0)   # biased var, like PyTorch BN train
    scale = gamma * jax.lax.rsqrt(var + _BN_EPS)
    shift = beta - mean * scale
    return scale, shift


def _identity_affine(c):
    return jnp.ones((c,), jnp.float32), jnp.zeros((c,), jnp.float32)


# ------------------------------------------------------------------
# Layers
# ------------------------------------------------------------------
def down_layer(p, z, aff, pre_act):
    """[LeakyReLU ->] Conv2d(k=4,s=2,p=1) [-> BN].  Input is the producer's pre-norm
    tensor plus its deferred (scale, shift); output follows the same convention."""
    x = _affine_act(z, aff[0], aff[1], pre_act)
    B, H, W, _ = x.shape
    cout = p["w"].shape[1]
    y, s, q = conv_matmul(_patches_down(x), p["w"], compute_stats=("bn" in p))
    z_out = y.reshape(B, H // 2, W // 2, cout)
    if "bn" in p:
        aff_out = _bn_affine(s, q, float(B * (H // 2) * (W // 2)),
                             p["bn"]["gamma"], p["bn"]["beta"])
    else:
        aff_out = _identity_affine(cout)
    return z_out, aff_out


def up_layer(p, z, aff, post_tanh=False, out_dtype=jnp.bfloat16):
    """ReLU -> ConvTranspose2d(k=4,s=2,p=1) [-> +bias -> Tanh] [-> BN deferred]."""
    x = _affine_act(z, aff[0], aff[1], "relu")
    B, H, W, _ = x.shape
    cout = p["w"].shape[1] // 4
    bias = jnp.tile(p["b"], 4) if "b" in p else None    # one bias copy per parity lane-block
    y, s, q = conv_matmul(_patches_up_union(x), p["w"], bias=bias,
                          compute_stats=("bn" in p), post_tanh=post_tanh,
                          out_dtype=out_dtype)
    z_out = _depth_to_space(y, B, H, W, cout)
    if "bn" in p:
        aff_out = _bn_affine(s, q, float(B * 4 * H * W),
                             p["bn"]["gamma"], p["bn"]["beta"])
    else:
        aff_out = _identity_affine(cout)
    return z_out, aff_out


def _cat(z_a, aff_a, z_b, aff_b):
    return (jnp.concatenate([z_a, z_b], axis=-1),
            (jnp.concatenate([aff_a[0], aff_b[0]]),
             jnp.concatenate([aff_a[1], aff_b[1]])))


# ------------------------------------------------------------------
# Parameters (deterministic synthetic init; layouts the kernels consume)
# ------------------------------------------------------------------
def _pack_convT_union(w_pt):
    """PyTorch ConvTranspose2d weight [Cin, Cout, 4, 4] -> zero-structured union weight
    [9*Cin, 4*Cout].  Rows: 3x3 input window (r*3+s major, Cin minor); columns: output
    parities (py*2+px major, Cout minor).  Tap (r,s) feeds parity (py,px) with kernel
    element (kh, kw) = (3+py-2r, 3+px-2s) iff r-py, s-px in {0, 1}; zero otherwise."""
    cin, cout = w_pt.shape[:2]
    wu = jnp.zeros((3, 3, cin, 2, 2, cout), w_pt.dtype)
    for py in range(2):
        for px in range(2):
            for a in range(2):
                for b in range(2):
                    wu = wu.at[py + a, px + b, :, py, px, :].set(
                        w_pt[:, :, 3 - py - 2 * a, 3 - px - 2 * b])
    return wu.reshape(9 * cin, 4 * cout)


def init_params(key, input_nc, output_nc, ngf, depth):
    """Synthetic weights, pre-packed for the kernels (stored bf16).
    # TODO(synk): loading a real PyTorch checkpoint needs the same repack:
    #   Conv2d [Cout,Cin,4,4]          -> transpose(2,3,1,0).reshape(16*Cin, Cout)
    #   ConvTranspose2d [Cin,Cout,4,4] -> _pack_convT_union
    """
    keys = iter(jax.random.split(key, 4 * depth))
    inner = [ngf * min(2 ** d, 8) for d in range(depth)]   # inner_nc of block d+1

    def bn(c):
        return {"gamma": jnp.ones((c,), jnp.float32),
                "beta": jnp.zeros((c,), jnp.float32)}

    downs = []
    for d in range(depth):
        cin = input_nc if d == 0 else inner[d - 1]
        cout = inner[d]
        w_pt = 0.02 * jax.random.normal(next(keys), (cout, cin, 4, 4), jnp.float32)
        p = {"w": jnp.transpose(w_pt, (2, 3, 1, 0))
                     .reshape(16 * cin, cout).astype(jnp.bfloat16)}
        if 0 < d < depth - 1:          # outermost / innermost down path has no norm
            p["bn"] = bn(cout)
        downs.append(p)

    ups = []
    for d in range(depth):
        cout = output_nc if d == 0 else inner[d - 1]
        cin = inner[d] if d == depth - 1 else 2 * inner[d]
        w_pt = 0.02 * jax.random.normal(next(keys), (cin, cout, 4, 4), jnp.float32)
        p = {"w": _pack_convT_union(w_pt).astype(jnp.bfloat16)}
        if d == 0:                     # outermost ConvTranspose2d: bias=True, then Tanh
            p["b"] = 0.02 * jax.random.normal(next(keys), (cout,), jnp.float32)
        else:
            p["bn"] = bn(cout)
        ups.append(p)
    return {"down": downs, "up": ups}


# ------------------------------------------------------------------
# Full forward pass of the nested UnetSkipConnectionBlock stack
# ------------------------------------------------------------------
def unet_forward(params, x):
    """x: [B, input_nc, H, W] (NCHW), H and W divisible by 2**depth.
    Returns [B, output_nc, H, W] (outermost block output)."""
    downs, ups = params["down"], params["up"]
    depth = len(downs)
    h = jnp.transpose(x, (0, 2, 3, 1))                    # NHWC
    aff = _identity_affine(h.shape[-1])

    # Down path (block 1 = outermost ... block `depth` = innermost).
    acts = []
    z = h
    for d in range(depth):
        z, aff = down_layer(downs[d], z, aff, "none" if d == 0 else "lrelu")
        acts.append((z, aff))

    # Up path: block b returns cat([x_b, up_b(submodule_out)], channel) except outermost.
    u, uaff = up_layer(ups[depth - 1], *acts[depth - 1])          # innermost up
    for b in range(depth - 1, 1, -1):                             # middle blocks
        zc, ac = _cat(*acts[b - 1], u, uaff)
        u, uaff = up_layer(ups[b - 1], zc, ac)
    zc, ac = _cat(*acts[0], u, uaff)                              # outermost consumes cat
    out, _ = up_layer(ups[0], zc, ac, post_tanh=True, out_dtype=jnp.float32)
    return jnp.transpose(out, (0, 3, 1, 2))                       # back to NCHW


# ------------------------------------------------------------------
if __name__ == "__main__":
    # 4-level block stack (outermost + 2 middle + innermost): 16 -> 8 -> 4 -> 2 -> 1.
    input_nc, output_nc, ngf, depth = 4, 3, 8, 4
    B, H, W = 2, 16, 16

    key = jax.random.PRNGKey(0)
    pkey, xkey = jax.random.split(key)
    params = init_params(pkey, input_nc, output_nc, ngf, depth)
    x = jax.random.normal(xkey, (B, input_nc, H, W), jnp.float32)

    out = jax.block_until_ready(jax.jit(unet_forward)(params, x))

    assert out.shape == (B, output_nc, H, W), out.shape
    assert bool(jnp.all(jnp.isfinite(out)))
    assert float(jnp.max(jnp.abs(out))) <= 1.0 + 1e-5     # outermost Tanh range
    print("KERNEL_OK")
</pallas_src>

<mosaic_0001>
module attributes {stable_mosaic.version = 11 : i64} {
  func.func @kernel(%arg0: i32, %arg1: i32, %arg2: memref<64x64xbf16, #tpu.memory_space<vmem>>, %arg3: memref<64x8xbf16, #tpu.memory_space<vmem>>, %arg4: memref<64x8xbf16, #tpu.memory_space<vmem>>) attributes {dimension_semantics = [#tpu.dimension_semantics<parallel>, #tpu.dimension_semantics<arbitrary>], iteration_bounds = array<i64: 2, 1>, scalar_prefetch = 0 : i64, scratch_operands = 0 : i64, tpu.core_type = #tpu.core_type<tc>, window_params = [{transform_indices = @transform_0, window_bounds = array<i64: 64, 64>}, {pipeline_mode = #tpu.pipeline_mode<synchronous>, transform_indices = @transform_1, window_bounds = array<i64: 64, 8>}, {transform_indices = @transform_2, window_bounds = array<i64: 64, 8>}]} {
    %c0 = arith.constant 0 : index
    %c0_0 = arith.constant 0 : index
    %0 = vector.load %arg2[%c0, %c0_0] : memref<64x64xbf16, #tpu.memory_space<vmem>>, vector<64x64xbf16>
    %c0_1 = arith.constant 0 : index
    %c0_2 = arith.constant 0 : index
    %1 = vector.load %arg3[%c0_1, %c0_2] : memref<64x8xbf16, #tpu.memory_space<vmem>>, vector<64x8xbf16>
    %cst = arith.constant dense<0.000000e+00> : vector<64x8xf32>
    %2 = tpu.matmul %0, %1, %cst {dimension_numbers = #tpu.dot_dimension_numbers<[1], [0], [0], [1], [0, 0, 1, 1], [], []>} : vector<64x64xbf16>, vector<64x8xbf16>, vector<64x8xf32> -> vector<64x8xf32>
    %3 = arith.truncf %2 : vector<64x8xf32> to vector<64x8xbf16>
    %c0_3 = arith.constant 0 : index
    %c0_4 = arith.constant 0 : index
    %4 = vector.load %arg4[%c0_3, %c0_4] : memref<64x8xbf16, #tpu.memory_space<vmem>>, vector<64x8xbf16>
    tpu.vector_store %arg4[%c0_3, %c0_4], %3 {strides = array<i32>} : memref<64x8xbf16, #tpu.memory_space<vmem>>, vector<64x8xbf16>,
    return
  }
  func.func @transform_0(%arg0: i32, %arg1: i32) -> (i32, i32) {
    %c1_i32 = arith.constant 1 : i32
    %0 = arith.muli %arg0, %c1_i32 : i32
    %1 = arith.addi %0, %arg1 : i32
    %c0_i32 = arith.constant 0 : i32
    %c0_i32_0 = arith.constant 0 : i32
    return %1, %c0_i32 : i32, i32
  }
  func.func @transform_1(%arg0: i32, %arg1: i32) -> (i32, i32) {
    %c0_i32 = arith.constant 0 : i32
    %c0_i32_0 = arith.constant 0 : i32
    %c0_i32_1 = arith.constant 0 : i32
    return %c0_i32, %c0_i32_0 : i32, i32
  }
  func.func @transform_2(%arg0: i32, %arg1: i32) -> (i32, i32) {
    %c1_i32 = arith.constant 1 : i32
    %0 = arith.muli %arg0, %c1_i32 : i32
    %1 = arith.addi %0, %arg1 : i32
    %c0_i32 = arith.constant 0 : i32
    %c0_i32_0 = arith.constant 0 : i32
    return %1, %c0_i32 : i32, i32
  }
}

module attributes {stable_mosaic.version = 11 : i64} {
  func.func @kernel(%arg0: i32, %arg1: i32, %arg2: memref<16x128xbf16, #tpu.memory_space<vmem>>, %arg3: memref<128x16xbf16, #tpu.memory_space<vmem>>, %arg4: memref<16x16xbf16, #tpu.memory_space<vmem>>, %arg5: memref<1x1x16xf32, #tpu.memory_space<vmem>>, %arg6: memref<1x1x16xf32, #tpu.memory_space<vmem>>) attributes {dimension_semantics = [#tpu.dimension_semantics<parallel>, #tpu.dimension_semantics<arbitrary>], iteration_bounds = array<i64: 2, 1>, scalar_prefetch = 0 : i64, scratch_operands = 0 : i64, tpu.core_type = #tpu.core_type<tc>, window_params = [{transform_indices = @transform_0, window_bounds = array<i64: 16, 128>}, {pipeline_mode = #tpu.pipeline_mode<synchronous>, transform_indices = @transform_1, window_bounds = array<i64: 128, 16>}, {transform_indices = @transform_2, window_bounds = array<i64: 16, 16>}, {transform_indices = @transform_3, window_bounds = array<i64: 1, 1, 16>}, {transform_indices = @transform_4, window_bounds = array<i64: 1, 1, 16>}]} {
    %c0_i32 = arith.constant 0 : i32
    %0 = arith.cmpi eq, %arg1, %c0_i32 : i32
    %1 = arith.extui %0 : i1 to i32
    %c0_i32_0 = arith.constant 0 : i32
    %2 = arith.cmpi ne, %1, %c0_i32_0 : i32
    scf.if %2 {
      %cst_20 = arith.constant 0.000000e+00 : f32
      %25 = vector.broadcast %cst_20 : f32 to vector<1x16xf32>
      %c0_21 = arith.constant 0 : index
      %c0_22 = arith.constant 0 : index
      %c0_23 = arith.constant 0 : index
      %26 = vector.load %arg5[%c0_21, %c0_22, %c0_23] : memref<1x1x16xf32, #tpu.memory_space<vmem>>, vector<1x1x16xf32>
      %27 = vector.shape_cast %26 : vector<1x1x16xf32> to vector<1x16xf32>
      %28 = vector.shape_cast %25 : vector<1x16xf32> to vector<1x1x16xf32>
      tpu.vector_store %arg5[%c0_21, %c0_22, %c0_23], %28 {strides = array<i32>} : memref<1x1x16xf32, #tpu.memory_space<vmem>>, vector<1x1x16xf32>,
      %cst_24 = arith.constant 0.000000e+00 : f32
      %29 = vector.broadcast %cst_24 : f32 to vector<1x16xf32>
      %c0_25 = arith.constant 0 : index
      %c0_26 = arith.constant 0 : index
      %c0_27 = arith.constant 0 : index
      %30 = vector.load %arg6[%c0_25, %c0_26, %c0_27] : memref<1x1x16xf32, #tpu.memory_space<vmem>>, vector<1x1x16xf32>
      %31 = vector.shape_cast %30 : vector<1x1x16xf32> to vector<1x16xf32>
      %32 = vector.shape_cast %29 : vector<1x16xf32> to vector<1x1x16xf32>
      tpu.vector_store %arg6[%c0_25, %c0_26, %c0_27], %32 {strides = array<i32>} : memref<1x1x16xf32, #tpu.memory_space<vmem>>, vector<1x1x16xf32>,
    } else {
    }
    %c0 = arith.constant 0 : index
    %c0_1 = arith.constant 0 : index
    %3 = vector.load %arg2[%c0, %c0_1] : memref<16x128xbf16, #tpu.memory_space<vmem>>, vector<16x128xbf16>
    %c0_2 = arith.constant 0 : index
    %c0_3 = arith.constant 0 : index
    %4 = vector.load %arg3[%c0_2, %c0_3] : memref<128x16xbf16, #tpu.memory_space<vmem>>, vector<128x16xbf16>
    %cst = arith.constant dense<0.000000e+00> : vector<16x16xf32>
    %5 = tpu.matmul %3, %4, %cst {dimension_numbers = #tpu.dot_dimension_numbers<[1], [0], [0], [1], [0, 0, 1, 1], [], []>} : vector<16x128xbf16>, vector<128x16xbf16>, vector<16x16xf32> -> vector<16x16xf32>
    %c0_4 = arith.constant 0 : index
    %c0_5 = arith.constant 0 : index
    %c0_6 = arith.constant 0 : index
    %6 = vector.load %arg5[%c0_4, %c0_5, %c0_6] : memref<1x1x16xf32, #tpu.memory_space<vmem>>, vector<1x1x16xf32>
    %7 = vector.shape_cast %6 : vector<1x1x16xf32> to vector<1x16xf32>
    %cst_7 = arith.constant dense<0.000000e+00> : vector<16xf32>
    %8 = vector.multi_reduction <add>, %5, %cst_7 [0] : vector<16x16xf32> to vector<16xf32>
    %9 = vector.shape_cast %8 : vector<16xf32> to vector<1x16xf32>
    %10 = arith.addf %7, %9 : vector<1x16xf32>
    %c0_8 = arith.constant 0 : index
    %c0_9 = arith.constant 0 : index
    %c0_10 = arith.constant 0 : index
    %11 = vector.load %arg5[%c0_8, %c0_9, %c0_10] : memref<1x1x16xf32, #tpu.memory_space<vmem>>, vector<1x1x16xf32>
    %12 = vector.shape_cast %11 : vector<1x1x16xf32> to vector<1x16xf32>
    %13 = vector.shape_cast %10 : vector<1x16xf32> to vector<1x1x16xf32>
    tpu.vector_store %arg5[%c0_8, %c0_9, %c0_10], %13 {strides = array<i32>} : memref<1x1x16xf32, #tpu.memory_space<vmem>>, vector<1x1x16xf32>,
    %c0_11 = arith.constant 0 : index
    %c0_12 = arith.constant 0 : index
    %c0_13 = arith.constant 0 : index
    %14 = vector.load %arg6[%c0_11, %c0_12, %c0_13] : memref<1x1x16xf32, #tpu.memory_space<vmem>>, vector<1x1x16xf32>
    %15 = vector.shape_cast %14 : vector<1x1x16xf32> to vector<1x16xf32>
    %16 = arith.mulf %5, %5 : vector<16x16xf32>
    %cst_14 = arith.constant dense<0.000000e+00> : vector<16xf32>
    %17 = vector.multi_reduction <add>, %16, %cst_14 [0] : vector<16x16xf32> to vector<16xf32>
    %18 = vector.shape_cast %17 : vector<16xf32> to vector<1x16xf32>
    %19 = arith.addf %15, %18 : vector<1x16xf32>
    %c0_15 = arith.constant 0 : index
    %c0_16 = arith.constant 0 : index
    %c0_17 = arith.constant 0 : index
    %20 = vector.load %arg6[%c0_15, %c0_16, %c0_17] : memref<1x1x16xf32, #tpu.memory_space<vmem>>, vector<1x1x16xf32>
    %21 = vector.shape_cast %20 : vector<1x1x16xf32> to vector<1x16xf32>
    %22 = vector.shape_cast %19 : vector<1x16xf32> to vector<1x1x16xf32>
    tpu.vector_store %arg6[%c0_15, %c0_16, %c0_17], %22 {strides = array<i32>} : memref<1x1x16xf32, #tpu.memory_space<vmem>>, vector<1x1x16xf32>,
    %23 = arith.truncf %5 : vector<16x16xf32> to vector<16x16xbf16>
    %c0_18 = arith.constant 0 : index
    %c0_19 = arith.constant 0 : index
    %24 = vector.load %arg4[%c0_18, %c0_19] : memref<16x16xbf16, #tpu.memory_space<vmem>>, vector<16x16xbf16>
    tpu.vector_store %arg4[%c0_18, %c0_19], %23 {strides = array<i32>} : memref<16x16xbf16, #tpu.memory_space<vmem>>, vector<16x16xbf16>,
    return
  }
  func.func @transform_0(%arg0: i32, %arg1: i32) -> (i32, i32) {
    %c1_i32 = arith.constant 1 : i32
    %0 = arith.muli %arg0, %c1_i32 : i32
    %1 = arith.addi %0, %arg1 : i32
    %c0_i32 = arith.constant 0 : i32
    %c0_i32_0 = arith.constant 0 : i32
    return %1, %c0_i32 : i32, i32
  }
  func.func @transform_1(%arg0: i32, %arg1: i32) -> (i32, i32) {
    %c0_i32 = arith.constant 0 : i32
    %c0_i32_0 = arith.constant 0 : i32
    %c0_i32_1 = arith.constant 0 : i32
    return %c0_i32, %c0_i32_0 : i32, i32
  }
  func.func @transform_2(%arg0: i32, %arg1: i32) -> (i32, i32) {
    %c1_i32 = arith.constant 1 : i32
    %0 = arith.muli %arg0, %c1_i32 : i32
    %1 = arith.addi %0, %arg1 : i32
    %c0_i32 = arith.constant 0 : i32
    %c0_i32_0 = arith.constant 0 : i32
    return %1, %c0_i32 : i32, i32
  }
  func.func @transform_3(%arg0: i32, %arg1: i32) -> (i32, i32, i32) {
    %c0_i32 = arith.constant 0 : i32
    %c0_i32_0 = arith.constant 0 : i32
    %c0_i32_1 = arith.constant 0 : i32
    return %arg0, %c0_i32, %c0_i32_0 : i32, i32, i32
  }
  func.func @transform_4(%arg0: i32, %arg1: i32) -> (i32, i32, i32) {
    %c0_i32 = arith.constant 0 : i32
    %c0_i32_0 = arith.constant 0 : i32
    %c0_i32_1 = arith.constant 0 : i32
    return %arg0, %c0_i32, %c0_i32_0 : i32, i32, i32
  }
}

module attributes {stable_mosaic.version = 11 : i64} {
  func.func @kernel(%arg0: i32, %arg1: i32, %arg2: memref<8x256xbf16, #tpu.memory_space<vmem>>, %arg3: memref<256x32xbf16, #tpu.memory_space<vmem>>, %arg4: memref<8x32xbf16, #tpu.memory_space<vmem>>, %arg5: memref<1x1x32xf32, #tpu.memory_space<vmem>>, %arg6: memref<1x1x32xf32, #tpu.memory_space<vmem>>) attributes {dimension_semantics = [#tpu.dimension_semantics<parallel>, #tpu.dimension_semantics<arbitrary>], iteration_bounds = array<i64: 1, 1>, scalar_prefetch = 0 : i64, scratch_operands = 0 : i64, tpu.core_type = #tpu.core_type<tc>, window_params = [{transform_indices = @transform_0, window_bounds = array<i64: 8, 256>}, {pipeline_mode = #tpu.pipeline_mode<synchronous>, transform_indices = @transform_1, window_bounds = array<i64: 256, 32>}, {transform_indices = @transform_2, window_bounds = array<i64: 8, 32>}, {transform_indices = @transform_3, window_bounds = array<i64: 1, 1, 32>}, {transform_indices = @transform_4, window_bounds = array<i64: 1, 1, 32>}]} {
    %c0_i32 = arith.constant 0 : i32
    %0 = arith.cmpi eq, %arg1, %c0_i32 : i32
    %1 = arith.extui %0 : i1 to i32
    %c0_i32_0 = arith.constant 0 : i32
    %2 = arith.cmpi ne, %1, %c0_i32_0 : i32
    scf.if %2 {
      %cst_20 = arith.constant 0.000000e+00 : f32
      %25 = vector.broadcast %cst_20 : f32 to vector<1x32xf32>
      %c0_21 = arith.constant 0 : index
      %c0_22 = arith.constant 0 : index
      %c0_23 = arith.constant 0 : index
      %26 = vector.load %arg5[%c0_21, %c0_22, %c0_23] : memref<1x1x32xf32, #tpu.memory_space<vmem>>, vector<1x1x32xf32>
      %27 = vector.shape_cast %26 : vector<1x1x32xf32> to vector<1x32xf32>
      %28 = vector.shape_cast %25 : vector<1x32xf32> to vector<1x1x32xf32>
      tpu.vector_store %arg5[%c0_21, %c0_22, %c0_23], %28 {strides = array<i32>} : memref<1x1x32xf32, #tpu.memory_space<vmem>>, vector<1x1x32xf32>,
      %cst_24 = arith.constant 0.000000e+00 : f32
      %29 = vector.broadcast %cst_24 : f32 to vector<1x32xf32>
      %c0_25 = arith.constant 0 : index
      %c0_26 = arith.constant 0 : index
      %c0_27 = arith.constant 0 : index
      %30 = vector.load %arg6[%c0_25, %c0_26, %c0_27] : memref<1x1x32xf32, #tpu.memory_space<vmem>>, vector<1x1x32xf32>
      %31 = vector.shape_cast %30 : vector<1x1x32xf32> to vector<1x32xf32>
      %32 = vector.shape_cast %29 : vector<1x32xf32> to vector<1x1x32xf32>
      tpu.vector_store %arg6[%c0_25, %c0_26, %c0_27], %32 {strides = array<i32>} : memref<1x1x32xf32, #tpu.memory_space<vmem>>, vector<1x1x32xf32>,
    } else {
    }
    %c0 = arith.constant 0 : index
    %c0_1 = arith.constant 0 : index
    %3 = vector.load %arg2[%c0, %c0_1] : memref<8x256xbf16, #tpu.memory_space<vmem>>, vector<8x256xbf16>
    %c0_2 = arith.constant 0 : index
    %c0_3 = arith.constant 0 : index
    %4 = vector.load %arg3[%c0_2, %c0_3] : memref<256x32xbf16, #tpu.memory_space<vmem>>, vector<256x32xbf16>
    %cst = arith.constant dense<0.000000e+00> : vector<8x32xf32>
    %5 = tpu.matmul %3, %4, %cst {dimension_numbers = #tpu.dot_dimension_numbers<[1], [0], [0], [1], [0, 0, 1, 1], [], []>} : vector<8x256xbf16>, vector<256x32xbf16>, vector<8x32xf32> -> vector<8x32xf32>
    %c0_4 = arith.constant 0 : index
    %c0_5 = arith.constant 0 : index
    %c0_6 = arith.constant 0 : index
    %6 = vector.load %arg5[%c0_4, %c0_5, %c0_6] : memref<1x1x32xf32, #tpu.memory_space<vmem>>, vector<1x1x32xf32>
    %7 = vector.shape_cast %6 : vector<1x1x32xf32> to vector<1x32xf32>
    %cst_7 = arith.constant dense<0.000000e+00> : vector<32xf32>
    %8 = vector.multi_reduction <add>, %5, %cst_7 [0] : vector<8x32xf32> to vector<32xf32>
    %9 = vector.shape_cast %8 : vector<32xf32> to vector<1x32xf32>
    %10 = arith.addf %7, %9 : vector<1x32xf32>
    %c0_8 = arith.constant 0 : index
    %c0_9 = arith.constant 0 : index
    %c0_10 = arith.constant 0 : index
    %11 = vector.load %arg5[%c0_8, %c0_9, %c0_10] : memref<1x1x32xf32, #tpu.memory_space<vmem>>, vector<1x1x32xf32>
    %12 = vector.shape_cast %11 : vector<1x1x32xf32> to vector<1x32xf32>
    %13 = vector.shape_cast %10 : vector<1x32xf32> to vector<1x1x32xf32>
    tpu.vector_store %arg5[%c0_8, %c0_9, %c0_10], %13 {strides = array<i32>} : memref<1x1x32xf32, #tpu.memory_space<vmem>>, vector<1x1x32xf32>,
    %c0_11 = arith.constant 0 : index
    %c0_12 = arith.constant 0 : index
    %c0_13 = arith.constant 0 : index
    %14 = vector.load %arg6[%c0_11, %c0_12, %c0_13] : memref<1x1x32xf32, #tpu.memory_space<vmem>>, vector<1x1x32xf32>
    %15 = vector.shape_cast %14 : vector<1x1x32xf32> to vector<1x32xf32>
    %16 = arith.mulf %5, %5 : vector<8x32xf32>
    %cst_14 = arith.constant dense<0.000000e+00> : vector<32xf32>
    %17 = vector.multi_reduction <add>, %16, %cst_14 [0] : vector<8x32xf32> to vector<32xf32>
    %18 = vector.shape_cast %17 : vector<32xf32> to vector<1x32xf32>
    %19 = arith.addf %15, %18 : vector<1x32xf32>
    %c0_15 = arith.constant 0 : index
    %c0_16 = arith.constant 0 : index
    %c0_17 = arith.constant 0 : index
    %20 = vector.load %arg6[%c0_15, %c0_16, %c0_17] : memref<1x1x32xf32, #tpu.memory_space<vmem>>, vector<1x1x32xf32>
    %21 = vector.shape_cast %20 : vector<1x1x32xf32> to vector<1x32xf32>
    %22 = vector.shape_cast %19 : vector<1x32xf32> to vector<1x1x32xf32>
    tpu.vector_store %arg6[%c0_15, %c0_16, %c0_17], %22 {strides = array<i32>} : memref<1x1x32xf32, #tpu.memory_space<vmem>>, vector<1x1x32xf32>,
    %23 = arith.truncf %5 : vector<8x32xf32> to vector<8x32xbf16>
    %c0_18 = arith.constant 0 : index
    %c0_19 = arith.constant 0 : index
    %24 = vector.load %arg4[%c0_18, %c0_19] : memref<8x32xbf16, #tpu.memory_space<vmem>>, vector<8x32xbf16>
    tpu.vector_store %arg4[%c0_18, %c0_19], %23 {strides = array<i32>} : memref<8x32xbf16, #tpu.memory_space<vmem>>, vector<8x32xbf16>,
    return
  }
  func.func @transform_0(%arg0: i32, %arg1: i32) -> (i32, i32) {
    %c1_i32 = arith.constant 1 : i32
    %0 = arith.muli %arg0, %c1_i32 : i32
    %1 = arith.addi %0, %arg1 : i32
    %c0_i32 = arith.constant 0 : i32
    %c0_i32_0 = arith.constant 0 : i32
    return %1, %c0_i32 : i32, i32
  }
  func.func @transform_1(%arg0: i32, %arg1: i32) -> (i32, i32) {
    %c0_i32 = arith.constant 0 : i32
    %c0_i32_0 = arith.constant 0 : i32
    %c0_i32_1 = arith.constant 0 : i32
    return %c0_i32, %c0_i32_0 : i32, i32
  }
  func.func @transform_2(%arg0: i32, %arg1: i32) -> (i32, i32) {
    %c1_i32 = arith.constant 1 : i32
    %0 = arith.muli %arg0, %c1_i32 : i32
    %1 = arith.addi %0, %arg1 : i32
    %c0_i32 = arith.constant 0 : i32
    %c0_i32_0 = arith.constant 0 : i32
    return %1, %c0_i32 : i32, i32
  }
  func.func @transform_3(%arg0: i32, %arg1: i32) -> (i32, i32, i32) {
    %c0_i32 = arith.constant 0 : i32
    %c0_i32_0 = arith.constant 0 : i32
    %c0_i32_1 = arith.constant 0 : i32
    return %arg0, %c0_i32, %c0_i32_0 : i32, i32, i32
  }
  func.func @transform_4(%arg0: i32, %arg1: i32) -> (i32, i32, i32) {
    %c0_i32 = arith.constant 0 : i32
    %c0_i32_0 = arith.constant 0 : i32
    %c0_i32_1 = arith.constant 0 : i32
    return %arg0, %c0_i32, %c0_i32_0 : i32, i32, i32
  }
}

module attributes {stable_mosaic.version = 11 : i64} {
  func.func @kernel(%arg0: i32, %arg1: i32, %arg2: memref<8x512xbf16, #tpu.memory_space<vmem>>, %arg3: memref<512x64xbf16, #tpu.memory_space<vmem>>, %arg4: memref<8x64xbf16, #tpu.memory_space<vmem>>) attributes {dimension_semantics = [#tpu.dimension_semantics<parallel>, #tpu.dimension_semantics<arbitrary>], iteration_bounds = array<i64: 1, 1>, scalar_prefetch = 0 : i64, scratch_operands = 0 : i64, tpu.core_type = #tpu.core_type<tc>, window_params = [{transform_indices = @transform_0, window_bounds = array<i64: 8, 512>}, {pipeline_mode = #tpu.pipeline_mode<synchronous>, transform_indices = @transform_1, window_bounds = array<i64: 512, 64>}, {transform_indices = @transform_2, window_bounds = array<i64: 8, 64>}]} {
    %c0 = arith.constant 0 : index
    %c0_0 = arith.constant 0 : index
    %0 = vector.load %arg2[%c0, %c0_0] : memref<8x512xbf16, #tpu.memory_space<vmem>>, vector<8x512xbf16>
    %c0_1 = arith.constant 0 : index
    %c0_2 = arith.constant 0 : index
    %1 = vector.load %arg3[%c0_1, %c0_2] : memref<512x64xbf16, #tpu.memory_space<vmem>>, vector<512x64xbf16>
    %cst = arith.constant dense<0.000000e+00> : vector<8x64xf32>
    %2 = tpu.matmul %0, %1, %cst {dimension_numbers = #tpu.dot_dimension_numbers<[1], [0], [0], [1], [0, 0, 1, 1], [], []>} : vector<8x512xbf16>, vector<512x64xbf16>, vector<8x64xf32> -> vector<8x64xf32>
    %3 = arith.truncf %2 : vector<8x64xf32> to vector<8x64xbf16>
    %c0_3 = arith.constant 0 : index
    %c0_4 = arith.constant 0 : index
    %4 = vector.load %arg4[%c0_3, %c0_4] : memref<8x64xbf16, #tpu.memory_space<vmem>>, vector<8x64xbf16>
    tpu.vector_store %arg4[%c0_3, %c0_4], %3 {strides = array<i32>} : memref<8x64xbf16, #tpu.memory_space<vmem>>, vector<8x64xbf16>,
    return
  }
  func.func @transform_0(%arg0: i32, %arg1: i32) -> (i32, i32) {
    %c1_i32 = arith.constant 1 : i32
    %0 = arith.muli %arg0, %c1_i32 : i32
    %1 = arith.addi %0, %arg1 : i32
    %c0_i32 = arith.constant 0 : i32
    %c0_i32_0 = arith.constant 0 : i32
    return %1, %c0_i32 : i32, i32
  }
  func.func @transform_1(%arg0: i32, %arg1: i32) -> (i32, i32) {
    %c0_i32 = arith.constant 0 : i32
    %c0_i32_0 = arith.constant 0 : i32
    %c0_i32_1 = arith.constant 0 : i32
    return %c0_i32, %c0_i32_0 : i32, i32
  }
  func.func @transform_2(%arg0: i32, %arg1: i32) -> (i32, i32) {
    %c1_i32 = arith.constant 1 : i32
    %0 = arith.muli %arg0, %c1_i32 : i32
    %1 = arith.addi %0, %arg1 : i32
    %c0_i32 = arith.constant 0 : i32
    %c0_i32_0 = arith.constant 0 : i32
    return %1, %c0_i32 : i32, i32
  }
}

module attributes {stable_mosaic.version = 11 : i64} {
  func.func @kernel(%arg0: i32, %arg1: i32, %arg2: memref<8x576xbf16, #tpu.memory_space<vmem>>, %arg3: memref<576x128xbf16, #tpu.memory_space<vmem>>, %arg4: memref<8x128xbf16, #tpu.memory_space<vmem>>, %arg5: memref<1x1x128xf32, #tpu.memory_space<vmem>>, %arg6: memref<1x1x128xf32, #tpu.memory_space<vmem>>) attributes {dimension_semantics = [#tpu.dimension_semantics<parallel>, #tpu.dimension_semantics<arbitrary>], iteration_bounds = array<i64: 1, 1>, scalar_prefetch = 0 : i64, scratch_operands = 0 : i64, tpu.core_type = #tpu.core_type<tc>, window_params = [{transform_indices = @transform_0, window_bounds = array<i64: 8, 576>}, {pipeline_mode = #tpu.pipeline_mode<synchronous>, transform_indices = @transform_1, window_bounds = array<i64: 576, 128>}, {transform_indices = @transform_2, window_bounds = array<i64: 8, 128>}, {transform_indices = @transform_3, window_bounds = array<i64: 1, 1, 128>}, {transform_indices = @transform_4, window_bounds = array<i64: 1, 1, 128>}]} {
    %c0_i32 = arith.constant 0 : i32
    %0 = arith.cmpi eq, %arg1, %c0_i32 : i32
    %1 = arith.extui %0 : i1 to i32
    %c0_i32_0 = arith.constant 0 : i32
    %2 = arith.cmpi ne, %1, %c0_i32_0 : i32
    scf.if %2 {
      %cst_20 = arith.constant 0.000000e+00 : f32
      %25 = vector.broadcast %cst_20 : f32 to vector<1x128xf32>
      %c0_21 = arith.constant 0 : index
      %c0_22 = arith.constant 0 : index
      %c0_23 = arith.constant 0 : index
      %26 = vector.load %arg5[%c0_21, %c0_22, %c0_23] : memref<1x1x128xf32, #tpu.memory_space<vmem>>, vector<1x1x128xf32>
      %27 = vector.shape_cast %26 : vector<1x1x128xf32> to vector<1x128xf32>
      %28 = vector.shape_cast %25 : vector<1x128xf32> to vector<1x1x128xf32>
      tpu.vector_store %arg5[%c0_21, %c0_22, %c0_23], %28 {strides = array<i32>} : memref<1x1x128xf32, #tpu.memory_space<vmem>>, vector<1x1x128xf32>,
      %cst_24 = arith.constant 0.000000e+00 : f32
      %29 = vector.broadcast %cst_24 : f32 to vector<1x128xf32>
      %c0_25 = arith.constant 0 : index
      %c0_26 = arith.constant 0 : index
      %c0_27 = arith.constant 0 : index
      %30 = vector.load %arg6[%c0_25, %c0_26, %c0_27] : memref<1x1x128xf32, #tpu.memory_space<vmem>>, vector<1x1x128xf32>
      %31 = vector.shape_cast %30 : vector<1x1x128xf32> to vector<1x128xf32>
      %32 = vector.shape_cast %29 : vector<1x128xf32> to vector<1x1x128xf32>
      tpu.vector_store %arg6[%c0_25, %c0_26, %c0_27], %32 {strides = array<i32>} : memref<1x1x128xf32, #tpu.memory_space<vmem>>, vector<1x1x128xf32>,
    } else {
    }
    %c0 = arith.constant 0 : index
    %c0_1 = arith.constant 0 : index
    %3 = vector.load %arg2[%c0, %c0_1] : memref<8x576xbf16, #tpu.memory_space<vmem>>, vector<8x576xbf16>
    %c0_2 = arith.constant 0 : index
    %c0_3 = arith.constant 0 : index
    %4 = vector.load %arg3[%c0_2, %c0_3] : memref<576x128xbf16, #tpu.memory_space<vmem>>, vector<576x128xbf16>
    %cst = arith.constant dense<0.000000e+00> : vector<8x128xf32>
    %5 = tpu.matmul %3, %4, %cst {dimension_numbers = #tpu.dot_dimension_numbers<[1], [0], [0], [1], [0, 0, 1, 1], [], []>} : vector<8x576xbf16>, vector<576x128xbf16>, vector<8x128xf32> -> vector<8x128xf32>
    %c0_4 = arith.constant 0 : index
    %c0_5 = arith.constant 0 : index
    %c0_6 = arith.constant 0 : index
    %6 = vector.load %arg5[%c0_4, %c0_5, %c0_6] : memref<1x1x128xf32, #tpu.memory_space<vmem>>, vector<1x1x128xf32>
    %7 = vector.shape_cast %6 : vector<1x1x128xf32> to vector<1x128xf32>
    %cst_7 = arith.constant dense<0.000000e+00> : vector<128xf32>
    %8 = vector.multi_reduction <add>, %5, %cst_7 [0] : vector<8x128xf32> to vector<128xf32>
    %9 = vector.shape_cast %8 : vector<128xf32> to vector<1x128xf32>
    %10 = arith.addf %7, %9 : vector<1x128xf32>
    %c0_8 = arith.constant 0 : index
    %c0_9 = arith.constant 0 : index
    %c0_10 = arith.constant 0 : index
    %11 = vector.load %arg5[%c0_8, %c0_9, %c0_10] : memref<1x1x128xf32, #tpu.memory_space<vmem>>, vector<1x1x128xf32>
    %12 = vector.shape_cast %11 : vector<1x1x128xf32> to vector<1x128xf32>
    %13 = vector.shape_cast %10 : vector<1x128xf32> to vector<1x1x128xf32>
    tpu.vector_store %arg5[%c0_8, %c0_9, %c0_10], %13 {strides = array<i32>} : memref<1x1x128xf32, #tpu.memory_space<vmem>>, vector<1x1x128xf32>,
    %c0_11 = arith.constant 0 : index
    %c0_12 = arith.constant 0 : index
    %c0_13 = arith.constant 0 : index
    %14 = vector.load %arg6[%c0_11, %c0_12, %c0_13] : memref<1x1x128xf32, #tpu.memory_space<vmem>>, vector<1x1x128xf32>
    %15 = vector.shape_cast %14 : vector<1x1x128xf32> to vector<1x128xf32>
    %16 = arith.mulf %5, %5 : vector<8x128xf32>
    %cst_14 = arith.constant dense<0.000000e+00> : vector<128xf32>
    %17 = vector.multi_reduction <add>, %16, %cst_14 [0] : vector<8x128xf32> to vector<128xf32>
    %18 = vector.shape_cast %17 : vector<128xf32> to vector<1x128xf32>
    %19 = arith.addf %15, %18 : vector<1x128xf32>
    %c0_15 = arith.constant 0 : index
    %c0_16 = arith.constant 0 : index
    %c0_17 = arith.constant 0 : index
    %20 = vector.load %arg6[%c0_15, %c0_16, %c0_17] : memref<1x1x128xf32, #tpu.memory_space<vmem>>, vector<1x1x128xf32>
    %21 = vector.shape_cast %20 : vector<1x1x128xf32> to vector<1x128xf32>
    %22 = vector.shape_cast %19 : vector<1x128xf32> to vector<1x1x128xf32>
    tpu.vector_store %arg6[%c0_15, %c0_16, %c0_17], %22 {strides = array<i32>} : memref<1x1x128xf32, #tpu.memory_space<vmem>>, vector<1x1x128xf32>,
    %23 = arith.truncf %5 : vector<8x128xf32> to vector<8x128xbf16>
    %c0_18 = arith.constant 0 : index
    %c0_19 = arith.constant 0 : index
    %24 = vector.load %arg4[%c0_18, %c0_19] : memref<8x128xbf16, #tpu.memory_space<vmem>>, vector<8x128xbf16>
    tpu.vector_store %arg4[%c0_18, %c0_19], %23 {strides = array<i32>} : memref<8x128xbf16, #tpu.memory_space<vmem>>, vector<8x128xbf16>,
    return
  }
  func.func @transform_0(%arg0: i32, %arg1: i32) -> (i32, i32) {
    %c1_i32 = arith.constant 1 : i32
    %0 = arith.muli %arg0, %c1_i32 : i32
    %1 = arith.addi %0, %arg1 : i32
    %c0_i32 = arith.constant 0 : i32
    %c0_i32_0 = arith.constant 0 : i32
    return %1, %c0_i32 : i32, i32
  }
  func.func @transform_1(%arg0: i32, %arg1: i32) -> (i32, i32) {
    %c0_i32 = arith.constant 0 : i32
    %c0_i32_0 = arith.constant 0 : i32
    %c0_i32_1 = arith.constant 0 : i32
    return %c0_i32, %c0_i32_0 : i32, i32
  }
  func.func @transform_2(%arg0: i32, %arg1: i32) -> (i32, i32) {
    %c1_i32 = arith.constant 1 : i32
    %0 = arith.muli %arg0, %c1_i32 : i32
    %1 = arith.addi %0, %arg1 : i32
    %c0_i32 = arith.constant 0 : i32
    %c0_i32_0 = arith.constant 0 : i32
    return %1, %c0_i32 : i32, i32
  }
  func.func @transform_3(%arg0: i32, %arg1: i32) -> (i32, i32, i32) {
    %c0_i32 = arith.constant 0 : i32
    %c0_i32_0 = arith.constant 0 : i32
    %c0_i32_1 = arith.constant 0 : i32
    return %arg0, %c0_i32, %c0_i32_0 : i32, i32, i32
  }
  func.func @transform_4(%arg0: i32, %arg1: i32) -> (i32, i32, i32) {
    %c0_i32 = arith.constant 0 : i32
    %c0_i32_0 = arith.constant 0 : i32
    %c0_i32_1 = arith.constant 0 : i32
    return %arg0, %c0_i32, %c0_i32_0 : i32, i32, i32
  }
}

module attributes {stable_mosaic.version = 11 : i64} {
  func.func @kernel(%arg0: i32, %arg1: i32, %arg2: memref<8x576xbf16, #tpu.memory_space<vmem>>, %arg3: memref<576x64xbf16, #tpu.memory_space<vmem>>, %arg4: memref<8x64xbf16, #tpu.memory_space<vmem>>, %arg5: memref<1x1x64xf32, #tpu.memory_space<vmem>>, %arg6: memref<1x1x64xf32, #tpu.memory_space<vmem>>) attributes {dimension_semantics = [#tpu.dimension_semantics<parallel>, #tpu.dimension_semantics<arbitrary>], iteration_bounds = array<i64: 1, 1>, scalar_prefetch = 0 : i64, scratch_operands = 0 : i64, tpu.core_type = #tpu.core_type<tc>, window_params = [{transform_indices = @transform_0, window_bounds = array<i64: 8, 576>}, {pipeline_mode = #tpu.pipeline_mode<synchronous>, transform_indices = @transform_1, window_bounds = array<i64: 576, 64>}, {transform_indices = @transform_2, window_bounds = array<i64: 8, 64>}, {transform_indices = @transform_3, window_bounds = array<i64: 1, 1, 64>}, {transform_indices = @transform_4, window_bounds = array<i64: 1, 1, 64>}]} {
    %c0_i32 = arith.constant 0 : i32
    %0 = arith.cmpi eq, %arg1, %c0_i32 : i32
    %1 = arith.extui %0 : i1 to i32
    %c0_i32_0 = arith.constant 0 : i32
    %2 = arith.cmpi ne, %1, %c0_i32_0 : i32
    scf.if %2 {
      %cst_20 = arith.constant 0.000000e+00 : f32
      %25 = vector.broadcast %cst_20 : f32 to vector<1x64xf32>
      %c0_21 = arith.constant 0 : index
      %c0_22 = arith.constant 0 : index
      %c0_23 = arith.constant 0 : index
      %26 = vector.load %arg5[%c0_21, %c0_22, %c0_23] : memref<1x1x64xf32, #tpu.memory_space<vmem>>, vector<1x1x64xf32>
      %27 = vector.shape_cast %26 : vector<1x1x64xf32> to vector<1x64xf32>
      %28 = vector.shape_cast %25 : vector<1x64xf32> to vector<1x1x64xf32>
      tpu.vector_store %arg5[%c0_21, %c0_22, %c0_23], %28 {strides = array<i32>} : memref<1x1x64xf32, #tpu.memory_space<vmem>>, vector<1x1x64xf32>,
      %cst_24 = arith.constant 0.000000e+00 : f32
      %29 = vector.broadcast %cst_24 : f32 to vector<1x64xf32>
      %c0_25 = arith.constant 0 : index
      %c0_26 = arith.constant 0 : index
      %c0_27 = arith.constant 0 : index
      %30 = vector.load %arg6[%c0_25, %c0_26, %c0_27] : memref<1x1x64xf32, #tpu.memory_space<vmem>>, vector<1x1x64xf32>
      %31 = vector.shape_cast %30 : vector<1x1x64xf32> to vector<1x64xf32>
      %32 = vector.shape_cast %29 : vector<1x64xf32> to vector<1x1x64xf32>
      tpu.vector_store %arg6[%c0_25, %c0_26, %c0_27], %32 {strides = array<i32>} : memref<1x1x64xf32, #tpu.memory_space<vmem>>, vector<1x1x64xf32>,
    } else {
    }
    %c0 = arith.constant 0 : index
    %c0_1 = arith.constant 0 : index
    %3 = vector.load %arg2[%c0, %c0_1] : memref<8x576xbf16, #tpu.memory_space<vmem>>, vector<8x576xbf16>
    %c0_2 = arith.constant 0 : index
    %c0_3 = arith.constant 0 : index
    %4 = vector.load %arg3[%c0_2, %c0_3] : memref<576x64xbf16, #tpu.memory_space<vmem>>, vector<576x64xbf16>
    %cst = arith.constant dense<0.000000e+00> : vector<8x64xf32>
    %5 = tpu.matmul %3, %4, %cst {dimension_numbers = #tpu.dot_dimension_numbers<[1], [0], [0], [1], [0, 0, 1, 1], [], []>} : vector<8x576xbf16>, vector<576x64xbf16>, vector<8x64xf32> -> vector<8x64xf32>
    %c0_4 = arith.constant 0 : index
    %c0_5 = arith.constant 0 : index
    %c0_6 = arith.constant 0 : index
    %6 = vector.load %arg5[%c0_4, %c0_5, %c0_6] : memref<1x1x64xf32, #tpu.memory_space<vmem>>, vector<1x1x64xf32>
    %7 = vector.shape_cast %6 : vector<1x1x64xf32> to vector<1x64xf32>
    %cst_7 = arith.constant dense<0.000000e+00> : vector<64xf32>
    %8 = vector.multi_reduction <add>, %5, %cst_7 [0] : vector<8x64xf32> to vector<64xf32>
    %9 = vector.shape_cast %8 : vector<64xf32> to vector<1x64xf32>
    %10 = arith.addf %7, %9 : vector<1x64xf32>
    %c0_8 = arith.constant 0 : index
    %c0_9 = arith.constant 0 : index
    %c0_10 = arith.constant 0 : index
    %11 = vector.load %arg5[%c0_8, %c0_9, %c0_10] : memref<1x1x64xf32, #tpu.memory_space<vmem>>, vector<1x1x64xf32>
    %12 = vector.shape_cast %11 : vector<1x1x64xf32> to vector<1x64xf32>
    %13 = vector.shape_cast %10 : vector<1x64xf32> to vector<1x1x64xf32>
    tpu.vector_store %arg5[%c0_8, %c0_9, %c0_10], %13 {strides = array<i32>} : memref<1x1x64xf32, #tpu.memory_space<vmem>>, vector<1x1x64xf32>,
    %c0_11 = arith.constant 0 : index
    %c0_12 = arith.constant 0 : index
    %c0_13 = arith.constant 0 : index
    %14 = vector.load %arg6[%c0_11, %c0_12, %c0_13] : memref<1x1x64xf32, #tpu.memory_space<vmem>>, vector<1x1x64xf32>
    %15 = vector.shape_cast %14 : vector<1x1x64xf32> to vector<1x64xf32>
    %16 = arith.mulf %5, %5 : vector<8x64xf32>
    %cst_14 = arith.constant dense<0.000000e+00> : vector<64xf32>
    %17 = vector.multi_reduction <add>, %16, %cst_14 [0] : vector<8x64xf32> to vector<64xf32>
    %18 = vector.shape_cast %17 : vector<64xf32> to vector<1x64xf32>
    %19 = arith.addf %15, %18 : vector<1x64xf32>
    %c0_15 = arith.constant 0 : index
    %c0_16 = arith.constant 0 : index
    %c0_17 = arith.constant 0 : index
    %20 = vector.load %arg6[%c0_15, %c0_16, %c0_17] : memref<1x1x64xf32, #tpu.memory_space<vmem>>, vector<1x1x64xf32>
    %21 = vector.shape_cast %20 : vector<1x1x64xf32> to vector<1x64xf32>
    %22 = vector.shape_cast %19 : vector<1x64xf32> to vector<1x1x64xf32>
    tpu.vector_store %arg6[%c0_15, %c0_16, %c0_17], %22 {strides = array<i32>} : memref<1x1x64xf32, #tpu.memory_space<vmem>>, vector<1x1x64xf32>,
    %23 = arith.truncf %5 : vector<8x64xf32> to vector<8x64xbf16>
    %c0_18 = arith.constant 0 : index
    %c0_19 = arith.constant 0 : index
    %24 = vector.load %arg4[%c0_18, %c0_19] : memref<8x64xbf16, #tpu.memory_space<vmem>>, vector<8x64xbf16>
    tpu.vector_store %arg4[%c0_18, %c0_19], %23 {strides = array<i32>} : memref<8x64xbf16, #tpu.memory_space<vmem>>, vector<8x64xbf16>,
    return
  }
  func.func @transform_0(%arg0: i32, %arg1: i32) -> (i32, i32) {
    %c1_i32 = arith.constant 1 : i32
    %0 = arith.muli %arg0, %c1_i32 : i32
    %1 = arith.addi %0, %arg1 : i32
    %c0_i32 = arith.constant 0 : i32
    %c0_i32_0 = arith.constant 0 : i32
    return %1, %c0_i32 : i32, i32
  }
  func.func @transform_1(%arg0: i32, %arg1: i32) -> (i32, i32) {
    %c0_i32 = arith.constant 0 : i32
    %c0_i32_0 = arith.constant 0 : i32
    %c0_i32_1 = arith.constant 0 : i32
    return %c0_i32, %c0_i32_0 : i32, i32
  }
  func.func @transform_2(%arg0: i32, %arg1: i32) -> (i32, i32) {
    %c1_i32 = arith.constant 1 : i32
    %0 = arith.muli %arg0, %c1_i32 : i32
    %1 = arith.addi %0, %arg1 : i32
    %c0_i32 = arith.constant 0 : i32
    %c0_i32_0 = arith.constant 0 : i32
    return %1, %c0_i32 : i32, i32
  }
  func.func @transform_3(%arg0: i32, %arg1: i32) -> (i32, i32, i32) {
    %c0_i32 = arith.constant 0 : i32
    %c0_i32_0 = arith.constant 0 : i32
    %c0_i32_1 = arith.constant 0 : i32
    return %arg0, %c0_i32, %c0_i32_0 : i32, i32, i32
  }
  func.func @transform_4(%arg0: i32, %arg1: i32) -> (i32, i32, i32) {
    %c0_i32 = arith.constant 0 : i32
    %c0_i32_0 = arith.constant 0 : i32
    %c0_i32_1 = arith.constant 0 : i32
    return %arg0, %c0_i32, %c0_i32_0 : i32, i32, i32
  }
}

module attributes {stable_mosaic.version = 11 : i64} {
  func.func @kernel(%arg0: i32, %arg1: i32, %arg2: memref<16x288xbf16, #tpu.memory_space<vmem>>, %arg3: memref<288x32xbf16, #tpu.memory_space<vmem>>, %arg4: memref<16x32xbf16, #tpu.memory_space<vmem>>, %arg5: memref<1x1x32xf32, #tpu.memory_space<vmem>>, %arg6: memref<1x1x32xf32, #tpu.memory_space<vmem>>) attributes {dimension_semantics = [#tpu.dimension_semantics<parallel>, #tpu.dimension_semantics<arbitrary>], iteration_bounds = array<i64: 2, 1>, scalar_prefetch = 0 : i64, scratch_operands = 0 : i64, tpu.core_type = #tpu.core_type<tc>, window_params = [{transform_indices = @transform_0, window_bounds = array<i64: 16, 288>}, {pipeline_mode = #tpu.pipeline_mode<synchronous>, transform_indices = @transform_1, window_bounds = array<i64: 288, 32>}, {transform_indices = @transform_2, window_bounds = array<i64: 16, 32>}, {transform_indices = @transform_3, window_bounds = array<i64: 1, 1, 32>}, {transform_indices = @transform_4, window_bounds = array<i64: 1, 1, 32>}]} {
    %c0_i32 = arith.constant 0 : i32
    %0 = arith.cmpi eq, %arg1, %c0_i32 : i32
    %1 = arith.extui %0 : i1 to i32
    %c0_i32_0 = arith.constant 0 : i32
    %2 = arith.cmpi ne, %1, %c0_i32_0 : i32
    scf.if %2 {
      %cst_20 = arith.constant 0.000000e+00 : f32
      %25 = vector.broadcast %cst_20 : f32 to vector<1x32xf32>
      %c0_21 = arith.constant 0 : index
      %c0_22 = arith.constant 0 : index
      %c0_23 = arith.constant 0 : index
      %26 = vector.load %arg5[%c0_21, %c0_22, %c0_23] : memref<1x1x32xf32, #tpu.memory_space<vmem>>, vector<1x1x32xf32>
      %27 = vector.shape_cast %26 : vector<1x1x32xf32> to vector<1x32xf32>
      %28 = vector.shape_cast %25 : vector<1x32xf32> to vector<1x1x32xf32>
      tpu.vector_store %arg5[%c0_21, %c0_22, %c0_23], %28 {strides = array<i32>} : memref<1x1x32xf32, #tpu.memory_space<vmem>>, vector<1x1x32xf32>,
      %cst_24 = arith.constant 0.000000e+00 : f32
      %29 = vector.broadcast %cst_24 : f32 to vector<1x32xf32>
      %c0_25 = arith.constant 0 : index
      %c0_26 = arith.constant 0 : index
      %c0_27 = arith.constant 0 : index
      %30 = vector.load %arg6[%c0_25, %c0_26, %c0_27] : memref<1x1x32xf32, #tpu.memory_space<vmem>>, vector<1x1x32xf32>
      %31 = vector.shape_cast %30 : vector<1x1x32xf32> to vector<1x32xf32>
      %32 = vector.shape_cast %29 : vector<1x32xf32> to vector<1x1x32xf32>
      tpu.vector_store %arg6[%c0_25, %c0_26, %c0_27], %32 {strides = array<i32>} : memref<1x1x32xf32, #tpu.memory_space<vmem>>, vector<1x1x32xf32>,
    } else {
    }
    %c0 = arith.constant 0 : index
    %c0_1 = arith.constant 0 : index
    %3 = vector.load %arg2[%c0, %c0_1] : memref<16x288xbf16, #tpu.memory_space<vmem>>, vector<16x288xbf16>
    %c0_2 = arith.constant 0 : index
    %c0_3 = arith.constant 0 : index
    %4 = vector.load %arg3[%c0_2, %c0_3] : memref<288x32xbf16, #tpu.memory_space<vmem>>, vector<288x32xbf16>
    %cst = arith.constant dense<0.000000e+00> : vector<16x32xf32>
    %5 = tpu.matmul %3, %4, %cst {dimension_numbers = #tpu.dot_dimension_numbers<[1], [0], [0], [1], [0, 0, 1, 1], [], []>} : vector<16x288xbf16>, vector<288x32xbf16>, vector<16x32xf32> -> vector<16x32xf32>
    %c0_4 = arith.constant 0 : index
    %c0_5 = arith.constant 0 : index
    %c0_6 = arith.constant 0 : index
    %6 = vector.load %arg5[%c0_4, %c0_5, %c0_6] : memref<1x1x32xf32, #tpu.memory_space<vmem>>, vector<1x1x32xf32>
    %7 = vector.shape_cast %6 : vector<1x1x32xf32> to vector<1x32xf32>
    %cst_7 = arith.constant dense<0.000000e+00> : vector<32xf32>
    %8 = vector.multi_reduction <add>, %5, %cst_7 [0] : vector<16x32xf32> to vector<32xf32>
    %9 = vector.shape_cast %8 : vector<32xf32> to vector<1x32xf32>
    %10 = arith.addf %7, %9 : vector<1x32xf32>
    %c0_8 = arith.constant 0 : index
    %c0_9 = arith.constant 0 : index
    %c0_10 = arith.constant 0 : index
    %11 = vector.load %arg5[%c0_8, %c0_9, %c0_10] : memref<1x1x32xf32, #tpu.memory_space<vmem>>, vector<1x1x32xf32>
    %12 = vector.shape_cast %11 : vector<1x1x32xf32> to vector<1x32xf32>
    %13 = vector.shape_cast %10 : vector<1x32xf32> to vector<1x1x32xf32>
    tpu.vector_store %arg5[%c0_8, %c0_9, %c0_10], %13 {strides = array<i32>} : memref<1x1x32xf32, #tpu.memory_space<vmem>>, vector<1x1x32xf32>,
    %c0_11 = arith.constant 0 : index
    %c0_12 = arith.constant 0 : index
    %c0_13 = arith.constant 0 : index
    %14 = vector.load %arg6[%c0_11, %c0_12, %c0_13] : memref<1x1x32xf32, #tpu.memory_space<vmem>>, vector<1x1x32xf32>
    %15 = vector.shape_cast %14 : vector<1x1x32xf32> to vector<1x32xf32>
    %16 = arith.mulf %5, %5 : vector<16x32xf32>
    %cst_14 = arith.constant dense<0.000000e+00> : vector<32xf32>
    %17 = vector.multi_reduction <add>, %16, %cst_14 [0] : vector<16x32xf32> to vector<32xf32>
    %18 = vector.shape_cast %17 : vector<32xf32> to vector<1x32xf32>
    %19 = arith.addf %15, %18 : vector<1x32xf32>
    %c0_15 = arith.constant 0 : index
    %c0_16 = arith.constant 0 : index
    %c0_17 = arith.constant 0 : index
    %20 = vector.load %arg6[%c0_15, %c0_16, %c0_17] : memref<1x1x32xf32, #tpu.memory_space<vmem>>, vector<1x1x32xf32>
    %21 = vector.shape_cast %20 : vector<1x1x32xf32> to vector<1x32xf32>
    %22 = vector.shape_cast %19 : vector<1x32xf32> to vector<1x1x32xf32>
    tpu.vector_store %arg6[%c0_15, %c0_16, %c0_17], %22 {strides = array<i32>} : memref<1x1x32xf32, #tpu.memory_space<vmem>>, vector<1x1x32xf32>,
    %23 = arith.truncf %5 : vector<16x32xf32> to vector<16x32xbf16>
    %c0_18 = arith.constant 0 : index
    %c0_19 = arith.constant 0 : index
    %24 = vector.load %arg4[%c0_18, %c0_19] : memref<16x32xbf16, #tpu.memory_space<vmem>>, vector<16x32xbf16>
    tpu.vector_store %arg4[%c0_18, %c0_19], %23 {strides = array<i32>} : memref<16x32xbf16, #tpu.memory_space<vmem>>, vector<16x32xbf16>,
    return
  }
  func.func @transform_0(%arg0: i32, %arg1: i32) -> (i32, i32) {
    %c1_i32 = arith.constant 1 : i32
    %0 = arith.muli %arg0, %c1_i32 : i32
    %1 = arith.addi %0, %arg1 : i32
    %c0_i32 = arith.constant 0 : i32
    %c0_i32_0 = arith.constant 0 : i32
    return %1, %c0_i32 : i32, i32
  }
  func.func @transform_1(%arg0: i32, %arg1: i32) -> (i32, i32) {
    %c0_i32 = arith.constant 0 : i32
    %c0_i32_0 = arith.constant 0 : i32
    %c0_i32_1 = arith.constant 0 : i32
    return %c0_i32, %c0_i32_0 : i32, i32
  }
  func.func @transform_2(%arg0: i32, %arg1: i32) -> (i32, i32) {
    %c1_i32 = arith.constant 1 : i32
    %0 = arith.muli %arg0, %c1_i32 : i32
    %1 = arith.addi %0, %arg1 : i32
    %c0_i32 = arith.constant 0 : i32
    %c0_i32_0 = arith.constant 0 : i32
    return %1, %c0_i32 : i32, i32
  }
  func.func @transform_3(%arg0: i32, %arg1: i32) -> (i32, i32, i32) {
    %c0_i32 = arith.constant 0 : i32
    %c0_i32_0 = arith.constant 0 : i32
    %c0_i32_1 = arith.constant 0 : i32
    return %arg0, %c0_i32, %c0_i32_0 : i32, i32, i32
  }
  func.func @transform_4(%arg0: i32, %arg1: i32) -> (i32, i32, i32) {
    %c0_i32 = arith.constant 0 : i32
    %c0_i32_0 = arith.constant 0 : i32
    %c0_i32_1 = arith.constant 0 : i32
    return %arg0, %c0_i32, %c0_i32_0 : i32, i32, i32
  }
}

module attributes {stable_mosaic.version = 11 : i64} {
  func.func @kernel(%arg0: i32, %arg1: i32, %arg2: memref<64x144xbf16, #tpu.memory_space<vmem>>, %arg3: memref<144x12xbf16, #tpu.memory_space<vmem>>, %arg4: memref<1x12xf32, #tpu.memory_space<vmem>>, %arg5: memref<64x12xf32, #tpu.memory_space<vmem>>) attributes {dimension_semantics = [#tpu.dimension_semantics<parallel>, #tpu.dimension_semantics<arbitrary>], iteration_bounds = array<i64: 2, 1>, scalar_prefetch = 0 : i64, scratch_operands = 0 : i64, tpu.core_type = #tpu.core_type<tc>, window_params = [{transform_indices = @transform_0, window_bounds = array<i64: 64, 144>}, {pipeline_mode = #tpu.pipeline_mode<synchronous>, transform_indices = @transform_1, window_bounds = array<i64: 144, 12>}, {pipeline_mode = #tpu.pipeline_mode<synchronous>, transform_indices = @transform_2, window_bounds = array<i64: 1, 12>}, {transform_indices = @transform_3, window_bounds = array<i64: 64, 12>}]} {
    %c0 = arith.constant 0 : index
    %c0_0 = arith.constant 0 : index
    %0 = vector.load %arg2[%c0, %c0_0] : memref<64x144xbf16, #tpu.memory_space<vmem>>, vector<64x144xbf16>
    %c0_1 = arith.constant 0 : index
    %c0_2 = arith.constant 0 : index
    %1 = vector.load %arg3[%c0_1, %c0_2] : memref<144x12xbf16, #tpu.memory_space<vmem>>, vector<144x12xbf16>
    %cst = arith.constant dense<0.000000e+00> : vector<64x12xf32>
    %2 = tpu.matmul %0, %1, %cst {dimension_numbers = #tpu.dot_dimension_numbers<[1], [0], [0], [1], [0, 0, 1, 1], [], []>} : vector<64x144xbf16>, vector<144x12xbf16>, vector<64x12xf32> -> vector<64x12xf32>
    %c0_3 = arith.constant 0 : index
    %c0_4 = arith.constant 0 : index
    %3 = vector.load %arg4[%c0_3, %c0_4] : memref<1x12xf32, #tpu.memory_space<vmem>>, vector<1x12xf32>
    %4 = vector.broadcast %3 : vector<1x12xf32> to vector<64x12xf32>
    %5 = arith.addf %2, %4 : vector<64x12xf32>
    %6 = math.tanh %5 : vector<64x12xf32>
    %c0_5 = arith.constant 0 : index
    %c0_6 = arith.constant 0 : index
    %7 = vector.load %arg5[%c0_5, %c0_6] : memref<64x12xf32, #tpu.memory_space<vmem>>, vector<64x12xf32>
    tpu.vector_store %arg5[%c0_5, %c0_6], %6 {strides = array<i32>} : memref<64x12xf32, #tpu.memory_space<vmem>>, vector<64x12xf32>,
    return
  }
  func.func @transform_0(%arg0: i32, %arg1: i32) -> (i32, i32) {
    %c1_i32 = arith.constant 1 : i32
    %0 = arith.muli %arg0, %c1_i32 : i32
    %1 = arith.addi %0, %arg1 : i32
    %c0_i32 = arith.constant 0 : i32
    %c0_i32_0 = arith.constant 0 : i32
    return %1, %c0_i32 : i32, i32
  }
  func.func @transform_1(%arg0: i32, %arg1: i32) -> (i32, i32) {
    %c0_i32 = arith.constant 0 : i32
    %c0_i32_0 = arith.constant 0 : i32
    %c0_i32_1 = arith.constant 0 : i32
    return %c0_i32, %c0_i32_0 : i32, i32
  }
  func.func @transform_2(%arg0: i32, %arg1: i32) -> (i32, i32) {
    %c0_i32 = arith.constant 0 : i32
    %c0_i32_0 = arith.constant 0 : i32
    %c0_i32_1 = arith.constant 0 : i32
    return %c0_i32, %c0_i32_0 : i32, i32
  }
  func.func @transform_3(%arg0: i32, %arg1: i32) -> (i32, i32) {
    %c1_i32 = arith.constant 1 : i32
    %0 = arith.muli %arg0, %c1_i32 : i32
    %1 = arith.addi %0, %arg1 : i32
    %c0_i32 = arith.constant 0 : i32
    %c0_i32_0 = arith.constant 0 : i32
    return %1, %c0_i32 : i32, i32
  }
}

</mosaic_0001>

<llo_original>
// kernel: unet_forward.8
$region0: #{unet_forward.8}
  #allocation0 [shape = 'u32[]', space=smem, size = 0x4, offset = 0x4, fixed_abs, tag = 'smem constant byte address 0x4 - core index']
  #allocation1 [shape = 'u32[72,128]{1,0:T(1,128)}', space=vmem, size = 0x9000, scoped, tag = 'internal scratch']
  %s0 = inlined_call_operand.vmem [shape: bf16[128,64], index: 0, kind: input, shape index: {}]
  %s1 = inlined_call_operand.vmem [shape: bf16[64,8], index: 1, kind: input, shape index: {}]
  %s2 = inlined_call_operand.vmem [shape: bf16[128,8], index: 2, kind: output, shape index: {}]
  %s3 = sld [smem:[#allocation0]]
  $region41: #{unet_forward.8} parent=0
    _
  %s5 = ssub.s32 1, %s3
  %s6 = scalar_select 0, %s5, %s3
  loop: start=0, step=1, limit=4
  $region2: #{unet_forward.8} parent=0 // loop_pre_header
    _
  $region3: #{unet_forward.8} parent=0 // loop_header
    %s8 = sphi 0, %s12
    %p9 = scmp.ge.s32.totalorder %s8, 4
    %s15 = sphi 0, %s27
    %s16 = sphi 0, %s23
    %s17 = sphi 0, %s15
    %s18 = sphi 0, %s16
    %s19 = sphi 0, %s17
    %s20 = sphi 0, %s18
    %s32 = sphi 0, %s34
    %s35 = sphi 0, %s32
    %s36 = sphi 0, %s35
    %s52 = sphi 0, %s36
    %s56 = sphi 0, %s56
    %s58 = sphi 0, %s56
    %s59 = sphi 0, %s58
    %s73 = sphi 0, %s59
    %s81 = sphi 0, %s83
    %s84 = sphi 0, %s81
    %s85 = sphi 0, %s84
    %s101 = sphi 0, %s85
  $region4: #{unet_forward.8} parent=0 // loop_header_branch
    %11 = sbr.rel (%p9) target = $region8
  $region5: #{unet_forward.8} parent=0 // loop_body
    %s13 = ssub.s32 %s8, 1
    %s14 = ssub.s32 %s8, 2
    %s21 = sadd.s32 1, %s16
    %p22 = scmp.ge.s32.totalorder %s21, 1
    %s23 = scalar_select %p22, 0, %s21
    %s24 = sadd.s32 1, %s15
    %s25 = scalar_select %p22, %s24, %s15
    %p26 = scmp.ge.s32.totalorder %s25, 2
    %s27 = scalar_select %p26, 0, %s25
    %s28 = sadd.s32 %s15, %s16
    %s29 = sadd.s32 %s27, %s23
    %s30 = ssub.s32 %s28, %s29
    %p31 = scmp.eq.s32.totalorder %s30, 0
    %s33 = sadd.s32 %s32, 1
    %s34 = scalar_select %p31, %s32, %s33
    %p37 = pneg %p31
    %p38 = scmp.eq.s32.totalorder %s8, 1
    %p39 = por %p37, %p38
    %p40 = scmp.ne.s32.totalorder %s32, %s35
    %p41 = scmp.eq.s32.totalorder %s8, 0
    %p42 = por %p40, %p41
    %p43 = scmp.ne.s32.totalorder %s32, %s35
    %p44 = scmp.eq.s32.totalorder %s13, 1
    %p45 = por %p43, %p44
    %p46 = scmp.ne.s32.totalorder %s35, %s36
    %p47 = scmp.eq.s32.totalorder %s13, 0
    %p48 = por %p46, %p47
    %p49 = scmp.ne.s32.totalorder %s35, %s36
    %p50 = scmp.eq.s32.totalorder %s14, 1
    %p51 = por %p49, %p50
    %p53 = scmp.ne.s32.totalorder %s36, %s52
    %p54 = scmp.eq.s32.totalorder %s14, 0
    %p55 = por %p53, %p54
    %s57 = sadd.s32 %s56, 1
    %p60 = scmp.eq.s32.totalorder %s8, 1
    %p61 = scmp.ne.s32.totalorder %s56, %s58
    %p62 = scmp.eq.s32.totalorder %s8, 0
    %p63 = por %p61, %p62
    %p64 = scmp.ne.s32.totalorder %s56, %s58
    %p65 = scmp.eq.s32.totalorder %s13, 1
    %p66 = por %p64, %p65
    %p67 = scmp.ne.s32.totalorder %s58, %s59
    %p68 = scmp.eq.s32.totalorder %s13, 0
    %p69 = por %p67, %p68
    %p70 = scmp.ne.s32.totalorder %s58, %s59
    %p71 = scmp.eq.s32.totalorder %s14, 1
    %p72 = por %p70, %p71
    %p74 = scmp.ne.s32.totalorder %s59, %s73
    %p75 = scmp.eq.s32.totalorder %s14, 0
    %p76 = por %p74, %p75
    %s77 = sadd.s32 %s15, %s16
    %s78 = sadd.s32 %s27, %s23
    %s79 = ssub.s32 %s77, %s78
    %p80 = scmp.eq.s32.totalorder %s79, 0
    %s82 = sadd.s32 %s81, 1
    %s83 = scalar_select %p80, %s81, %s82
    %p86 = pneg %p80
    %p87 = scmp.eq.s32.totalorder %s8, 1
    %p88 = por %p86, %p87
    %p89 = scmp.ne.s32.totalorder %s81, %s84
    %p90 = scmp.eq.s32.totalorder %s8, 0
    %p91 = por %p89, %p90
    %p92 = scmp.ne.s32.totalorder %s81, %s84
    %p93 = scmp.eq.s32.totalorder %s13, 1
    %p94 = por %p92, %p93
    %p95 = scmp.ne.s32.totalorder %s84, %s85
    %p96 = scmp.eq.s32.totalorder %s13, 0
    %p97 = por %p95, %p96
    %p98 = scmp.ne.s32.totalorder %s84, %s85
    %p99 = scmp.eq.s32.totalorder %s14, 1
    %p100 = por %p98, %p99
    %p102 = scmp.ne.s32.totalorder %s85, %s101
    %p103 = scmp.eq.s32.totalorder %s14, 0
    %p104 = por %p102, %p103
    %p105 = scmp.le.s32.totalorder 1, %s8
    %p106 = scmp.lt.s32.totalorder %s8, 3
    %p107 = pnand %p105, %p106
    %p108 = pneg %p107
    // Predicated region
    $region9: #{unet_forward.8} parent=5 // pred_check
      _
    $region10: #{unet_forward.8} parent=5 // pred_check_branch
      %110 = sbr.rel (%p107) target = $region12
    $region11: #{unet_forward.8} parent=5 // pred_region
      %s111 = ssub.s32 %s8, 1
      // Predicated region
      $region13: #{unet_forward.8} parent=11 // pred_check
        %p112 = pneg %p69
      $region14: #{unet_forward.8} parent=11 // pred_check_branch
        %114 = sbr.rel (%p112) target = $region16
      $region15: #{unet_forward.8} parent=11 // pred_region
        _
      $region16: #{unet_forward.8} parent=11 // pred_fallthru
        _
    $region12: #{unet_forward.8} parent=5 // pred_fallthru
      _
    %p115 = scmp.lt.s32.totalorder %s8, 2
    // Predicated region
    $region17: #{unet_forward.8} parent=5 // pred_check
      %p116 = pneg %p115
    $region18: #{unet_forward.8} parent=5 // pred_check_branch
      %118 = sbr.rel (%p116) target = $region20
    $region19: #{unet_forward.8} parent=5 // pred_region
      // Predicated region
      $region21: #{unet_forward.8} parent=19 // pred_check
        %p119 = pneg %p42
      $region22: #{unet_forward.8} parent=19 // pred_check_branch
        %121 = sbr.rel (%p119) target = $region24
      $region23: #{unet_forward.8} parent=19 // pred_region
        %s122 = sadd.s32 %s15, %s16
        %s123 = smul.u32 8, %s122
        %p124 = scmp.lt.s32.totalorder %s123, 15
        %s125 = scalar_select %p124, %s123, 15
        %s126 = smul.addr %s125, 4
        %s127 = scalar_lea.vmem %s0, %s126
        %s128 = sadd.s32 %s15, %s16
        %s129 = smul.u32 8, %s128
      $region24: #{unet_forward.8} parent=19 // pred_fallthru
        _
    $region20: #{unet_forward.8} parent=5 // pred_fallthru
      _
    %p130 = scmp.le.s32.totalorder 1, %s8
    %p131 = scmp.lt.s32.totalorder %s8, 3
    %p132 = pnand %p130, %p131
    %p133 = pneg %p132
    // Predicated region
    $region25: #{unet_forward.8} parent=5 // pred_check
      _
    $region26: #{unet_forward.8} parent=5 // pred_check_branch
      %135 = sbr.rel (%p132) target = $region28
    $region27: #{unet_forward.8} parent=5 // pred_region
      %s136 = ssub.s32 %s8, 1
      %s137 = sadd.s32 %s17, %s18
      %s138 = smul.u32 8, %s137
      %p139 = scmp.lt.s32.totalorder %s138, 15
      %s140 = scalar_select %p139, %s138, 15
      %s141 = smul.addr %s140, 4
      %s142 = scalar_lea.vmem %s0, %s141
      %p143 = pneg %p48
      %p144 = pneg %p45
      %p145 = pneg %p69
      %p146 = pneg %p66
      %p147 = pneg %p97
      %p148 = pneg %p94
      %s149 = sadd.s32 %s17, %s18
      %s150 = smul.u32 8, %s149
      %p151 = scmp.lt.s32.totalorder %s150, 15
      %s152 = scalar_select %p151, %s150, 15
      %s153 = smul.addr %s152, 4
      %s154 = scalar_lea.vmem %s2, %s153
      %s155 = sadd.s32 %s17, %s18
      %s156 = smul.u32 8, %s155
      %p157 = scmp.lt.s32.totalorder %s156, 15
      %s158 = scalar_select %p157, %s156, 15
      %s159 = smul.addr %s158, 4
      %s160 = scalar_lea.vmem %s0, %s159
      %s161 = sadd.s32 %s17, %s18
      %s162 = smul.u32 8, %s161
      %s163 = sadd.s32 %s17, %s18
      %s164 = smul.u32 8, %s163
      %p165 = scmp.lt.s32.totalorder %s164, 15
      %s166 = scalar_select %p165, %s164, 15
      %s167 = smul.addr %s166, 4
      %s168 = scalar_lea.vmem %s2, %s167
      %s169 = sadd.s32 %s17, %s18
      %s170 = smul.u32 8, %s169
      %v172 = vld [vmem:[%s160] sm:$0xf]
      %v173 = vld [vmem:[%s160 + $0x4] sm:$0xf]
      %v174 = vld [vmem:[%s160 + $0x8] sm:$0xf]
      %v175 = vld [vmem:[%s160 + $0xc] sm:$0xf]
      %v176 = vld [vmem:[%s160 + $0x10] sm:$0xf]
      %v177 = vld [vmem:[%s160 + $0x14] sm:$0xf]
      %v178 = vld [vmem:[%s160 + $0x18] sm:$0xf]
      %v179 = vld [vmem:[%s160 + $0x1c] sm:$0xf]
      %v180 = vld [vmem:[%s1] sm:$0xf]
      %v181 = vld [vmem:[%s1 + $0x4] sm:$0xf]
      %v182 = vld [vmem:[%s1 + $0x8] sm:$0xf]
      %v183 = vld [vmem:[%s1 + $0xc] sm:$0xf]
      %v184 = vld [vmem:[%s1 + $0x10] sm:$0xf]
      %v185 = vld [vmem:[%s1 + $0x14] sm:$0xf]
      %v186 = vld [vmem:[%s1 + $0x18] sm:$0xf]
      %v187 = vld [vmem:[%s1 + $0x1c] sm:$0xf]
      %v196 = vunpack.c.l.b16 %v172
      %v197 = vunpack.c.l.b16 %v173
      %v198 = vunpack.c.l.b16 %v174
      %v199 = vunpack.c.l.b16 %v175
      %v200 = vunpack.c.l.b16 %v176
      %v201 = vunpack.c.l.b16 %v177
      %v202 = vunpack.c.l.b16 %v178
      %v203 = vunpack.c.l.b16 %v179
      %v204 = vpack.c.b16 %v197, %v196
      %v205 = vpack.c.b16 %v199, %v198
      %v206 = vpack.c.b16 %v201, %v200
      %v207 = vpack.c.b16 %v203, %v202
      %v216 = vunpack.c.l.b16 %v180
      %v217 = vunpack.c.l.b16 %v181
      %v218 = vunpack.c.l.b16 %v182
      %v219 = vunpack.c.l.b16 %v183
      %v220 = vunpack.c.l.b16 %v184
      %v221 = vunpack.c.l.b16 %v185
      %v222 = vunpack.c.l.b16 %v186
      %v223 = vunpack.c.l.b16 %v187
      %v224 = vpack.c.b16 %v217, %v216
      %v225 = vpack.c.b16 %v219, %v218
      %v226 = vpack.c.b16 %v221, %v220
      %v227 = vpack.c.b16 %v223, %v222
      %vm232 = vcmask 523264
      %v234 = vsel %vm232, %v204, 0
      %v237 = vsel %vm232, %v205, 0
      %v240 = vsel %vm232, %v206, 0
      %v243 = vsel %vm232, %v207, 0
      %245 = vmatpush.bf16.msra.mxu0 0
      %246 = vmatpush.bf16.msra.mxu0 0
      %247 = vmatpush.bf16.msra.mxu0 0
      %248 = vmatpush.bf16.msra.mxu0 0
      %249 = vmatpush.bf16.msra.mxu0 %v227
      %250 = vmatpush.bf16.msra.mxu0 %v226
      %251 = vmatpush.bf16.msra.mxu0 %v225
      %252 = vmatpush.bf16.msra.mxu0 %v224
      %253 = vmatmul.bf16.gmra.mxu0 %v234
      %v254 = vpop.f32.mrf.mxu0
      %v255 = vadd.f32 0.0, %v254
      %v256 = vpop.f32.mrf.mxu0
      %v257 = vadd.f32 0.0, %v256
      %258 = vmatmul.bf16.gmra.mxu0 %v237
      %v259 = vpop.f32.mrf.mxu0
      %v260 = vadd.f32 0.0, %v259
      %v261 = vpop.f32.mrf.mxu0
      %v262 = vadd.f32 0.0, %v261
      %263 = vmatmul.bf16.gmra.mxu0 %v240
      %v264 = vpop.f32.mrf.mxu0
      %v265 = vadd.f32 0.0, %v264
      %v266 = vpop.f32.mrf.mxu0
      %v267 = vadd.f32 0.0, %v266
      %268 = vmatmul.bf16.gmra.mxu0 %v243
      %v269 = vpop.f32.mrf.mxu0
      %v270 = vadd.f32 0.0, %v269
      %v271 = vpop.f32.mrf.mxu0
      %v272 = vadd.f32 0.0, %v271
      %273 = vdwg.mxu0
      %v274 = vpack.c.bf16 %v255, %v255
      %v275 = vpack.c.bf16 %v257, %v257
      %v276 = vpack.c.bf16 %v260, %v260
      %v277 = vpack.c.bf16 %v262, %v262
      %v278 = vpack.c.bf16 %v265, %v265
      %v279 = vpack.c.bf16 %v267, %v267
      %v280 = vpack.c.bf16 %v270, %v270
      %v281 = vpack.c.bf16 %v272, %v272
      %vm282 = vcmask 60416
      %283 = vst.msk [vmem:[%s168] sm:$0xf] %vm282, %v274
      %284 = vst.msk [vmem:[%s168 + $0x4] sm:$0xf] %vm282, %v275
      %285 = vst.msk [vmem:[%s168 + $0x8] sm:$0xf] %vm282, %v276
      %286 = vst.msk [vmem:[%s168 + $0xc] sm:$0xf] %vm282, %v277
      %287 = vst.msk [vmem:[%s168 + $0x10] sm:$0xf] %vm282, %v278
      %288 = vst.msk [vmem:[%s168 + $0x14] sm:$0xf] %vm282, %v279
      %289 = vst.msk [vmem:[%s168 + $0x18] sm:$0xf] %vm282, %v280
      %290 = vst.msk [vmem:[%s168 + $0x1c] sm:$0xf] %vm282, %v281
      %s291 = sadd.s32 %s17, %s18
      %s292 = smul.u32 8, %s291
      %p293 = scmp.lt.s32.totalorder %s292, 15
      %s294 = scalar_select %p293, %s292, 15
      %s295 = smul.addr %s294, 4
      %s296 = scalar_lea.vmem %s2, %s295
      // Predicated region
      $region29: #{unet_forward.8} parent=27 // pred_check
        %p297 = pneg %p94
      $region30: #{unet_forward.8} parent=27 // pred_check_branch
        %299 = sbr.rel (%p297) target = $region32
      $region31: #{unet_forward.8} parent=27 // pred_region
        %s300 = sadd.s32 %s17, %s18
        %s301 = smul.u32 8, %s300
      $region32: #{unet_forward.8} parent=27 // pred_fallthru
        _
    $region28: #{unet_forward.8} parent=5 // pred_fallthru
      _
    %p302 = scmp.le.s32.totalorder 2, %s8
    // Predicated region
    $region33: #{unet_forward.8} parent=5 // pred_check
      %p303 = pneg %p302
    $region34: #{unet_forward.8} parent=5 // pred_check_branch
      %305 = sbr.rel (%p303) target = $region36
    $region35: #{unet_forward.8} parent=5 // pred_region
      %s306 = ssub.s32 %s8, 2
      // Predicated region
      $region37: #{unet_forward.8} parent=35 // pred_check
        %p307 = pneg %p100
      $region38: #{unet_forward.8} parent=35 // pred_check_branch
        %309 = sbr.rel (%p307) target = $region40
      $region39: #{unet_forward.8} parent=35 // pred_region
        %s310 = sadd.s32 %s19, %s20
        %s311 = smul.u32 8, %s310
        %p312 = scmp.lt.s32.totalorder %s311, 15
        %s313 = scalar_select %p312, %s311, 15
        %s314 = smul.addr %s313, 4
        %s315 = scalar_lea.vmem %s2, %s314
      $region40: #{unet_forward.8} parent=35 // pred_fallthru
        _
    $region36: #{unet_forward.8} parent=5 // pred_fallthru
      _
  $region6: #{unet_forward.8} parent=0 // loop_footer
    %s12 = sadd.s32 1, %s8
  $region7: #{unet_forward.8} parent=0 // loop_footer_branch
    %7 = sbr.rel target = $region3
  $region8: #{unet_forward.8} parent=0 // loop_exit
    _

// kernel: unet_forward.9
$region0: #{unet_forward.9}
  #allocation0 [shape = 'u32[]', space=smem, size = 0x4, offset = 0x4, fixed_abs, tag = 'smem constant byte address 0x4 - core index']
  #allocation1 [shape = 'u32[72,128]{1,0:T(1,128)}', space=vmem, size = 0x9000, scoped, tag = 'internal scratch']
  %s0 = inlined_call_operand.vmem [shape: bf16[32,128], index: 0, kind: input, shape index: {}]
  %s1 = inlined_call_operand.vmem [shape: bf16[128,16], index: 1, kind: input, shape index: {}]
  %s2 = inlined_call_operand.vmem [shape: bf16[32,16], index: 2, kind: output, shape index: {0}]
  %s3 = inlined_call_operand.vmem [shape: f32[2,1,16], index: 3, kind: output, shape index: {1}]
  %s4 = inlined_call_operand.vmem [shape: f32[2,1,16], index: 4, kind: output, shape index: {2}]
  %5 = xla_tuple %s2, %s3, %s4
  %s6 = sld [smem:[#allocation0]]
  $region61: #{unet_forward.9} parent=0
    _
  %s8 = ssub.s32 1, %s6
  %s9 = scalar_select 0, %s8, %s6
  loop: start=0, step=1, limit=4
  $region2: #{unet_forward.9} parent=0 // loop_pre_header
    _
  $region3: #{unet_forward.9} parent=0 // loop_header
    %s11 = sphi 0, %s15
    %p12 = scmp.ge.s32.totalorder %s11, 4
    %s18 = sphi 0, %s30
    %s19 = sphi 0, %s26
    %s20 = sphi 0, %s18
    %s21 = sphi 0, %s19
    %s22 = sphi 0, %s20
    %s23 = sphi 0, %s21
    %s35 = sphi 0, %s37
    %s38 = sphi 0, %s35
    %s39 = sphi 0, %s38
    %s55 = sphi 0, %s39
    %s59 = sphi 0, %s59
    %s61 = sphi 0, %s59
    %s62 = sphi 0, %s61
    %s76 = sphi 0, %s62
    %s84 = sphi 0, %s86
    %s87 = sphi 0, %s84
    %s88 = sphi 0, %s87
    %s104 = sphi 0, %s88
    %s110 = sphi 0, %s112
    %s113 = sphi 0, %s110
    %s114 = sphi 0, %s113
    %s130 = sphi 0, %s114
    %s136 = sphi 0, %s138
    %s139 = sphi 0, %s136
    %s140 = sphi 0, %s139
    %s156 = sphi 0, %s140
  $region4: #{unet_forward.9} parent=0 // loop_header_branch
    %14 = sbr.rel (%p12) target = $region8
  $region5: #{unet_forward.9} parent=0 // loop_body
    %s16 = ssub.s32 %s11, 1
    %s17 = ssub.s32 %s11, 2
    %s24 = sadd.s32 1, %s19
    %p25 = scmp.ge.s32.totalorder %s24, 1
    %s26 = scalar_select %p25, 0, %s24
    %s27 = sadd.s32 1, %s18
    %s28 = scalar_select %p25, %s27, %s18
    %p29 = scmp.ge.s32.totalorder %s28, 2
    %s30 = scalar_select %p29, 0, %s28
    %s31 = sadd.s32 %s18, %s19
    %s32 = sadd.s32 %s30, %s26
    %s33 = ssub.s32 %s31, %s32
    %p34 = scmp.eq.s32.totalorder %s33, 0
    %s36 = sadd.s32 %s35, 1
    %s37 = scalar_select %p34, %s35, %s36
    %p40 = pneg %p34
    %p41 = scmp.eq.s32.totalorder %s11, 1
    %p42 = por %p40, %p41
    %p43 = scmp.ne.s32.totalorder %s35, %s38
    %p44 = scmp.eq.s32.totalorder %s11, 0
    %p45 = por %p43, %p44
    %p46 = scmp.ne.s32.totalorder %s35, %s38
    %p47 = scmp.eq.s32.totalorder %s16, 1
    %p48 = por %p46, %p47
    %p49 = scmp.ne.s32.totalorder %s38, %s39
    %p50 = scmp.eq.s32.totalorder %s16, 0
    %p51 = por %p49, %p50
    %p52 = scmp.ne.s32.totalorder %s38, %s39
    %p53 = scmp.eq.s32.totalorder %s17, 1
    %p54 = por %p52, %p53
    %p56 = scmp.ne.s32.totalorder %s39, %s55
    %p57 = scmp.eq.s32.totalorder %s17, 0
    %p58 = por %p56, %p57
    %s60 = sadd.s32 %s59, 1
    %p63 = scmp.eq.s32.totalorder %s11, 1
    %p64 = scmp.ne.s32.totalorder %s59, %s61
    %p65 = scmp.eq.s32.totalorder %s11, 0
    %p66 = por %p64, %p65
    %p67 = scmp.ne.s32.totalorder %s59, %s61
    %p68 = scmp.eq.s32.totalorder %s16, 1
    %p69 = por %p67, %p68
    %p70 = scmp.ne.s32.totalorder %s61, %s62
    %p71 = scmp.eq.s32.totalorder %s16, 0
    %p72 = por %p70, %p71
    %p73 = scmp.ne.s32.totalorder %s61, %s62
    %p74 = scmp.eq.s32.totalorder %s17, 1
    %p75 = por %p73, %p74
    %p77 = scmp.ne.s32.totalorder %s62, %s76
    %p78 = scmp.eq.s32.totalorder %s17, 0
    %p79 = por %p77, %p78
    %s80 = sadd.s32 %s18, %s19
    %s81 = sadd.s32 %s30, %s26
    %s82 = ssub.s32 %s80, %s81
    %p83 = scmp.eq.s32.totalorder %s82, 0
    %s85 = sadd.s32 %s84, 1
    %s86 = scalar_select %p83, %s84, %s85
    %p89 = pneg %p83
    %p90 = scmp.eq.s32.totalorder %s11, 1
    %p91 = por %p89, %p90
    %p92 = scmp.ne.s32.totalorder %s84, %s87
    %p93 = scmp.eq.s32.totalorder %s11, 0
    %p94 = por %p92, %p93
    %p95 = scmp.ne.s32.totalorder %s84, %s87
    %p96 = scmp.eq.s32.totalorder %s16, 1
    %p97 = por %p95, %p96
    %p98 = scmp.ne.s32.totalorder %s87, %s88
    %p99 = scmp.eq.s32.totalorder %s16, 0
    %p100 = por %p98, %p99
    %p101 = scmp.ne.s32.totalorder %s87, %s88
    %p102 = scmp.eq.s32.totalorder %s17, 1
    %p103 = por %p101, %p102
    %p105 = scmp.ne.s32.totalorder %s88, %s104
    %p106 = scmp.eq.s32.totalorder %s17, 0
    %p107 = por %p105, %p106
    %s108 = ssub.s32 %s18, %s30
    %p109 = scmp.eq.s32.totalorder %s108, 0
    %s111 = sadd.s32 %s110, 1
    %s112 = scalar_select %p109, %s110, %s111
    %p115 = pneg %p109
    %p116 = scmp.eq.s32.totalorder %s11, 1
    %p117 = por %p115, %p116
    %p118 = scmp.ne.s32.totalorder %s110, %s113
    %p119 = scmp.eq.s32.totalorder %s11, 0
    %p120 = por %p118, %p119
    %p121 = scmp.ne.s32.totalorder %s110, %s113
    %p122 = scmp.eq.s32.totalorder %s16, 1
    %p123 = por %p121, %p122
    %p124 = scmp.ne.s32.totalorder %s113, %s114
    %p125 = scmp.eq.s32.totalorder %s16, 0
    %p126 = por %p124, %p125
    %p127 = scmp.ne.s32.totalorder %s113, %s114
    %p128 = scmp.eq.s32.totalorder %s17, 1
    %p129 = por %p127, %p128
    %p131 = scmp.ne.s32.totalorder %s114, %s130
    %p132 = scmp.eq.s32.totalorder %s17, 0
    %p133 = por %p131, %p132
    %s134 = ssub.s32 %s18, %s30
    %p135 = scmp.eq.s32.totalorder %s134, 0
    %s137 = sadd.s32 %s136, 1
    %s138 = scalar_select %p135, %s136, %s137
    %p141 = pneg %p135
    %p142 = scmp.eq.s32.totalorder %s11, 1
    %p143 = por %p141, %p142
    %p144 = scmp.ne.s32.totalorder %s136, %s139
    %p145 = scmp.eq.s32.totalorder %s11, 0
    %p146 = por %p144, %p145
    %p147 = scmp.ne.s32.totalorder %s136, %s139
    %p148 = scmp.eq.s32.totalorder %s16, 1
    %p149 = por %p147, %p148
    %p150 = scmp.ne.s32.totalorder %s139, %s140
    %p151 = scmp.eq.s32.totalorder %s16, 0
    %p152 = por %p150, %p151
    %p153 = scmp.ne.s32.totalorder %s139, %s140
    %p154 = scmp.eq.s32.totalorder %s17, 1
    %p155 = por %p153, %p154
    %p157 = scmp.ne.s32.totalorder %s140, %s156
    %p158 = scmp.eq.s32.totalorder %s17, 0
    %p159 = por %p157, %p158
    %p160 = scmp.le.s32.totalorder 1, %s11
    %p161 = scmp.lt.s32.totalorder %s11, 3
    %p162 = pnand %p160, %p161
    %p163 = pneg %p162
    // Predicated region
    $region9: #{unet_forward.9} parent=5 // pred_check
      _
    $region10: #{unet_forward.9} parent=5 // pred_check_branch
      %165 = sbr.rel (%p162) target = $region12
    $region11: #{unet_forward.9} parent=5 // pred_region
      %s166 = ssub.s32 %s11, 1
      // Predicated region
      $region13: #{unet_forward.9} parent=11 // pred_check
        %p167 = pneg %p72
      $region14: #{unet_forward.9} parent=11 // pred_check_branch
        %169 = sbr.rel (%p167) target = $region16
      $region15: #{unet_forward.9} parent=11 // pred_region
        _
      $region16: #{unet_forward.9} parent=11 // pred_fallthru
        _
    $region12: #{unet_forward.9} parent=5 // pred_fallthru
      _
    %p170 = scmp.lt.s32.totalorder %s11, 2
    // Predicated region
    $region17: #{unet_forward.9} parent=5 // pred_check
      %p171 = pneg %p170
    $region18: #{unet_forward.9} parent=5 // pred_check_branch
      %173 = sbr.rel (%p171) target = $region20
    $region19: #{unet_forward.9} parent=5 // pred_region
      // Predicated region
      $region21: #{unet_forward.9} parent=19 // pred_check
        %p174 = pneg %p45
      $region22: #{unet_forward.9} parent=19 // pred_check_branch
        %176 = sbr.rel (%p174) target = $region24
      $region23: #{unet_forward.9} parent=19 // pred_region
        %s177 = sadd.s32 %s18, %s19
        %s178 = smul.u32 2, %s177
        %p179 = scmp.lt.s32.totalorder %s178, 3
        %s180 = scalar_select %p179, %s178, 3
        %s181 = smul.addr %s180, 4
        %s182 = scalar_lea.vmem %s0, %s181
        %s183 = sadd.s32 %s18, %s19
        %s184 = smul.u32 2, %s183
      $region24: #{unet_forward.9} parent=19 // pred_fallthru
        _
    $region20: #{unet_forward.9} parent=5 // pred_fallthru
      _
    %p185 = scmp.le.s32.totalorder 1, %s11
    %p186 = scmp.lt.s32.totalorder %s11, 3
    %p187 = pnand %p185, %p186
    %p188 = pneg %p187
    // Predicated region
    $region25: #{unet_forward.9} parent=5 // pred_check
      _
    $region26: #{unet_forward.9} parent=5 // pred_check_branch
      %190 = sbr.rel (%p187) target = $region28
    $region27: #{unet_forward.9} parent=5 // pred_region
      %s191 = ssub.s32 %s11, 1
      %s192 = sadd.s32 %s20, %s21
      %s193 = smul.u32 2, %s192
      %p194 = scmp.lt.s32.totalorder %s193, 3
      %s195 = scalar_select %p194, %s193, 3
      %s196 = smul.addr %s195, 4
      %s197 = scalar_lea.vmem %s0, %s196
      %p198 = pneg %p51
      %p199 = pneg %p48
      %p200 = pneg %p72
      %p201 = pneg %p69
      %p202 = pneg %p100
      %p203 = pneg %p97
      %s204 = sadd.s32 %s20, %s21
      %s205 = smul.u32 2, %s204
      %p206 = scmp.lt.s32.totalorder %s205, 3
      %s207 = scalar_select %p206, %s205, 3
      %s208 = smul.addr %s207, 4
      %s209 = scalar_lea.vmem %s2, %s208
      %p210 = pneg %p126
      %p211 = pneg %p123
      %p212 = scmp.lt.s32.totalorder %s20, 1
      %s213 = scalar_select %p212, %s20, 1
      %s214 = scalar_lea.vmem %s3, %s213
      %p215 = pneg %p152
      %p216 = pneg %p149
      %p217 = scmp.lt.s32.totalorder %s20, 1
      %s218 = scalar_select %p217, %s20, 1
      %s219 = scalar_lea.vmem %s4, %s218
      %s220 = sadd.s32 %s20, %s21
      %s221 = smul.u32 2, %s220
      %p222 = scmp.lt.s32.totalorder %s221, 3
      %s223 = scalar_select %p222, %s221, 3
      %s224 = smul.addr %s223, 4
      %s225 = scalar_lea.vmem %s0, %s224
      %s226 = sadd.s32 %s20, %s21
      %s227 = smul.u32 2, %s226
      %s228 = sadd.s32 %s20, %s21
      %s229 = smul.u32 2, %s228
      %p230 = scmp.lt.s32.totalorder %s229, 3
      %s231 = scalar_select %p230, %s229, 3
      %s232 = smul.addr %s231, 4
      %s233 = scalar_lea.vmem %s2, %s232
      %s234 = sadd.s32 %s20, %s21
      %s235 = smul.u32 2, %s234
      %p236 = scmp.lt.s32.totalorder %s20, 1
      %s237 = scalar_select %p236, %s20, 1
      %s238 = scalar_lea.vmem %s3, %s237
      %p239 = scmp.lt.s32.totalorder %s20, 1
      %s240 = scalar_select %p239, %s20, 1
      %s241 = scalar_lea.vmem %s4, %s240
      %p242 = scmp.eq.s32.totalorder %s21, 0
      // Predicated region
      $region29: #{unet_forward.9} parent=27 // pred_check
        %p243 = pneg %p242
      $region30: #{unet_forward.9} parent=27 // pred_check_branch
        %245 = sbr.rel (%p243) target = $region32
      $region31: #{unet_forward.9} parent=27 // pred_region
        %vm246 = vcmask 122880
        %247 = vst.msk [vmem:[%s238] sm:$0x1] %vm246, 0.0
        %248 = vst.msk [vmem:[%s241] sm:$0x1] %vm246, 0.0
      $region32: #{unet_forward.9} parent=27 // pred_fallthru
        _
      %v249 = vld [vmem:[%s225] sm:$0xf]
      %v250 = vld [vmem:[%s225 + $0x4] sm:$0xf]
      %v251 = vld [vmem:[%s1] sm:$0xf]
      %v252 = vld [vmem:[%s1 + $0x4] sm:$0xf]
      %v253 = vld [vmem:[%s1 + $0x8] sm:$0xf]
      %v254 = vld [vmem:[%s1 + $0xc] sm:$0xf]
      %v255 = vld [vmem:[%s1 + $0x10] sm:$0xf]
      %v256 = vld [vmem:[%s1 + $0x14] sm:$0xf]
      %v257 = vld [vmem:[%s1 + $0x18] sm:$0xf]
      %v258 = vld [vmem:[%s1 + $0x1c] sm:$0xf]
      %v259 = vld [vmem:[%s1 + $0x20] sm:$0xf]
      %v260 = vld [vmem:[%s1 + $0x24] sm:$0xf]
      %v261 = vld [vmem:[%s1 + $0x28] sm:$0xf]
      %v262 = vld [vmem:[%s1 + $0x2c] sm:$0xf]
      %v263 = vld [vmem:[%s1 + $0x30] sm:$0xf]
      %v264 = vld [vmem:[%s1 + $0x34] sm:$0xf]
      %v265 = vld [vmem:[%s1 + $0x38] sm:$0xf]
      %v266 = vld [vmem:[%s1 + $0x3c] sm:$0xf]
      %v269 = vunpack.c.l.b16 %v249
      %v270 = vunpack.c.l.b16 %v250
      %v271 = vpack.c.b16 %v270, %v269
      %v289 = vunpack.c.l.b16 %v251
      %v290 = vunpack.c.l.b16 %v252
      %v291 = vunpack.c.l.b16 %v253
      %v292 = vunpack.c.l.b16 %v254
      %v293 = vunpack.c.l.b16 %v255
      %v294 = vunpack.c.l.b16 %v256
      %v295 = vunpack.c.l.b16 %v257
      %v296 = vunpack.c.l.b16 %v258
      %v297 = vunpack.c.l.b16 %v259
      %v298 = vunpack.c.l.b16 %v260
      %v299 = vunpack.c.l.b16 %v261
      %v300 = vunpack.c.l.b16 %v262
      %v301 = vunpack.c.l.b16 %v263
      %v302 = vunpack.c.l.b16 %v264
      %v303 = vunpack.c.l.b16 %v265
      %v304 = vunpack.c.l.b16 %v266
      %v305 = vpack.c.b16 %v290, %v289
      %v306 = vpack.c.b16 %v292, %v291
      %v307 = vpack.c.b16 %v294, %v293
      %v308 = vpack.c.b16 %v296, %v295
      %v309 = vpack.c.b16 %v298, %v297
      %v310 = vpack.c.b16 %v300, %v299
      %v311 = vpack.c.b16 %v302, %v301
      %v312 = vpack.c.b16 %v304, %v303
      %321 = vmatpush.bf16.msra.mxu0 %v312
      %322 = vmatpush.bf16.msra.mxu0 %v311
      %323 = vmatpush.bf16.msra.mxu0 %v310
      %324 = vmatpush.bf16.msra.mxu0 %v309
      %325 = vmatpush.bf16.msra.mxu0 %v308
      %326 = vmatpush.bf16.msra.mxu0 %v307
      %327 = vmatpush.bf16.msra.mxu0 %v306
      %328 = vmatpush.bf16.msra.mxu0 %v305
      %329 = vmatmul.bf16.gmra.mxu0 %v271
      %v330 = vpop.f32.mrf.mxu0
      %v331 = vadd.f32 0.0, %v330
      %v332 = vpop.f32.mrf.mxu0
      %v333 = vadd.f32 0.0, %v332
      %334 = vdwg.mxu0
      %v335 = vld [vmem:[%s238] sm:$0x1]
      %vm336 = vcmask 130048
      %v337 = vsel %vm336, %v331, 0.0
      %v338 = vsel %vm336, %v333, 0.0
      %v339 = vadd.f32 %v337, %v338
      %v340 = vrot.slane %v339, 4
      %v341 = vadd.f32 %v339, %v340
      %v342 = vrot.slane %v341, 2
      %v343 = vadd.f32 %v341, %v342
      %v344 = vrot.slane %v343, 1
      %v345 = vadd.f32 %v343, %v344
      %v346 = vadd.f32 %v335, %v345
      %vm347 = vcmask 122880
      %348 = vst.msk [vmem:[%s238] sm:$0x1] %vm347, %v346
      %v349 = vld [vmem:[%s241] sm:$0x1]
      %v350 = vmul.f32 %v331, %v331
      %v351 = vmul.f32 %v333, %v333
      %v352 = vsel %vm336, %v350, 0.0
      %v353 = vsel %vm336, %v351, 0.0
      %v354 = vadd.f32 %v352, %v353
      %v355 = vrot.slane %v354, 4
      %v356 = vadd.f32 %v354, %v355
      %v357 = vrot.slane %v356, 2
      %v358 = vadd.f32 %v356, %v357
      %v359 = vrot.slane %v358, 1
      %v360 = vadd.f32 %v358, %v359
      %v361 = vadd.f32 %v349, %v360
      %362 = vst.msk [vmem:[%s241] sm:$0x1] %vm347, %v361
      %v363 = vpack.c.bf16 %v331, %v331
      %v364 = vpack.c.bf16 %v333, %v333
      %vm365 = vcmask 125952
      %366 = vst.msk [vmem:[%s233] sm:$0xf] %vm365, %v363
      %367 = vst.msk [vmem:[%s233 + $0x4] sm:$0xf] %vm365, %v364
      %s368 = sadd.s32 %s20, %s21
      %s369 = smul.u32 2, %s368
      %p370 = scmp.lt.s32.totalorder %s369, 3
      %s371 = scalar_select %p370, %s369, 3
      %s372 = smul.addr %s371, 4
      %s373 = scalar_lea.vmem %s2, %s372
      %p374 = scmp.lt.s32.totalorder %s20, 1
      %s375 = scalar_select %p374, %s20, 1
      %s376 = scalar_lea.vmem %s3, %s375
      %p377 = scmp.lt.s32.totalorder %s20, 1
      %s378 = scalar_select %p377, %s20, 1
      %s379 = scalar_lea.vmem %s4, %s378
      // Predicated region
      $region33: #{unet_forward.9} parent=27 // pred_check
        %p380 = pneg %p97
      $region34: #{unet_forward.9} parent=27 // pred_check_branch
        %382 = sbr.rel (%p380) target = $region36
      $region35: #{unet_forward.9} parent=27 // pred_region
        %s383 = sadd.s32 %s20, %s21
        %s384 = smul.u32 2, %s383
      $region36: #{unet_forward.9} parent=27 // pred_fallthru
        _
      // Predicated region
      $region37: #{unet_forward.9} parent=27 // pred_check
        %p385 = pneg %p123
      $region38: #{unet_forward.9} parent=27 // pred_check_branch
        %387 = sbr.rel (%p385) target = $region40
      $region39: #{unet_forward.9} parent=27 // pred_region
        _
      $region40: #{unet_forward.9} parent=27 // pred_fallthru
        _
      // Predicated region
      $region41: #{unet_forward.9} parent=27 // pred_check
        %p388 = pneg %p149
      $region42: #{unet_forward.9} parent=27 // pred_check_branch
        %390 = sbr.rel (%p388) target = $region44
      $region43: #{unet_forward.9} parent=27 // pred_region
        _
      $region44: #{unet_forward.9} parent=27 // pred_fallthru
        _
    $region28: #{unet_forward.9} parent=5 // pred_fallthru
      _
    %p391 = scmp.le.s32.totalorder 2, %s11
    // Predicated region
    $region45: #{unet_forward.9} parent=5 // pred_check
      %p392 = pneg %p391
    $region46: #{unet_forward.9} parent=5 // pred_check_branch
      %394 = sbr.rel (%p392) target = $region48
    $region47: #{unet_forward.9} parent=5 // pred_region
      %s395 = ssub.s32 %s11, 2
      // Predicated region
      $region49: #{unet_forward.9} parent=47 // pred_check
        %p396 = pneg %p103
      $region50: #{unet_forward.9} parent=47 // pred_check_branch
        %398 = sbr.rel (%p396) target = $region52
      $region51: #{unet_forward.9} parent=47 // pred_region
        %s399 = sadd.s32 %s22, %s23
        %s400 = smul.u32 2, %s399
        %p401 = scmp.lt.s32.totalorder %s400, 3
        %s402 = scalar_select %p401, %s400, 3
        %s403 = smul.addr %s402, 4
        %s404 = scalar_lea.vmem %s2, %s403
      $region52: #{unet_forward.9} parent=47 // pred_fallthru
        _
      // Predicated region
      $region53: #{unet_forward.9} parent=47 // pred_check
        %p405 = pneg %p129
      $region54: #{unet_forward.9} parent=47 // pred_check_branch
        %407 = sbr.rel (%p405) target = $region56
      $region55: #{unet_forward.9} parent=47 // pred_region
        %p408 = scmp.lt.s32.totalorder %s22, 1
        %s409 = scalar_select %p408, %s22, 1
        %s410 = scalar_lea.vmem %s3, %s409
      $region56: #{unet_forward.9} parent=47 // pred_fallthru
        _
      // Predicated region
      $region57: #{unet_forward.9} parent=47 // pred_check
        %p411 = pneg %p155
      $region58: #{unet_forward.9} parent=47 // pred_check_branch
        %413 = sbr.rel (%p411) target = $region60
      $region59: #{unet_forward.9} parent=47 // pred_region
        %p414 = scmp.lt.s32.totalorder %s22, 1
        %s415 = scalar_select %p414, %s22, 1
        %s416 = scalar_lea.vmem %s4, %s415
      $region60: #{unet_forward.9} parent=47 // pred_fallthru
        _
    $region48: #{unet_forward.9} parent=5 // pred_fallthru
      _
  $region6: #{unet_forward.9} parent=0 // loop_footer
    %s15 = sadd.s32 1, %s11
  $region7: #{unet_forward.9} parent=0 // loop_footer_branch
    %10 = sbr.rel target = $region3
  $region8: #{unet_forward.9} parent=0 // loop_exit
    _

// kernel: unet_forward.10
$region0: #{unet_forward.10}
  #allocation0 [shape = 'u32[]', space=smem, size = 0x4, offset = 0x4, fixed_abs, tag = 'smem constant byte address 0x4 - core index']
  #allocation1 [shape = 'u32[72,128]{1,0:T(1,128)}', space=vmem, size = 0x9000, scoped, tag = 'internal scratch']
  %s0 = inlined_call_operand.vmem [shape: bf16[8,256], index: 0, kind: input, shape index: {}]
  %s1 = inlined_call_operand.vmem [shape: bf16[256,32], index: 1, kind: input, shape index: {}]
  %s2 = inlined_call_operand.vmem [shape: bf16[8,32], index: 2, kind: output, shape index: {0}]
  %s3 = inlined_call_operand.vmem [shape: f32[1,1,32], index: 3, kind: output, shape index: {1}]
  %s4 = inlined_call_operand.vmem [shape: f32[1,1,32], index: 4, kind: output, shape index: {2}]
  %5 = xla_tuple %s2, %s3, %s4
  %s6 = sld [smem:[#allocation0]]
  $region38: #{unet_forward.10} parent=0
    _
  %s8 = ssub.s32 1, %s6
  %s9 = scalar_select 0, %s8, %s6
  // Predicated region
  $region2: #{unet_forward.10} parent=0 // pred_check
    _
  $region3: #{unet_forward.10} parent=0 // pred_check_branch
    %11 = sbr.rel (0) target = $region5
  $region4: #{unet_forward.10} parent=0 // pred_region
    %s12 = sadd.s32 0, 0
    %p13 = scmp.lt.s32.totalorder %s12, 0
    %s14 = scalar_select %p13, %s12, 0
    %s15 = smul.addr %s14, 2
    %s16 = smul.addr %s15, 4
    %s17 = scalar_lea.vmem %s0, %s16
    %s18 = sadd.s32 0, 0
  $region5: #{unet_forward.10} parent=0 // pred_fallthru
    _
  // Predicated region
  $region6: #{unet_forward.10} parent=0 // pred_check
    _
  $region7: #{unet_forward.10} parent=0 // pred_check_branch
    %20 = sbr.rel (0) target = $region9
  $region8: #{unet_forward.10} parent=0 // pred_region
    _
  $region9: #{unet_forward.10} parent=0 // pred_fallthru
    _
  %s21 = sadd.s32 0, 0
  %p22 = scmp.lt.s32.totalorder %s21, 0
  %s23 = scalar_select %p22, %s21, 0
  %s24 = smul.addr %s23, 2
  %s25 = smul.addr %s24, 4
  %s26 = scalar_lea.vmem %s0, %s25
  %s27 = sadd.s32 0, 0
  %p28 = scmp.lt.s32.totalorder %s27, 0
  %s29 = scalar_select %p28, %s27, 0
  %s30 = smul.addr %s29, 4
  %s31 = scalar_lea.vmem %s2, %s30
  %s32 = sadd.s32 0, 0
  %p33 = scmp.lt.s32.totalorder %s32, 0
  %s34 = scalar_select %p33, %s32, 0
  %s35 = smul.addr %s34, 2
  %s36 = smul.addr %s35, 4
  %s37 = scalar_lea.vmem %s0, %s36
  %s38 = sadd.s32 0, 0
  %s39 = sadd.s32 0, 0
  %p40 = scmp.lt.s32.totalorder %s39, 0
  %s41 = scalar_select %p40, %s39, 0
  %s42 = smul.addr %s41, 4
  %s43 = scalar_lea.vmem %s2, %s42
  %s44 = sadd.s32 0, 0
  %p45 = scmp.eq.s32.totalorder 0, 0
  // Predicated region
  $region10: #{unet_forward.10} parent=0 // pred_check
    %p46 = pneg %p45
  $region11: #{unet_forward.10} parent=0 // pred_check_branch
    %48 = sbr.rel (%p46) target = $region13
  $region12: #{unet_forward.10} parent=0 // pred_region
    %vm49 = vcmask 253952
    %50 = vst.msk [vmem:[%s3] sm:$0x1] %vm49, 0.0
    %51 = vst.msk [vmem:[%s4] sm:$0x1] %vm49, 0.0
  $region13: #{unet_forward.10} parent=0 // pred_fallthru
    _
  %v52 = vld [vmem:[%s37] sm:$0xff]
  %v53 = vld [vmem:[%s1] sm:$0xf]
  %v54 = vld [vmem:[%s1 + $0x4] sm:$0xf]
  %v55 = vld [vmem:[%s1 + $0x8] sm:$0xf]
  %v56 = vld [vmem:[%s1 + $0xc] sm:$0xf]
  %v57 = vld [vmem:[%s1 + $0x10] sm:$0xf]
  %v58 = vld [vmem:[%s1 + $0x14] sm:$0xf]
  %v59 = vld [vmem:[%s1 + $0x18] sm:$0xf]
  %v60 = vld [vmem:[%s1 + $0x1c] sm:$0xf]
  %v61 = vld [vmem:[%s1 + $0x20] sm:$0xf]
  %v62 = vld [vmem:[%s1 + $0x24] sm:$0xf]
  %v63 = vld [vmem:[%s1 + $0x28] sm:$0xf]
  %v64 = vld [vmem:[%s1 + $0x2c] sm:$0xf]
  %v65 = vld [vmem:[%s1 + $0x30] sm:$0xf]
  %v66 = vld [vmem:[%s1 + $0x34] sm:$0xf]
  %v67 = vld [vmem:[%s1 + $0x38] sm:$0xf]
  %v68 = vld [vmem:[%s1 + $0x3c] sm:$0xf]
  %v69 = vld [vmem:[%s1 + $0x40] sm:$0xf]
  %v70 = vld [vmem:[%s1 + $0x44] sm:$0xf]
  %v71 = vld [vmem:[%s1 + $0x48] sm:$0xf]
  %v72 = vld [vmem:[%s1 + $0x4c] sm:$0xf]
  %v73 = vld [vmem:[%s1 + $0x50] sm:$0xf]
  %v74 = vld [vmem:[%s1 + $0x54] sm:$0xf]
  %v75 = vld [vmem:[%s1 + $0x58] sm:$0xf]
  %v76 = vld [vmem:[%s1 + $0x5c] sm:$0xf]
  %v77 = vld [vmem:[%s1 + $0x60] sm:$0xf]
  %v78 = vld [vmem:[%s1 + $0x64] sm:$0xf]
  %v79 = vld [vmem:[%s1 + $0x68] sm:$0xf]
  %v80 = vld [vmem:[%s1 + $0x6c] sm:$0xf]
  %v81 = vld [vmem:[%s1 + $0x70] sm:$0xf]
  %v82 = vld [vmem:[%s1 + $0x74] sm:$0xf]
  %v83 = vld [vmem:[%s1 + $0x78] sm:$0xf]
  %v84 = vld [vmem:[%s1 + $0x7c] sm:$0xf]
  %v86 = vunpack.c.l.b16 %v52
  %v87 = vunpack.c.h.b16 %v52
  %v88 = vpack.c.b16 %v86, %v86
  %v89 = vpack.c.b16 %v87, %v87
  %v124 = vunpack.c.l.b16 %v53
  %v125 = vunpack.c.l.b16 %v54
  %v126 = vunpack.c.l.b16 %v55
  %v127 = vunpack.c.l.b16 %v56
  %v128 = vunpack.c.l.b16 %v57
  %v129 = vunpack.c.l.b16 %v58
  %v130 = vunpack.c.l.b16 %v59
  %v131 = vunpack.c.l.b16 %v60
  %v132 = vunpack.c.l.b16 %v61
  %v133 = vunpack.c.l.b16 %v62
  %v134 = vunpack.c.l.b16 %v63
  %v135 = vunpack.c.l.b16 %v64
  %v136 = vunpack.c.l.b16 %v65
  %v137 = vunpack.c.l.b16 %v66
  %v138 = vunpack.c.l.b16 %v67
  %v139 = vunpack.c.l.b16 %v68
  %v140 = vunpack.c.l.b16 %v69
  %v141 = vunpack.c.l.b16 %v70
  %v142 = vunpack.c.l.b16 %v71
  %v143 = vunpack.c.l.b16 %v72
  %v144 = vunpack.c.l.b16 %v73
  %v145 = vunpack.c.l.b16 %v74
  %v146 = vunpack.c.l.b16 %v75
  %v147 = vunpack.c.l.b16 %v76
  %v148 = vunpack.c.l.b16 %v77
  %v149 = vunpack.c.l.b16 %v78
  %v150 = vunpack.c.l.b16 %v79
  %v151 = vunpack.c.l.b16 %v80
  %v152 = vunpack.c.l.b16 %v81
  %v153 = vunpack.c.l.b16 %v82
  %v154 = vunpack.c.l.b16 %v83
  %v155 = vunpack.c.l.b16 %v84
  %v156 = vpack.c.b16 %v125, %v124
  %v157 = vpack.c.b16 %v127, %v126
  %v158 = vpack.c.b16 %v129, %v128
  %v159 = vpack.c.b16 %v131, %v130
  %v160 = vpack.c.b16 %v133, %v132
  %v161 = vpack.c.b16 %v135, %v134
  %v162 = vpack.c.b16 %v137, %v136
  %v163 = vpack.c.b16 %v139, %v138
  %v164 = vpack.c.b16 %v141, %v140
  %v165 = vpack.c.b16 %v143, %v142
  %v166 = vpack.c.b16 %v145, %v144
  %v167 = vpack.c.b16 %v147, %v146
  %v168 = vpack.c.b16 %v149, %v148
  %v169 = vpack.c.b16 %v151, %v150
  %v170 = vpack.c.b16 %v153, %v152
  %v171 = vpack.c.b16 %v155, %v154
  %188 = vmatpush.bf16.msra.mxu0 %v163
  %189 = vmatpush.bf16.msra.mxu0 %v162
  %190 = vmatpush.bf16.msra.mxu0 %v161
  %191 = vmatpush.bf16.msra.mxu0 %v160
  %192 = vmatpush.bf16.msra.mxu0 %v159
  %193 = vmatpush.bf16.msra.mxu0 %v158
  %194 = vmatpush.bf16.msra.mxu0 %v157
  %195 = vmatpush.bf16.msra.mxu0 %v156
  %196 = vmatmul.bf16.gmra.mxu0 %v88
  %v197 = vpop.f32.mrf.mxu0
  %v198 = vadd.f32 0.0, %v197
  %v199 = vpop.f32.mrf.mxu0
  %200 = vdwg.mxu0
  %201 = vmatpush.bf16.msra.mxu0 %v171
  %202 = vmatpush.bf16.msra.mxu0 %v170
  %203 = vmatpush.bf16.msra.mxu0 %v169
  %204 = vmatpush.bf16.msra.mxu0 %v168
  %205 = vmatpush.bf16.msra.mxu0 %v167
  %206 = vmatpush.bf16.msra.mxu0 %v166
  %207 = vmatpush.bf16.msra.mxu0 %v165
  %208 = vmatpush.bf16.msra.mxu0 %v164
  %209 = vmatmul.bf16.gmra.mxu0 %v89
  %v210 = vpop.f32.mrf.mxu0
  %v211 = vadd.f32 %v198, %v210
  %v212 = vpop.f32.mrf.mxu0
  %213 = vdwg.mxu0
  %v214 = vld [vmem:[%s3] sm:$0x1]
  %vm215 = vcmask 261120
  %v216 = vsel %vm215, %v211, 0.0
  %v217 = vrot.slane %v216, 4
  %v218 = vadd.f32 %v216, %v217
  %v219 = vrot.slane %v218, 2
  %v220 = vadd.f32 %v218, %v219
  %v221 = vrot.slane %v220, 1
  %v222 = vadd.f32 %v220, %v221
  %v223 = vadd.f32 %v214, %v222
  %vm224 = vcmask 253952
  %225 = vst.msk [vmem:[%s3] sm:$0x1] %vm224, %v223
  %v226 = vld [vmem:[%s4] sm:$0x1]
  %v227 = vmul.f32 %v211, %v211
  %v228 = vsel %vm215, %v227, 0.0
  %v229 = vrot.slane %v228, 4
  %v230 = vadd.f32 %v228, %v229
  %v231 = vrot.slane %v230, 2
  %v232 = vadd.f32 %v230, %v231
  %v233 = vrot.slane %v232, 1
  %v234 = vadd.f32 %v232, %v233
  %v235 = vadd.f32 %v226, %v234
  %236 = vst.msk [vmem:[%s4] sm:$0x1] %vm224, %v235
  %v237 = vpack.c.bf16 %v211, %v211
  %vm238 = vcmask 257024
  %239 = vst.msk [vmem:[%s43] sm:$0xf] %vm238, %v237
  %s240 = sadd.s32 0, 0
  %p241 = scmp.lt.s32.totalorder %s240, 0
  %s242 = scalar_select %p241, %s240, 0
  %s243 = smul.addr %s242, 4
  %s244 = scalar_lea.vmem %s2, %s243
  // Predicated region
  $region14: #{unet_forward.10} parent=0 // pred_check
    _
  $region15: #{unet_forward.10} parent=0 // pred_check_branch
    %246 = sbr.rel (0) target = $region17
  $region16: #{unet_forward.10} parent=0 // pred_region
    %s247 = sadd.s32 0, 0
  $region17: #{unet_forward.10} parent=0 // pred_fallthru
    _
  // Predicated region
  $region18: #{unet_forward.10} parent=0 // pred_check
    _
  $region19: #{unet_forward.10} parent=0 // pred_check_branch
    %249 = sbr.rel (0) target = $region21
  $region20: #{unet_forward.10} parent=0 // pred_region
    _
  $region21: #{unet_forward.10} parent=0 // pred_fallthru
    _
  // Predicated region
  $region22: #{unet_forward.10} parent=0 // pred_check
    _
  $region23: #{unet_forward.10} parent=0 // pred_check_branch
    %251 = sbr.rel (0) target = $region25
  $region24: #{unet_forward.10} parent=0 // pred_region
    _
  $region25: #{unet_forward.10} parent=0 // pred_fallthru
    _
  // Predicated region
  $region26: #{unet_forward.10} parent=0 // pred_check
    _
  $region27: #{unet_forward.10} parent=0 // pred_check_branch
    %253 = sbr.rel (0) target = $region29
  $region28: #{unet_forward.10} parent=0 // pred_region
    %s254 = sadd.s32 0, 0
    %p255 = scmp.lt.s32.totalorder %s254, 0
    %s256 = scalar_select %p255, %s254, 0
    %s257 = smul.addr %s256, 4
    %s258 = scalar_lea.vmem %s2, %s257
  $region29: #{unet_forward.10} parent=0 // pred_fallthru
    _
  // Predicated region
  $region30: #{unet_forward.10} parent=0 // pred_check
    _
  $region31: #{unet_forward.10} parent=0 // pred_check_branch
    %260 = sbr.rel (0) target = $region33
  $region32: #{unet_forward.10} parent=0 // pred_region
    _
  $region33: #{unet_forward.10} parent=0 // pred_fallthru
    _
  // Predicated region
  $region34: #{unet_forward.10} parent=0 // pred_check
    _
  $region35: #{unet_forward.10} parent=0 // pred_check_branch
    %262 = sbr.rel (0) target = $region37
  $region36: #{unet_forward.10} parent=0 // pred_region
    _
  $region37: #{unet_forward.10} parent=0 // pred_fallthru
    _

// kernel: unet_forward.11
$region0: #{unet_forward.11}
  #allocation0 [shape = 'u32[]', space=smem, size = 0x4, offset = 0x4, fixed_abs, tag = 'smem constant byte address 0x4 - core index']
  #allocation1 [shape = 'u32[72,128]{1,0:T(1,128)}', space=vmem, size = 0x9000, scoped, tag = 'internal scratch']
  %s0 = inlined_call_operand.vmem [shape: bf16[8,512], index: 0, kind: input, shape index: {}]
  %s1 = inlined_call_operand.vmem [shape: bf16[512,64], index: 1, kind: input, shape index: {}]
  %s2 = inlined_call_operand.vmem [shape: bf16[8,64], index: 2, kind: output, shape index: {}]
  %s3 = sld [smem:[#allocation0]]
  $region18: #{unet_forward.11} parent=0
    _
  %s5 = ssub.s32 1, %s3
  %s6 = scalar_select 0, %s5, %s3
  // Predicated region
  $region2: #{unet_forward.11} parent=0 // pred_check
    _
  $region3: #{unet_forward.11} parent=0 // pred_check_branch
    %8 = sbr.rel (0) target = $region5
  $region4: #{unet_forward.11} parent=0 // pred_region
    %s9 = sadd.s32 0, 0
    %p10 = scmp.lt.s32.totalorder %s9, 0
    %s11 = scalar_select %p10, %s9, 0
    %s12 = smul.addr %s11, 4
    %s13 = smul.addr %s12, 4
    %s14 = scalar_lea.vmem %s0, %s13
    %s15 = sadd.s32 0, 0
  $region5: #{unet_forward.11} parent=0 // pred_fallthru
    _
  // Predicated region
  $region6: #{unet_forward.11} parent=0 // pred_check
    _
  $region7: #{unet_forward.11} parent=0 // pred_check_branch
    %17 = sbr.rel (0) target = $region9
  $region8: #{unet_forward.11} parent=0 // pred_region
    _
  $region9: #{unet_forward.11} parent=0 // pred_fallthru
    _
  %s18 = sadd.s32 0, 0
  %p19 = scmp.lt.s32.totalorder %s18, 0
  %s20 = scalar_select %p19, %s18, 0
  %s21 = smul.addr %s20, 4
  %s22 = smul.addr %s21, 4
  %s23 = scalar_lea.vmem %s0, %s22
  %s24 = sadd.s32 0, 0
  %p25 = scmp.lt.s32.totalorder %s24, 0
  %s26 = scalar_select %p25, %s24, 0
  %s27 = smul.addr %s26, 4
  %s28 = scalar_lea.vmem %s2, %s27
  %s29 = sadd.s32 0, 0
  %p30 = scmp.lt.s32.totalorder %s29, 0
  %s31 = scalar_select %p30, %s29, 0
  %s32 = smul.addr %s31, 4
  %s33 = smul.addr %s32, 4
  %s34 = scalar_lea.vmem %s0, %s33
  %s35 = sadd.s32 0, 0
  %s36 = sadd.s32 0, 0
  %p37 = scmp.lt.s32.totalorder %s36, 0
  %s38 = scalar_select %p37, %s36, 0
  %s39 = smul.addr %s38, 4
  %s40 = scalar_lea.vmem %s2, %s39
  %s41 = sadd.s32 0, 0
  %v42 = vld [vmem:[%s34] sm:$0xff]
  %v43 = vld [vmem:[%s34 + $0x8] sm:$0xff]
  %v44 = vld [vmem:[%s1] sm:$0xf]
  %v45 = vld [vmem:[%s1 + $0x4] sm:$0xf]
  %v46 = vld [vmem:[%s1 + $0x8] sm:$0xf]
  %v47 = vld [vmem:[%s1 + $0xc] sm:$0xf]
  %v48 = vld [vmem:[%s1 + $0x10] sm:$0xf]
  %v49 = vld [vmem:[%s1 + $0x14] sm:$0xf]
  %v50 = vld [vmem:[%s1 + $0x18] sm:$0xf]
  %v51 = vld [vmem:[%s1 + $0x1c] sm:$0xf]
  %v52 = vld [vmem:[%s1 + $0x20] sm:$0xf]
  %v53 = vld [vmem:[%s1 + $0x24] sm:$0xf]
  %v54 = vld [vmem:[%s1 + $0x28] sm:$0xf]
  %v55 = vld [vmem:[%s1 + $0x2c] sm:$0xf]
  %v56 = vld [vmem:[%s1 + $0x30] sm:$0xf]
  %v57 = vld [vmem:[%s1 + $0x34] sm:$0xf]
  %v58 = vld [vmem:[%s1 + $0x38] sm:$0xf]
  %v59 = vld [vmem:[%s1 + $0x3c] sm:$0xf]
  %v60 = vld [vmem:[%s1 + $0x40] sm:$0xf]
  %v61 = vld [vmem:[%s1 + $0x44] sm:$0xf]
  %v62 = vld [vmem:[%s1 + $0x48] sm:$0xf]
  %v63 = vld [vmem:[%s1 + $0x4c] sm:$0xf]
  %v64 = vld [vmem:[%s1 + $0x50] sm:$0xf]
  %v65 = vld [vmem:[%s1 + $0x54] sm:$0xf]
  %v66 = vld [vmem:[%s1 + $0x58] sm:$0xf]
  %v67 = vld [vmem:[%s1 + $0x5c] sm:$0xf]
  %v68 = vld [vmem:[%s1 + $0x60] sm:$0xf]
  %v69 = vld [vmem:[%s1 + $0x64] sm:$0xf]
  %v70 = vld [vmem:[%s1 + $0x68] sm:$0xf]
  %v71 = vld [vmem:[%s1 + $0x6c] sm:$0xf]
  %v72 = vld [vmem:[%s1 + $0x70] sm:$0xf]
  %v73 = vld [vmem:[%s1 + $0x74] sm:$0xf]
  %v74 = vld [vmem:[%s1 + $0x78] sm:$0xf]
  %v75 = vld [vmem:[%s1 + $0x7c] sm:$0xf]
  %v76 = vld [vmem:[%s1 + $0x80] sm:$0xf]
  %v77 = vld [vmem:[%s1 + $0x84] sm:$0xf]
  %v78 = vld [vmem:[%s1 + $0x88] sm:$0xf]
  %v79 = vld [vmem:[%s1 + $0x8c] sm:$0xf]
  %v80 = vld [vmem:[%s1 + $0x90] sm:$0xf]
  %v81 = vld [vmem:[%s1 + $0x94] sm:$0xf]
  %v82 = vld [vmem:[%s1 + $0x98] sm:$0xf]
  %v83 = vld [vmem:[%s1 + $0x9c] sm:$0xf]
  %v84 = vld [vmem:[%s1 + $0xa0] sm:$0xf]
  %v85 = vld [vmem:[%s1 + $0xa4] sm:$0xf]
  %v86 = vld [vmem:[%s1 + $0xa8] sm:$0xf]
  %v87 = vld [vmem:[%s1 + $0xac] sm:$0xf]
  %v88 = vld [vmem:[%s1 + $0xb0] sm:$0xf]
  %v89 = vld [vmem:[%s1 + $0xb4] sm:$0xf]
  %v90 = vld [vmem:[%s1 + $0xb8] sm:$0xf]
  %v91 = vld [vmem:[%s1 + $0xbc] sm:$0xf]
  %v92 = vld [vmem:[%s1 + $0xc0] sm:$0xf]
  %v93 = vld [vmem:[%s1 + $0xc4] sm:$0xf]
  %v94 = vld [vmem:[%s1 + $0xc8] sm:$0xf]
  %v95 = vld [vmem:[%s1 + $0xcc] sm:$0xf]
  %v96 = vld [vmem:[%s1 + $0xd0] sm:$0xf]
  %v97 = vld [vmem:[%s1 + $0xd4] sm:$0xf]
  %v98 = vld [vmem:[%s1 + $0xd8] sm:$0xf]
  %v99 = vld [vmem:[%s1 + $0xdc] sm:$0xf]
  %v100 = vld [vmem:[%s1 + $0xe0] sm:$0xf]
  %v101 = vld [vmem:[%s1 + $0xe4] sm:$0xf]
  %v102 = vld [vmem:[%s1 + $0xe8] sm:$0xf]
  %v103 = vld [vmem:[%s1 + $0xec] sm:$0xf]
  %v104 = vld [vmem:[%s1 + $0xf0] sm:$0xf]
  %v105 = vld [vmem:[%s1 + $0xf4] sm:$0xf]
  %v106 = vld [vmem:[%s1 + $0xf8] sm:$0xf]
  %v107 = vld [vmem:[%s1 + $0xfc] sm:$0xf]
  %v110 = vunpack.c.l.b16 %v42
  %v111 = vunpack.c.h.b16 %v42
  %v112 = vunpack.c.l.b16 %v43
  %v113 = vunpack.c.h.b16 %v43
  %v114 = vpack.c.b16 %v110, %v110
  %v115 = vpack.c.b16 %v111, %v111
  %v116 = vpack.c.b16 %v112, %v112
  %v117 = vpack.c.b16 %v113, %v113
  %v186 = vunpack.c.l.b16 %v44
  %v187 = vunpack.c.l.b16 %v45
  %v188 = vunpack.c.l.b16 %v46
  %v189 = vunpack.c.l.b16 %v47
  %v190 = vunpack.c.l.b16 %v48
  %v191 = vunpack.c.l.b16 %v49
  %v192 = vunpack.c.l.b16 %v50
  %v193 = vunpack.c.l.b16 %v51
  %v194 = vunpack.c.l.b16 %v52
  %v195 = vunpack.c.l.b16 %v53
  %v196 = vunpack.c.l.b16 %v54
  %v197 = vunpack.c.l.b16 %v55
  %v198 = vunpack.c.l.b16 %v56
  %v199 = vunpack.c.l.b16 %v57
  %v200 = vunpack.c.l.b16 %v58
  %v201 = vunpack.c.l.b16 %v59
  %v202 = vunpack.c.l.b16 %v60
  %v203 = vunpack.c.l.b16 %v61
  %v204 = vunpack.c.l.b16 %v62
  %v205 = vunpack.c.l.b16 %v63
  %v206 = vunpack.c.l.b16 %v64
  %v207 = vunpack.c.l.b16 %v65
  %v208 = vunpack.c.l.b16 %v66
  %v209 = vunpack.c.l.b16 %v67
  %v210 = vunpack.c.l.b16 %v68
  %v211 = vunpack.c.l.b16 %v69
  %v212 = vunpack.c.l.b16 %v70
  %v213 = vunpack.c.l.b16 %v71
  %v214 = vunpack.c.l.b16 %v72
  %v215 = vunpack.c.l.b16 %v73
  %v216 = vunpack.c.l.b16 %v74
  %v217 = vunpack.c.l.b16 %v75
  %v218 = vunpack.c.l.b16 %v76
  %v219 = vunpack.c.l.b16 %v77
  %v220 = vunpack.c.l.b16 %v78
  %v221 = vunpack.c.l.b16 %v79
  %v222 = vunpack.c.l.b16 %v80
  %v223 = vunpack.c.l.b16 %v81
  %v224 = vunpack.c.l.b16 %v82
  %v225 = vunpack.c.l.b16 %v83
  %v226 = vunpack.c.l.b16 %v84
  %v227 = vunpack.c.l.b16 %v85
  %v228 = vunpack.c.l.b16 %v86
  %v229 = vunpack.c.l.b16 %v87
  %v230 = vunpack.c.l.b16 %v88
  %v231 = vunpack.c.l.b16 %v89
  %v232 = vunpack.c.l.b16 %v90
  %v233 = vunpack.c.l.b16 %v91
  %v234 = vunpack.c.l.b16 %v92
  %v235 = vunpack.c.l.b16 %v93
  %v236 = vunpack.c.l.b16 %v94
  %v237 = vunpack.c.l.b16 %v95
  %v238 = vunpack.c.l.b16 %v96
  %v239 = vunpack.c.l.b16 %v97
  %v240 = vunpack.c.l.b16 %v98
  %v241 = vunpack.c.l.b16 %v99
  %v242 = vunpack.c.l.b16 %v100
  %v243 = vunpack.c.l.b16 %v101
  %v244 = vunpack.c.l.b16 %v102
  %v245 = vunpack.c.l.b16 %v103
  %v246 = vunpack.c.l.b16 %v104
  %v247 = vunpack.c.l.b16 %v105
  %v248 = vunpack.c.l.b16 %v106
  %v249 = vunpack.c.l.b16 %v107
  %v250 = vpack.c.b16 %v187, %v186
  %v251 = vpack.c.b16 %v189, %v188
  %v252 = vpack.c.b16 %v191, %v190
  %v253 = vpack.c.b16 %v193, %v192
  %v254 = vpack.c.b16 %v195, %v194
  %v255 = vpack.c.b16 %v197, %v196
  %v256 = vpack.c.b16 %v199, %v198
  %v257 = vpack.c.b16 %v201, %v200
  %v258 = vpack.c.b16 %v203, %v202
  %v259 = vpack.c.b16 %v205, %v204
  %v260 = vpack.c.b16 %v207, %v206
  %v261 = vpack.c.b16 %v209, %v208
  %v262 = vpack.c.b16 %v211, %v210
  %v263 = vpack.c.b16 %v213, %v212
  %v264 = vpack.c.b16 %v215, %v214
  %v265 = vpack.c.b16 %v217, %v216
  %v266 = vpack.c.b16 %v219, %v218
  %v267 = vpack.c.b16 %v221, %v220
  %v268 = vpack.c.b16 %v223, %v222
  %v269 = vpack.c.b16 %v225, %v224
  %v270 = vpack.c.b16 %v227, %v226
  %v271 = vpack.c.b16 %v229, %v228
  %v272 = vpack.c.b16 %v231, %v230
  %v273 = vpack.c.b16 %v233, %v232
  %v274 = vpack.c.b16 %v235, %v234
  %v275 = vpack.c.b16 %v237, %v236
  %v276 = vpack.c.b16 %v239, %v238
  %v277 = vpack.c.b16 %v241, %v240
  %v278 = vpack.c.b16 %v243, %v242
  %v279 = vpack.c.b16 %v245, %v244
  %v280 = vpack.c.b16 %v247, %v246
  %v281 = vpack.c.b16 %v249, %v248
  %314 = vmatpush.bf16.msra.mxu0 %v257
  %315 = vmatpush.bf16.msra.mxu0 %v256
  %316 = vmatpush.bf16.msra.mxu0 %v255
  %317 = vmatpush.bf16.msra.mxu0 %v254
  %318 = vmatpush.bf16.msra.mxu0 %v253
  %319 = vmatpush.bf16.msra.mxu0 %v252
  %320 = vmatpush.bf16.msra.mxu0 %v251
  %321 = vmatpush.bf16.msra.mxu0 %v250
  %322 = vmatmul.bf16.gmra.mxu0 %v114
  %v323 = vpop.f32.mrf.mxu0
  %v324 = vadd.f32 0.0, %v323
  %v325 = vpop.f32.mrf.mxu0
  %326 = vdwg.mxu0
  %327 = vmatpush.bf16.msra.mxu0 %v265
  %328 = vmatpush.bf16.msra.mxu0 %v264
  %329 = vmatpush.bf16.msra.mxu0 %v263
  %330 = vmatpush.bf16.msra.mxu0 %v262
  %331 = vmatpush.bf16.msra.mxu0 %v261
  %332 = vmatpush.bf16.msra.mxu0 %v260
  %333 = vmatpush.bf16.msra.mxu0 %v259
  %334 = vmatpush.bf16.msra.mxu0 %v258
  %335 = vmatmul.bf16.gmra.mxu0 %v115
  %v336 = vpop.f32.mrf.mxu0
  %v337 = vadd.f32 %v324, %v336
  %v338 = vpop.f32.mrf.mxu0
  %339 = vdwg.mxu0
  %340 = vmatpush.bf16.msra.mxu0 %v273
  %341 = vmatpush.bf16.msra.mxu0 %v272
  %342 = vmatpush.bf16.msra.mxu0 %v271
  %343 = vmatpush.bf16.msra.mxu0 %v270
  %344 = vmatpush.bf16.msra.mxu0 %v269
  %345 = vmatpush.bf16.msra.mxu0 %v268
  %346 = vmatpush.bf16.msra.mxu0 %v267
  %347 = vmatpush.bf16.msra.mxu0 %v266
  %348 = vmatmul.bf16.gmra.mxu0 %v116
  %v349 = vpop.f32.mrf.mxu0
  %v350 = vadd.f32 %v337, %v349
  %v351 = vpop.f32.mrf.mxu0
  %352 = vdwg.mxu0
  %353 = vmatpush.bf16.msra.mxu0 %v281
  %354 = vmatpush.bf16.msra.mxu0 %v280
  %355 = vmatpush.bf16.msra.mxu0 %v279
  %356 = vmatpush.bf16.msra.mxu0 %v278
  %357 = vmatpush.bf16.msra.mxu0 %v277
  %358 = vmatpush.bf16.msra.mxu0 %v276
  %359 = vmatpush.bf16.msra.mxu0 %v275
  %360 = vmatpush.bf16.msra.mxu0 %v274
  %361 = vmatmul.bf16.gmra.mxu0 %v117
  %v362 = vpop.f32.mrf.mxu0
  %v363 = vadd.f32 %v350, %v362
  %v364 = vpop.f32.mrf.mxu0
  %365 = vdwg.mxu0
  %v366 = vpack.c.bf16 %v363, %v363
  %vm367 = vcmask 519168
  %368 = vst.msk [vmem:[%s40] sm:$0xf] %vm367, %v366
  %s369 = sadd.s32 0, 0
  %p370 = scmp.lt.s32.totalorder %s369, 0
  %s371 = scalar_select %p370, %s369, 0
  %s372 = smul.addr %s371, 4
  %s373 = scalar_lea.vmem %s2, %s372
  // Predicated region
  $region10: #{unet_forward.11} parent=0 // pred_check
    _
  $region11: #{unet_forward.11} parent=0 // pred_check_branch
    %375 = sbr.rel (0) target = $region13
  $region12: #{unet_forward.11} parent=0 // pred_region
    %s376 = sadd.s32 0, 0
  $region13: #{unet_forward.11} parent=0 // pred_fallthru
    _
  // Predicated region
  $region14: #{unet_forward.11} parent=0 // pred_check
    _
  $region15: #{unet_forward.11} parent=0 // pred_check_branch
    %378 = sbr.rel (0) target = $region17
  $region16: #{unet_forward.11} parent=0 // pred_region
    %s379 = sadd.s32 0, 0
    %p380 = scmp.lt.s32.totalorder %s379, 0
    %s381 = scalar_select %p380, %s379, 0
    %s382 = smul.addr %s381, 4
    %s383 = scalar_lea.vmem %s2, %s382
  $region17: #{unet_forward.11} parent=0 // pred_fallthru
    _

// kernel: unet_forward.12
$region0: #{unet_forward.12}
  #allocation0 [shape = 'u32[]', space=smem, size = 0x4, offset = 0x4, fixed_abs, tag = 'smem constant byte address 0x4 - core index']
  #allocation1 [shape = 'u32[72,128]{1,0:T(1,128)}', space=vmem, size = 0x9000, scoped, tag = 'internal scratch']
  %s0 = inlined_call_operand.vmem [shape: bf16[8,576], index: 0, kind: input, shape index: {}]
  %s1 = inlined_call_operand.vmem [shape: bf16[576,128], index: 1, kind: input, shape index: {}]
  %s2 = inlined_call_operand.vmem [shape: bf16[8,128], index: 2, kind: output, shape index: {0}]
  %s3 = inlined_call_operand.vmem [shape: f32[1,1,128], index: 3, kind: output, shape index: {1}]
  %s4 = inlined_call_operand.vmem [shape: f32[1,1,128], index: 4, kind: output, shape index: {2}]
  %5 = xla_tuple %s2, %s3, %s4
  %s6 = sld [smem:[#allocation0]]
  $region38: #{unet_forward.12} parent=0
    _
  %s8 = ssub.s32 1, %s6
  %s9 = scalar_select 0, %s8, %s6
  // Predicated region
  $region2: #{unet_forward.12} parent=0 // pred_check
    _
  $region3: #{unet_forward.12} parent=0 // pred_check_branch
    %11 = sbr.rel (0) target = $region5
  $region4: #{unet_forward.12} parent=0 // pred_region
    %s12 = sadd.s32 0, 0
    %p13 = scmp.lt.s32.totalorder %s12, 0
    %s14 = scalar_select %p13, %s12, 0
    %s15 = smul.addr %s14, 5
    %s16 = smul.addr %s15, 4
    %s17 = scalar_lea.vmem %s0, %s16
    %s18 = sadd.s32 0, 0
  $region5: #{unet_forward.12} parent=0 // pred_fallthru
    _
  // Predicated region
  $region6: #{unet_forward.12} parent=0 // pred_check
    _
  $region7: #{unet_forward.12} parent=0 // pred_check_branch
    %20 = sbr.rel (0) target = $region9
  $region8: #{unet_forward.12} parent=0 // pred_region
    _
  $region9: #{unet_forward.12} parent=0 // pred_fallthru
    _
  %s21 = sadd.s32 0, 0
  %p22 = scmp.lt.s32.totalorder %s21, 0
  %s23 = scalar_select %p22, %s21, 0
  %s24 = smul.addr %s23, 5
  %s25 = smul.addr %s24, 4
  %s26 = scalar_lea.vmem %s0, %s25
  %s27 = sadd.s32 0, 0
  %p28 = scmp.lt.s32.totalorder %s27, 0
  %s29 = scalar_select %p28, %s27, 0
  %s30 = smul.addr %s29, 4
  %s31 = scalar_lea.vmem %s2, %s30
  %s32 = sadd.s32 0, 0
  %p33 = scmp.lt.s32.totalorder %s32, 0
  %s34 = scalar_select %p33, %s32, 0
  %s35 = smul.addr %s34, 5
  %s36 = smul.addr %s35, 4
  %s37 = scalar_lea.vmem %s0, %s36
  %s38 = sadd.s32 0, 0
  %s39 = sadd.s32 0, 0
  %p40 = scmp.lt.s32.totalorder %s39, 0
  %s41 = scalar_select %p40, %s39, 0
  %s42 = smul.addr %s41, 4
  %s43 = scalar_lea.vmem %s2, %s42
  %s44 = sadd.s32 0, 0
  %p46 = scmp.eq.s32.totalorder 0, 0
  // Predicated region
  $region10: #{unet_forward.12} parent=0 // pred_check
    %p47 = pneg %p46
  $region11: #{unet_forward.12} parent=0 // pred_check_branch
    %49 = sbr.rel (%p47) target = $region13
  $region12: #{unet_forward.12} parent=0 // pred_region
    %50 = vst [vmem:[%s3] sm:$0x1] 0.0
    %51 = vst [vmem:[%s4] sm:$0x1] 0.0
  $region13: #{unet_forward.12} parent=0 // pred_fallthru
    _
  %v52 = vld [vmem:[%s37] sm:$0xff]
  %v53 = vld [vmem:[%s37 + $0x8] sm:$0xff]
  %v54 = vld [vmem:[%s37 + $0x10] sm:$0xf]
  %v55 = vld [vmem:[%s1] sm:$0xf]
  %v56 = vld [vmem:[%s1 + $0x4] sm:$0xf]
  %v57 = vld [vmem:[%s1 + $0x8] sm:$0xf]
  %v58 = vld [vmem:[%s1 + $0xc] sm:$0xf]
  %v59 = vld [vmem:[%s1 + $0x10] sm:$0xf]
  %v60 = vld [vmem:[%s1 + $0x14] sm:$0xf]
  %v61 = vld [vmem:[%s1 + $0x18] sm:$0xf]
  %v62 = vld [vmem:[%s1 + $0x1c] sm:$0xf]
  %v63 = vld [vmem:[%s1 + $0x20] sm:$0xf]
  %v64 = vld [vmem:[%s1 + $0x24] sm:$0xf]
  %v65 = vld [vmem:[%s1 + $0x28] sm:$0xf]
  %v66 = vld [vmem:[%s1 + $0x2c] sm:$0xf]
  %v67 = vld [vmem:[%s1 + $0x30] sm:$0xf]
  %v68 = vld [vmem:[%s1 + $0x34] sm:$0xf]
  %v69 = vld [vmem:[%s1 + $0x38] sm:$0xf]
  %v70 = vld [vmem:[%s1 + $0x3c] sm:$0xf]
  %v71 = vld [vmem:[%s1 + $0x40] sm:$0xf]
  %v72 = vld [vmem:[%s1 + $0x44] sm:$0xf]
  %v73 = vld [vmem:[%s1 + $0x48] sm:$0xf]
  %v74 = vld [vmem:[%s1 + $0x4c] sm:$0xf]
  %v75 = vld [vmem:[%s1 + $0x50] sm:$0xf]
  %v76 = vld [vmem:[%s1 + $0x54] sm:$0xf]
  %v77 = vld [vmem:[%s1 + $0x58] sm:$0xf]
  %v78 = vld [vmem:[%s1 + $0x5c] sm:$0xf]
  %v79 = vld [vmem:[%s1 + $0x60] sm:$0xf]
  %v80 = vld [vmem:[%s1 + $0x64] sm:$0xf]
  %v81 = vld [vmem:[%s1 + $0x68] sm:$0xf]
  %v82 = vld [vmem:[%s1 + $0x6c] sm:$0xf]
  %v83 = vld [vmem:[%s1 + $0x70] sm:$0xf]
  %v84 = vld [vmem:[%s1 + $0x74] sm:$0xf]
  %v85 = vld [vmem:[%s1 + $0x78] sm:$0xf]
  %v86 = vld [vmem:[%s1 + $0x7c] sm:$0xf]
  %v87 = vld [vmem:[%s1 + $0x80] sm:$0xf]
  %v88 = vld [vmem:[%s1 + $0x84] sm:$0xf]
  %v89 = vld [vmem:[%s1 + $0x88] sm:$0xf]
  %v90 = vld [vmem:[%s1 + $0x8c] sm:$0xf]
  %v91 = vld [vmem:[%s1 + $0x90] sm:$0xf]
  %v92 = vld [vmem:[%s1 + $0x94] sm:$0xf]
  %v93 = vld [vmem:[%s1 + $0x98] sm:$0xf]
  %v94 = vld [vmem:[%s1 + $0x9c] sm:$0xf]
  %v95 = vld [vmem:[%s1 + $0xa0] sm:$0xf]
  %v96 = vld [vmem:[%s1 + $0xa4] sm:$0xf]
  %v97 = vld [vmem:[%s1 + $0xa8] sm:$0xf]
  %v98 = vld [vmem:[%s1 + $0xac] sm:$0xf]
  %v99 = vld [vmem:[%s1 + $0xb0] sm:$0xf]
  %v100 = vld [vmem:[%s1 + $0xb4] sm:$0xf]
  %v101 = vld [vmem:[%s1 + $0xb8] sm:$0xf]
  %v102 = vld [vmem:[%s1 + $0xbc] sm:$0xf]
  %v103 = vld [vmem:[%s1 + $0xc0] sm:$0xf]
  %v104 = vld [vmem:[%s1 + $0xc4] sm:$0xf]
  %v105 = vld [vmem:[%s1 + $0xc8] sm:$0xf]
  %v106 = vld [vmem:[%s1 + $0xcc] sm:$0xf]
  %v107 = vld [vmem:[%s1 + $0xd0] sm:$0xf]
  %v108 = vld [vmem:[%s1 + $0xd4] sm:$0xf]
  %v109 = vld [vmem:[%s1 + $0xd8] sm:$0xf]
  %v110 = vld [vmem:[%s1 + $0xdc] sm:$0xf]
  %v111 = vld [vmem:[%s1 + $0xe0] sm:$0xf]
  %v112 = vld [vmem:[%s1 + $0xe4] sm:$0xf]
  %v113 = vld [vmem:[%s1 + $0xe8] sm:$0xf]
  %v114 = vld [vmem:[%s1 + $0xec] sm:$0xf]
  %v115 = vld [vmem:[%s1 + $0xf0] sm:$0xf]
  %v116 = vld [vmem:[%s1 + $0xf4] sm:$0xf]
  %v117 = vld [vmem:[%s1 + $0xf8] sm:$0xf]
  %v118 = vld [vmem:[%s1 + $0xfc] sm:$0xf]
  %v119 = vld [vmem:[%s1 + $0x100] sm:$0xf]
  %v120 = vld [vmem:[%s1 + $0x104] sm:$0xf]
  %v121 = vld [vmem:[%s1 + $0x108] sm:$0xf]
  %v122 = vld [vmem:[%s1 + $0x10c] sm:$0xf]
  %v123 = vld [vmem:[%s1 + $0x110] sm:$0xf]
  %v124 = vld [vmem:[%s1 + $0x114] sm:$0xf]
  %v125 = vld [vmem:[%s1 + $0x118] sm:$0xf]
  %v126 = vld [vmem:[%s1 + $0x11c] sm:$0xf]
  %v130 = vunpack.c.l.b16 %v52
  %v131 = vunpack.c.h.b16 %v52
  %v132 = vunpack.c.l.b16 %v53
  %v133 = vunpack.c.h.b16 %v53
  %v134 = vunpack.c.l.b16 %v54
  %v135 = vpack.c.b16 %v130, %v130
  %v136 = vpack.c.b16 %v131, %v131
  %v137 = vpack.c.b16 %v132, %v132
  %v138 = vpack.c.b16 %v133, %v133
  %v139 = vpack.c.b16 %v134, %v134
  %v216 = vunpack.c.l.b16 %v55
  %v217 = vunpack.c.l.b16 %v56
  %v218 = vunpack.c.l.b16 %v57
  %v219 = vunpack.c.l.b16 %v58
  %v220 = vunpack.c.l.b16 %v59
  %v221 = vunpack.c.l.b16 %v60
  %v222 = vunpack.c.l.b16 %v61
  %v223 = vunpack.c.l.b16 %v62
  %v224 = vunpack.c.l.b16 %v63
  %v225 = vunpack.c.l.b16 %v64
  %v226 = vunpack.c.l.b16 %v65
  %v227 = vunpack.c.l.b16 %v66
  %v228 = vunpack.c.l.b16 %v67
  %v229 = vunpack.c.l.b16 %v68
  %v230 = vunpack.c.l.b16 %v69
  %v231 = vunpack.c.l.b16 %v70
  %v232 = vunpack.c.l.b16 %v71
  %v233 = vunpack.c.l.b16 %v72
  %v234 = vunpack.c.l.b16 %v73
  %v235 = vunpack.c.l.b16 %v74
  %v236 = vunpack.c.l.b16 %v75
  %v237 = vunpack.c.l.b16 %v76
  %v238 = vunpack.c.l.b16 %v77
  %v239 = vunpack.c.l.b16 %v78
  %v240 = vunpack.c.l.b16 %v79
  %v241 = vunpack.c.l.b16 %v80
  %v242 = vunpack.c.l.b16 %v81
  %v243 = vunpack.c.l.b16 %v82
  %v244 = vunpack.c.l.b16 %v83
  %v245 = vunpack.c.l.b16 %v84
  %v246 = vunpack.c.l.b16 %v85
  %v247 = vunpack.c.l.b16 %v86
  %v248 = vunpack.c.l.b16 %v87
  %v249 = vunpack.c.l.b16 %v88
  %v250 = vunpack.c.l.b16 %v89
  %v251 = vunpack.c.l.b16 %v90
  %v252 = vunpack.c.l.b16 %v91
  %v253 = vunpack.c.l.b16 %v92
  %v254 = vunpack.c.l.b16 %v93
  %v255 = vunpack.c.l.b16 %v94
  %v256 = vunpack.c.l.b16 %v95
  %v257 = vunpack.c.l.b16 %v96
  %v258 = vunpack.c.l.b16 %v97
  %v259 = vunpack.c.l.b16 %v98
  %v260 = vunpack.c.l.b16 %v99
  %v261 = vunpack.c.l.b16 %v100
  %v262 = vunpack.c.l.b16 %v101
  %v263 = vunpack.c.l.b16 %v102
  %v264 = vunpack.c.l.b16 %v103
  %v265 = vunpack.c.l.b16 %v104
  %v266 = vunpack.c.l.b16 %v105
  %v267 = vunpack.c.l.b16 %v106
  %v268 = vunpack.c.l.b16 %v107
  %v269 = vunpack.c.l.b16 %v108
  %v270 = vunpack.c.l.b16 %v109
  %v271 = vunpack.c.l.b16 %v110
  %v272 = vunpack.c.l.b16 %v111
  %v273 = vunpack.c.l.b16 %v112
  %v274 = vunpack.c.l.b16 %v113
  %v275 = vunpack.c.l.b16 %v114
  %v276 = vunpack.c.l.b16 %v115
  %v277 = vunpack.c.l.b16 %v116
  %v278 = vunpack.c.l.b16 %v117
  %v279 = vunpack.c.l.b16 %v118
  %v280 = vunpack.c.l.b16 %v119
  %v281 = vunpack.c.l.b16 %v120
  %v282 = vunpack.c.l.b16 %v121
  %v283 = vunpack.c.l.b16 %v122
  %v284 = vunpack.c.l.b16 %v123
  %v285 = vunpack.c.l.b16 %v124
  %v286 = vunpack.c.l.b16 %v125
  %v287 = vunpack.c.l.b16 %v126
  %v288 = vpack.c.b16 %v217, %v216
  %v289 = vpack.c.b16 %v219, %v218
  %v290 = vpack.c.b16 %v221, %v220
  %v291 = vpack.c.b16 %v223, %v222
  %v292 = vpack.c.b16 %v225, %v224
  %v293 = vpack.c.b16 %v227, %v226
  %v294 = vpack.c.b16 %v229, %v228
  %v295 = vpack.c.b16 %v231, %v230
  %v296 = vpack.c.b16 %v233, %v232
  %v297 = vpack.c.b16 %v235, %v234
  %v298 = vpack.c.b16 %v237, %v236
  %v299 = vpack.c.b16 %v239, %v238
  %v300 = vpack.c.b16 %v241, %v240
  %v301 = vpack.c.b16 %v243, %v242
  %v302 = vpack.c.b16 %v245, %v244
  %v303 = vpack.c.b16 %v247, %v246
  %v304 = vpack.c.b16 %v249, %v248
  %v305 = vpack.c.b16 %v251, %v250
  %v306 = vpack.c.b16 %v253, %v252
  %v307 = vpack.c.b16 %v255, %v254
  %v308 = vpack.c.b16 %v257, %v256
  %v309 = vpack.c.b16 %v259, %v258
  %v310 = vpack.c.b16 %v261, %v260
  %v311 = vpack.c.b16 %v263, %v262
  %v312 = vpack.c.b16 %v265, %v264
  %v313 = vpack.c.b16 %v267, %v266
  %v314 = vpack.c.b16 %v269, %v268
  %v315 = vpack.c.b16 %v271, %v270
  %v316 = vpack.c.b16 %v273, %v272
  %v317 = vpack.c.b16 %v275, %v274
  %v318 = vpack.c.b16 %v277, %v276
  %v319 = vpack.c.b16 %v279, %v278
  %v320 = vpack.c.b16 %v281, %v280
  %v321 = vpack.c.b16 %v283, %v282
  %v322 = vpack.c.b16 %v285, %v284
  %v323 = vpack.c.b16 %v287, %v286
  %vm360 = vcmask 523264
  %v362 = vsel %vm360, %v139, 0
  %364 = vmatpush.bf16.msra.mxu0 %v295
  %365 = vmatpush.bf16.msra.mxu0 %v294
  %366 = vmatpush.bf16.msra.mxu0 %v293
  %367 = vmatpush.bf16.msra.mxu0 %v292
  %368 = vmatpush.bf16.msra.mxu0 %v291
  %369 = vmatpush.bf16.msra.mxu0 %v290
  %370 = vmatpush.bf16.msra.mxu0 %v289
  %371 = vmatpush.bf16.msra.mxu0 %v288
  %372 = vmatmul.bf16.gmra.mxu0 %v135
  %v373 = vpop.f32.mrf.mxu0
  %v374 = vadd.f32 0.0, %v373
  %v375 = vpop.f32.mrf.mxu0
  %376 = vdwg.mxu0
  %377 = vmatpush.bf16.msra.mxu0 %v303
  %378 = vmatpush.bf16.msra.mxu0 %v302
  %379 = vmatpush.bf16.msra.mxu0 %v301
  %380 = vmatpush.bf16.msra.mxu0 %v300
  %381 = vmatpush.bf16.msra.mxu0 %v299
  %382 = vmatpush.bf16.msra.mxu0 %v298
  %383 = vmatpush.bf16.msra.mxu0 %v297
  %384 = vmatpush.bf16.msra.mxu0 %v296
  %385 = vmatmul.bf16.gmra.mxu0 %v136
  %v386 = vpop.f32.mrf.mxu0
  %v387 = vadd.f32 %v374, %v386
  %v388 = vpop.f32.mrf.mxu0
  %389 = vdwg.mxu0
  %390 = vmatpush.bf16.msra.mxu0 %v311
  %391 = vmatpush.bf16.msra.mxu0 %v310
  %392 = vmatpush.bf16.msra.mxu0 %v309
  %393 = vmatpush.bf16.msra.mxu0 %v308
  %394 = vmatpush.bf16.msra.mxu0 %v307
  %395 = vmatpush.bf16.msra.mxu0 %v306
  %396 = vmatpush.bf16.msra.mxu0 %v305
  %397 = vmatpush.bf16.msra.mxu0 %v304
  %398 = vmatmul.bf16.gmra.mxu0 %v137
  %v399 = vpop.f32.mrf.mxu0
  %v400 = vadd.f32 %v387, %v399
  %v401 = vpop.f32.mrf.mxu0
  %402 = vdwg.mxu0
  %403 = vmatpush.bf16.msra.mxu0 %v319
  %404 = vmatpush.bf16.msra.mxu0 %v318
  %405 = vmatpush.bf16.msra.mxu0 %v317
  %406 = vmatpush.bf16.msra.mxu0 %v316
  %407 = vmatpush.bf16.msra.mxu0 %v315
  %408 = vmatpush.bf16.msra.mxu0 %v314
  %409 = vmatpush.bf16.msra.mxu0 %v313
  %410 = vmatpush.bf16.msra.mxu0 %v312
  %411 = vmatmul.bf16.gmra.mxu0 %v138
  %v412 = vpop.f32.mrf.mxu0
  %v413 = vadd.f32 %v400, %v412
  %v414 = vpop.f32.mrf.mxu0
  %415 = vdwg.mxu0
  %416 = vmatpush.bf16.msra.mxu0 0
  %417 = vmatpush.bf16.msra.mxu0 0
  %418 = vmatpush.bf16.msra.mxu0 0
  %419 = vmatpush.bf16.msra.mxu0 0
  %420 = vmatpush.bf16.msra.mxu0 %v323
  %421 = vmatpush.bf16.msra.mxu0 %v322
  %422 = vmatpush.bf16.msra.mxu0 %v321
  %423 = vmatpush.bf16.msra.mxu0 %v320
  %424 = vmatmul.bf16.gmra.mxu0 %v362
  %v425 = vpop.f32.mrf.mxu0
  %v426 = vadd.f32 %v413, %v425
  %v427 = vpop.f32.mrf.mxu0
  %428 = vdwg.mxu0
  %v429 = vld [vmem:[%s3] sm:$0x1]
  %v430 = vrot.slane %v426, 4
  %v431 = vadd.f32 %v426, %v430
  %v432 = vrot.slane %v431, 2
  %v433 = vadd.f32 %v431, %v432
  %v434 = vrot.slane %v433, 1
  %v435 = vadd.f32 %v433, %v434
  %v436 = vadd.f32 %v429, %v435
  %437 = vst [vmem:[%s3] sm:$0x1] %v436
  %v438 = vld [vmem:[%s4] sm:$0x1]
  %v439 = vmul.f32 %v426, %v426
  %v440 = vrot.slane %v439, 4
  %v441 = vadd.f32 %v439, %v440
  %v442 = vrot.slane %v441, 2
  %v443 = vadd.f32 %v441, %v442
  %v444 = vrot.slane %v443, 1
  %v445 = vadd.f32 %v443, %v444
  %v446 = vadd.f32 %v438, %v445
  %447 = vst [vmem:[%s4] sm:$0x1] %v446
  %v448 = vpack.c.bf16 %v426, %v426
  %449 = vst [vmem:[%s43] sm:$0xf] %v448
  %s450 = sadd.s32 0, 0
  %p451 = scmp.lt.s32.totalorder %s450, 0
  %s452 = scalar_select %p451, %s450, 0
  %s453 = smul.addr %s452, 4
  %s454 = scalar_lea.vmem %s2, %s453
  // Predicated region
  $region14: #{unet_forward.12} parent=0 // pred_check
    _
  $region15: #{unet_forward.12} parent=0 // pred_check_branch
    %456 = sbr.rel (0) target = $region17
  $region16: #{unet_forward.12} parent=0 // pred_region
    %s457 = sadd.s32 0, 0
  $region17: #{unet_forward.12} parent=0 // pred_fallthru
    _
  // Predicated region
  $region18: #{unet_forward.12} parent=0 // pred_check
    _
  $region19: #{unet_forward.12} parent=0 // pred_check_branch
    %459 = sbr.rel (0) target = $region21
  $region20: #{unet_forward.12} parent=0 // pred_region
    _
  $region21: #{unet_forward.12} parent=0 // pred_fallthru
    _
  // Predicated region
  $region22: #{unet_forward.12} parent=0 // pred_check
    _
  $region23: #{unet_forward.12} parent=0 // pred_check_branch
    %461 = sbr.rel (0) target = $region25
  $region24: #{unet_forward.12} parent=0 // pred_region
    _
  $region25: #{unet_forward.12} parent=0 // pred_fallthru
    _
  // Predicated region
  $region26: #{unet_forward.12} parent=0 // pred_check
    _
  $region27: #{unet_forward.12} parent=0 // pred_check_branch
    %463 = sbr.rel (0) target = $region29
  $region28: #{unet_forward.12} parent=0 // pred_region
    %s464 = sadd.s32 0, 0
    %p465 = scmp.lt.s32.totalorder %s464, 0
    %s466 = scalar_select %p465, %s464, 0
    %s467 = smul.addr %s466, 4
    %s468 = scalar_lea.vmem %s2, %s467
  $region29: #{unet_forward.12} parent=0 // pred_fallthru
    _
  // Predicated region
  $region30: #{unet_forward.12} parent=0 // pred_check
    _
  $region31: #{unet_forward.12} parent=0 // pred_check_branch
    %470 = sbr.rel (0) target = $region33
  $region32: #{unet_forward.12} parent=0 // pred_region
    _
  $region33: #{unet_forward.12} parent=0 // pred_fallthru
    _
  // Predicated region
  $region34: #{unet_forward.12} parent=0 // pred_check
    _
  $region35: #{unet_forward.12} parent=0 // pred_check_branch
    %472 = sbr.rel (0) target = $region37
  $region36: #{unet_forward.12} parent=0 // pred_region
    _
  $region37: #{unet_forward.12} parent=0 // pred_fallthru
    _

// kernel: unet_forward.13
$region0: #{unet_forward.13}
  #allocation0 [shape = 'u32[]', space=smem, size = 0x4, offset = 0x4, fixed_abs, tag = 'smem constant byte address 0x4 - core index']
  #allocation1 [shape = 'u32[72,128]{1,0:T(1,128)}', space=vmem, size = 0x9000, scoped, tag = 'internal scratch']
  %s0 = inlined_call_operand.vmem [shape: bf16[8,576], index: 0, kind: input, shape index: {}]
  %s1 = inlined_call_operand.vmem [shape: bf16[576,64], index: 1, kind: input, shape index: {}]
  %s2 = inlined_call_operand.vmem [shape: bf16[8,64], index: 2, kind: output, shape index: {0}]
  %s3 = inlined_call_operand.vmem [shape: f32[1,1,64], index: 3, kind: output, shape index: {1}]
  %s4 = inlined_call_operand.vmem [shape: f32[1,1,64], index: 4, kind: output, shape index: {2}]
  %5 = xla_tuple %s2, %s3, %s4
  %s6 = sld [smem:[#allocation0]]
  $region38: #{unet_forward.13} parent=0
    _
  %s8 = ssub.s32 1, %s6
  %s9 = scalar_select 0, %s8, %s6
  // Predicated region
  $region2: #{unet_forward.13} parent=0 // pred_check
    _
  $region3: #{unet_forward.13} parent=0 // pred_check_branch
    %11 = sbr.rel (0) target = $region5
  $region4: #{unet_forward.13} parent=0 // pred_region
    %s12 = sadd.s32 0, 0
    %p13 = scmp.lt.s32.totalorder %s12, 0
    %s14 = scalar_select %p13, %s12, 0
    %s15 = smul.addr %s14, 5
    %s16 = smul.addr %s15, 4
    %s17 = scalar_lea.vmem %s0, %s16
    %s18 = sadd.s32 0, 0
  $region5: #{unet_forward.13} parent=0 // pred_fallthru
    _
  // Predicated region
  $region6: #{unet_forward.13} parent=0 // pred_check
    _
  $region7: #{unet_forward.13} parent=0 // pred_check_branch
    %20 = sbr.rel (0) target = $region9
  $region8: #{unet_forward.13} parent=0 // pred_region
    _
  $region9: #{unet_forward.13} parent=0 // pred_fallthru
    _
  %s21 = sadd.s32 0, 0
  %p22 = scmp.lt.s32.totalorder %s21, 0
  %s23 = scalar_select %p22, %s21, 0
  %s24 = smul.addr %s23, 5
  %s25 = smul.addr %s24, 4
  %s26 = scalar_lea.vmem %s0, %s25
  %s27 = sadd.s32 0, 0
  %p28 = scmp.lt.s32.totalorder %s27, 0
  %s29 = scalar_select %p28, %s27, 0
  %s30 = smul.addr %s29, 4
  %s31 = scalar_lea.vmem %s2, %s30
  %s32 = sadd.s32 0, 0
  %p33 = scmp.lt.s32.totalorder %s32, 0
  %s34 = scalar_select %p33, %s32, 0
  %s35 = smul.addr %s34, 5
  %s36 = smul.addr %s35, 4
  %s37 = scalar_lea.vmem %s0, %s36
  %s38 = sadd.s32 0, 0
  %s39 = sadd.s32 0, 0
  %p40 = scmp.lt.s32.totalorder %s39, 0
  %s41 = scalar_select %p40, %s39, 0
  %s42 = smul.addr %s41, 4
  %s43 = scalar_lea.vmem %s2, %s42
  %s44 = sadd.s32 0, 0
  %p46 = scmp.eq.s32.totalorder 0, 0
  // Predicated region
  $region10: #{unet_forward.13} parent=0 // pred_check
    %p47 = pneg %p46
  $region11: #{unet_forward.13} parent=0 // pred_check_branch
    %49 = sbr.rel (%p47) target = $region13
  $region12: #{unet_forward.13} parent=0 // pred_region
    %vm50 = vcmask 516096
    %51 = vst.msk [vmem:[%s3] sm:$0x1] %vm50, 0.0
    %52 = vst.msk [vmem:[%s4] sm:$0x1] %vm50, 0.0
  $region13: #{unet_forward.13} parent=0 // pred_fallthru
    _
  %v53 = vld [vmem:[%s37] sm:$0xff]
  %v54 = vld [vmem:[%s37 + $0x8] sm:$0xff]
  %v55 = vld [vmem:[%s37 + $0x10] sm:$0xf]
  %v56 = vld [vmem:[%s1] sm:$0xf]
  %v57 = vld [vmem:[%s1 + $0x4] sm:$0xf]
  %v58 = vld [vmem:[%s1 + $0x8] sm:$0xf]
  %v59 = vld [vmem:[%s1 + $0xc] sm:$0xf]
  %v60 = vld [vmem:[%s1 + $0x10] sm:$0xf]
  %v61 = vld [vmem:[%s1 + $0x14] sm:$0xf]
  %v62 = vld [vmem:[%s1 + $0x18] sm:$0xf]
  %v63 = vld [vmem:[%s1 + $0x1c] sm:$0xf]
  %v64 = vld [vmem:[%s1 + $0x20] sm:$0xf]
  %v65 = vld [vmem:[%s1 + $0x24] sm:$0xf]
  %v66 = vld [vmem:[%s1 + $0x28] sm:$0xf]
  %v67 = vld [vmem:[%s1 + $0x2c] sm:$0xf]
  %v68 = vld [vmem:[%s1 + $0x30] sm:$0xf]
  %v69 = vld [vmem:[%s1 + $0x34] sm:$0xf]
  %v70 = vld [vmem:[%s1 + $0x38] sm:$0xf]
  %v71 = vld [vmem:[%s1 + $0x3c] sm:$0xf]
  %v72 = vld [vmem:[%s1 + $0x40] sm:$0xf]
  %v73 = vld [vmem:[%s1 + $0x44] sm:$0xf]
  %v74 = vld [vmem:[%s1 + $0x48] sm:$0xf]
  %v75 = vld [vmem:[%s1 + $0x4c] sm:$0xf]
  %v76 = vld [vmem:[%s1 + $0x50] sm:$0xf]
  %v77 = vld [vmem:[%s1 + $0x54] sm:$0xf]
  %v78 = vld [vmem:[%s1 + $0x58] sm:$0xf]
  %v79 = vld [vmem:[%s1 + $0x5c] sm:$0xf]
  %v80 = vld [vmem:[%s1 + $0x60] sm:$0xf]
  %v81 = vld [vmem:[%s1 + $0x64] sm:$0xf]
  %v82 = vld [vmem:[%s1 + $0x68] sm:$0xf]
  %v83 = vld [vmem:[%s1 + $0x6c] sm:$0xf]
  %v84 = vld [vmem:[%s1 + $0x70] sm:$0xf]
  %v85 = vld [vmem:[%s1 + $0x74] sm:$0xf]
  %v86 = vld [vmem:[%s1 + $0x78] sm:$0xf]
  %v87 = vld [vmem:[%s1 + $0x7c] sm:$0xf]
  %v88 = vld [vmem:[%s1 + $0x80] sm:$0xf]
  %v89 = vld [vmem:[%s1 + $0x84] sm:$0xf]
  %v90 = vld [vmem:[%s1 + $0x88] sm:$0xf]
  %v91 = vld [vmem:[%s1 + $0x8c] sm:$0xf]
  %v92 = vld [vmem:[%s1 + $0x90] sm:$0xf]
  %v93 = vld [vmem:[%s1 + $0x94] sm:$0xf]
  %v94 = vld [vmem:[%s1 + $0x98] sm:$0xf]
  %v95 = vld [vmem:[%s1 + $0x9c] sm:$0xf]
  %v96 = vld [vmem:[%s1 + $0xa0] sm:$0xf]
  %v97 = vld [vmem:[%s1 + $0xa4] sm:$0xf]
  %v98 = vld [vmem:[%s1 + $0xa8] sm:$0xf]
  %v99 = vld [vmem:[%s1 + $0xac] sm:$0xf]
  %v100 = vld [vmem:[%s1 + $0xb0] sm:$0xf]
  %v101 = vld [vmem:[%s1 + $0xb4] sm:$0xf]
  %v102 = vld [vmem:[%s1 + $0xb8] sm:$0xf]
  %v103 = vld [vmem:[%s1 + $0xbc] sm:$0xf]
  %v104 = vld [vmem:[%s1 + $0xc0] sm:$0xf]
  %v105 = vld [vmem:[%s1 + $0xc4] sm:$0xf]
  %v106 = vld [vmem:[%s1 + $0xc8] sm:$0xf]
  %v107 = vld [vmem:[%s1 + $0xcc] sm:$0xf]
  %v108 = vld [vmem:[%s1 + $0xd0] sm:$0xf]
  %v109 = vld [vmem:[%s1 + $0xd4] sm:$0xf]
  %v110 = vld [vmem:[%s1 + $0xd8] sm:$0xf]
  %v111 = vld [vmem:[%s1 + $0xdc] sm:$0xf]
  %v112 = vld [vmem:[%s1 + $0xe0] sm:$0xf]
  %v113 = vld [vmem:[%s1 + $0xe4] sm:$0xf]
  %v114 = vld [vmem:[%s1 + $0xe8] sm:$0xf]
  %v115 = vld [vmem:[%s1 + $0xec] sm:$0xf]
  %v116 = vld [vmem:[%s1 + $0xf0] sm:$0xf]
  %v117 = vld [vmem:[%s1 + $0xf4] sm:$0xf]
  %v118 = vld [vmem:[%s1 + $0xf8] sm:$0xf]
  %v119 = vld [vmem:[%s1 + $0xfc] sm:$0xf]
  %v120 = vld [vmem:[%s1 + $0x100] sm:$0xf]
  %v121 = vld [vmem:[%s1 + $0x104] sm:$0xf]
  %v122 = vld [vmem:[%s1 + $0x108] sm:$0xf]
  %v123 = vld [vmem:[%s1 + $0x10c] sm:$0xf]
  %v124 = vld [vmem:[%s1 + $0x110] sm:$0xf]
  %v125 = vld [vmem:[%s1 + $0x114] sm:$0xf]
  %v126 = vld [vmem:[%s1 + $0x118] sm:$0xf]
  %v127 = vld [vmem:[%s1 + $0x11c] sm:$0xf]
  %v131 = vunpack.c.l.b16 %v53
  %v132 = vunpack.c.h.b16 %v53
  %v133 = vunpack.c.l.b16 %v54
  %v134 = vunpack.c.h.b16 %v54
  %v135 = vunpack.c.l.b16 %v55
  %v136 = vpack.c.b16 %v131, %v131
  %v137 = vpack.c.b16 %v132, %v132
  %v138 = vpack.c.b16 %v133, %v133
  %v139 = vpack.c.b16 %v134, %v134
  %v140 = vpack.c.b16 %v135, %v135
  %v217 = vunpack.c.l.b16 %v56
  %v218 = vunpack.c.l.b16 %v57
  %v219 = vunpack.c.l.b16 %v58
  %v220 = vunpack.c.l.b16 %v59
  %v221 = vunpack.c.l.b16 %v60
  %v222 = vunpack.c.l.b16 %v61
  %v223 = vunpack.c.l.b16 %v62
  %v224 = vunpack.c.l.b16 %v63
  %v225 = vunpack.c.l.b16 %v64
  %v226 = vunpack.c.l.b16 %v65
  %v227 = vunpack.c.l.b16 %v66
  %v228 = vunpack.c.l.b16 %v67
  %v229 = vunpack.c.l.b16 %v68
  %v230 = vunpack.c.l.b16 %v69
  %v231 = vunpack.c.l.b16 %v70
  %v232 = vunpack.c.l.b16 %v71
  %v233 = vunpack.c.l.b16 %v72
  %v234 = vunpack.c.l.b16 %v73
  %v235 = vunpack.c.l.b16 %v74
  %v236 = vunpack.c.l.b16 %v75
  %v237 = vunpack.c.l.b16 %v76
  %v238 = vunpack.c.l.b16 %v77
  %v239 = vunpack.c.l.b16 %v78
  %v240 = vunpack.c.l.b16 %v79
  %v241 = vunpack.c.l.b16 %v80
  %v242 = vunpack.c.l.b16 %v81
  %v243 = vunpack.c.l.b16 %v82
  %v244 = vunpack.c.l.b16 %v83
  %v245 = vunpack.c.l.b16 %v84
  %v246 = vunpack.c.l.b16 %v85
  %v247 = vunpack.c.l.b16 %v86
  %v248 = vunpack.c.l.b16 %v87
  %v249 = vunpack.c.l.b16 %v88
  %v250 = vunpack.c.l.b16 %v89
  %v251 = vunpack.c.l.b16 %v90
  %v252 = vunpack.c.l.b16 %v91
  %v253 = vunpack.c.l.b16 %v92
  %v254 = vunpack.c.l.b16 %v93
  %v255 = vunpack.c.l.b16 %v94
  %v256 = vunpack.c.l.b16 %v95
  %v257 = vunpack.c.l.b16 %v96
  %v258 = vunpack.c.l.b16 %v97
  %v259 = vunpack.c.l.b16 %v98
  %v260 = vunpack.c.l.b16 %v99
  %v261 = vunpack.c.l.b16 %v100
  %v262 = vunpack.c.l.b16 %v101
  %v263 = vunpack.c.l.b16 %v102
  %v264 = vunpack.c.l.b16 %v103
  %v265 = vunpack.c.l.b16 %v104
  %v266 = vunpack.c.l.b16 %v105
  %v267 = vunpack.c.l.b16 %v106
  %v268 = vunpack.c.l.b16 %v107
  %v269 = vunpack.c.l.b16 %v108
  %v270 = vunpack.c.l.b16 %v109
  %v271 = vunpack.c.l.b16 %v110
  %v272 = vunpack.c.l.b16 %v111
  %v273 = vunpack.c.l.b16 %v112
  %v274 = vunpack.c.l.b16 %v113
  %v275 = vunpack.c.l.b16 %v114
  %v276 = vunpack.c.l.b16 %v115
  %v277 = vunpack.c.l.b16 %v116
  %v278 = vunpack.c.l.b16 %v117
  %v279 = vunpack.c.l.b16 %v118
  %v280 = vunpack.c.l.b16 %v119
  %v281 = vunpack.c.l.b16 %v120
  %v282 = vunpack.c.l.b16 %v121
  %v283 = vunpack.c.l.b16 %v122
  %v284 = vunpack.c.l.b16 %v123
  %v285 = vunpack.c.l.b16 %v124
  %v286 = vunpack.c.l.b16 %v125
  %v287 = vunpack.c.l.b16 %v126
  %v288 = vunpack.c.l.b16 %v127
  %v289 = vpack.c.b16 %v218, %v217
  %v290 = vpack.c.b16 %v220, %v219
  %v291 = vpack.c.b16 %v222, %v221
  %v292 = vpack.c.b16 %v224, %v223
  %v293 = vpack.c.b16 %v226, %v225
  %v294 = vpack.c.b16 %v228, %v227
  %v295 = vpack.c.b16 %v230, %v229
  %v296 = vpack.c.b16 %v232, %v231
  %v297 = vpack.c.b16 %v234, %v233
  %v298 = vpack.c.b16 %v236, %v235
  %v299 = vpack.c.b16 %v238, %v237
  %v300 = vpack.c.b16 %v240, %v239
  %v301 = vpack.c.b16 %v242, %v241
  %v302 = vpack.c.b16 %v244, %v243
  %v303 = vpack.c.b16 %v246, %v245
  %v304 = vpack.c.b16 %v248, %v247
  %v305 = vpack.c.b16 %v250, %v249
  %v306 = vpack.c.b16 %v252, %v251
  %v307 = vpack.c.b16 %v254, %v253
  %v308 = vpack.c.b16 %v256, %v255
  %v309 = vpack.c.b16 %v258, %v257
  %v310 = vpack.c.b16 %v260, %v259
  %v311 = vpack.c.b16 %v262, %v261
  %v312 = vpack.c.b16 %v264, %v263
  %v313 = vpack.c.b16 %v266, %v265
  %v314 = vpack.c.b16 %v268, %v267
  %v315 = vpack.c.b16 %v270, %v269
  %v316 = vpack.c.b16 %v272, %v271
  %v317 = vpack.c.b16 %v274, %v273
  %v318 = vpack.c.b16 %v276, %v275
  %v319 = vpack.c.b16 %v278, %v277
  %v320 = vpack.c.b16 %v280, %v279
  %v321 = vpack.c.b16 %v282, %v281
  %v322 = vpack.c.b16 %v284, %v283
  %v323 = vpack.c.b16 %v286, %v285
  %v324 = vpack.c.b16 %v288, %v287
  %vm361 = vcmask 523264
  %v363 = vsel %vm361, %v140, 0
  %365 = vmatpush.bf16.msra.mxu0 %v296
  %366 = vmatpush.bf16.msra.mxu0 %v295
  %367 = vmatpush.bf16.msra.mxu0 %v294
  %368 = vmatpush.bf16.msra.mxu0 %v293
  %369 = vmatpush.bf16.msra.mxu0 %v292
  %370 = vmatpush.bf16.msra.mxu0 %v291
  %371 = vmatpush.bf16.msra.mxu0 %v290
  %372 = vmatpush.bf16.msra.mxu0 %v289
  %373 = vmatmul.bf16.gmra.mxu0 %v136
  %v374 = vpop.f32.mrf.mxu0
  %v375 = vadd.f32 0.0, %v374
  %v376 = vpop.f32.mrf.mxu0
  %377 = vdwg.mxu0
  %378 = vmatpush.bf16.msra.mxu0 %v304
  %379 = vmatpush.bf16.msra.mxu0 %v303
  %380 = vmatpush.bf16.msra.mxu0 %v302
  %381 = vmatpush.bf16.msra.mxu0 %v301
  %382 = vmatpush.bf16.msra.mxu0 %v300
  %383 = vmatpush.bf16.msra.mxu0 %v299
  %384 = vmatpush.bf16.msra.mxu0 %v298
  %385 = vmatpush.bf16.msra.mxu0 %v297
  %386 = vmatmul.bf16.gmra.mxu0 %v137
  %v387 = vpop.f32.mrf.mxu0
  %v388 = vadd.f32 %v375, %v387
  %v389 = vpop.f32.mrf.mxu0
  %390 = vdwg.mxu0
  %391 = vmatpush.bf16.msra.mxu0 %v312
  %392 = vmatpush.bf16.msra.mxu0 %v311
  %393 = vmatpush.bf16.msra.mxu0 %v310
  %394 = vmatpush.bf16.msra.mxu0 %v309
  %395 = vmatpush.bf16.msra.mxu0 %v308
  %396 = vmatpush.bf16.msra.mxu0 %v307
  %397 = vmatpush.bf16.msra.mxu0 %v306
  %398 = vmatpush.bf16.msra.mxu0 %v305
  %399 = vmatmul.bf16.gmra.mxu0 %v138
  %v400 = vpop.f32.mrf.mxu0
  %v401 = vadd.f32 %v388, %v400
  %v402 = vpop.f32.mrf.mxu0
  %403 = vdwg.mxu0
  %404 = vmatpush.bf16.msra.mxu0 %v320
  %405 = vmatpush.bf16.msra.mxu0 %v319
  %406 = vmatpush.bf16.msra.mxu0 %v318
  %407 = vmatpush.bf16.msra.mxu0 %v317
  %408 = vmatpush.bf16.msra.mxu0 %v316
  %409 = vmatpush.bf16.msra.mxu0 %v315
  %410 = vmatpush.bf16.msra.mxu0 %v314
  %411 = vmatpush.bf16.msra.mxu0 %v313
  %412 = vmatmul.bf16.gmra.mxu0 %v139
  %v413 = vpop.f32.mrf.mxu0
  %v414 = vadd.f32 %v401, %v413
  %v415 = vpop.f32.mrf.mxu0
  %416 = vdwg.mxu0
  %417 = vmatpush.bf16.msra.mxu0 0
  %418 = vmatpush.bf16.msra.mxu0 0
  %419 = vmatpush.bf16.msra.mxu0 0
  %420 = vmatpush.bf16.msra.mxu0 0
  %421 = vmatpush.bf16.msra.mxu0 %v324
  %422 = vmatpush.bf16.msra.mxu0 %v323
  %423 = vmatpush.bf16.msra.mxu0 %v322
  %424 = vmatpush.bf16.msra.mxu0 %v321
  %425 = vmatmul.bf16.gmra.mxu0 %v363
  %v426 = vpop.f32.mrf.mxu0
  %v427 = vadd.f32 %v414, %v426
  %v428 = vpop.f32.mrf.mxu0
  %429 = vdwg.mxu0
  %v430 = vld [vmem:[%s3] sm:$0x1]
  %v431 = vsel %vm361, %v427, 0.0
  %v432 = vrot.slane %v431, 4
  %v433 = vadd.f32 %v431, %v432
  %v434 = vrot.slane %v433, 2
  %v435 = vadd.f32 %v433, %v434
  %v436 = vrot.slane %v435, 1
  %v437 = vadd.f32 %v435, %v436
  %v438 = vadd.f32 %v430, %v437
  %vm439 = vcmask 516096
  %440 = vst.msk [vmem:[%s3] sm:$0x1] %vm439, %v438
  %v441 = vld [vmem:[%s4] sm:$0x1]
  %v442 = vmul.f32 %v427, %v427
  %v443 = vsel %vm361, %v442, 0.0
  %v444 = vrot.slane %v443, 4
  %v445 = vadd.f32 %v443, %v444
  %v446 = vrot.slane %v445, 2
  %v447 = vadd.f32 %v445, %v446
  %v448 = vrot.slane %v447, 1
  %v449 = vadd.f32 %v447, %v448
  %v450 = vadd.f32 %v441, %v449
  %451 = vst.msk [vmem:[%s4] sm:$0x1] %vm439, %v450
  %v452 = vpack.c.bf16 %v427, %v427
  %vm453 = vcmask 519168
  %454 = vst.msk [vmem:[%s43] sm:$0xf] %vm453, %v452
  %s455 = sadd.s32 0, 0
  %p456 = scmp.lt.s32.totalorder %s455, 0
  %s457 = scalar_select %p456, %s455, 0
  %s458 = smul.addr %s457, 4
  %s459 = scalar_lea.vmem %s2, %s458
  // Predicated region
  $region14: #{unet_forward.13} parent=0 // pred_check
    _
  $region15: #{unet_forward.13} parent=0 // pred_check_branch
    %461 = sbr.rel (0) target = $region17
  $region16: #{unet_forward.13} parent=0 // pred_region
    %s462 = sadd.s32 0, 0
  $region17: #{unet_forward.13} parent=0 // pred_fallthru
    _
  // Predicated region
  $region18: #{unet_forward.13} parent=0 // pred_check
    _
  $region19: #{unet_forward.13} parent=0 // pred_check_branch
    %464 = sbr.rel (0) target = $region21
  $region20: #{unet_forward.13} parent=0 // pred_region
    _
  $region21: #{unet_forward.13} parent=0 // pred_fallthru
    _
  // Predicated region
  $region22: #{unet_forward.13} parent=0 // pred_check
    _
  $region23: #{unet_forward.13} parent=0 // pred_check_branch
    %466 = sbr.rel (0) target = $region25
  $region24: #{unet_forward.13} parent=0 // pred_region
    _
  $region25: #{unet_forward.13} parent=0 // pred_fallthru
    _
  // Predicated region
  $region26: #{unet_forward.13} parent=0 // pred_check
    _
  $region27: #{unet_forward.13} parent=0 // pred_check_branch
    %468 = sbr.rel (0) target = $region29
  $region28: #{unet_forward.13} parent=0 // pred_region
    %s469 = sadd.s32 0, 0
    %p470 = scmp.lt.s32.totalorder %s469, 0
    %s471 = scalar_select %p470, %s469, 0
    %s472 = smul.addr %s471, 4
    %s473 = scalar_lea.vmem %s2, %s472
  $region29: #{unet_forward.13} parent=0 // pred_fallthru
    _
  // Predicated region
  $region30: #{unet_forward.13} parent=0 // pred_check
    _
  $region31: #{unet_forward.13} parent=0 // pred_check_branch
    %475 = sbr.rel (0) target = $region33
  $region32: #{unet_forward.13} parent=0 // pred_region
    _
  $region33: #{unet_forward.13} parent=0 // pred_fallthru
    _
  // Predicated region
  $region34: #{unet_forward.13} parent=0 // pred_check
    _
  $region35: #{unet_forward.13} parent=0 // pred_check_branch
    %477 = sbr.rel (0) target = $region37
  $region36: #{unet_forward.13} parent=0 // pred_region
    _
  $region37: #{unet_forward.13} parent=0 // pred_fallthru
    _

// kernel: unet_forward.14
$region0: #{unet_forward.14}
  #allocation0 [shape = 'u32[]', space=smem, size = 0x4, offset = 0x4, fixed_abs, tag = 'smem constant byte address 0x4 - core index']
  #allocation1 [shape = 'u32[72,128]{1,0:T(1,128)}', space=vmem, size = 0x9000, scoped, tag = 'internal scratch']
  %s0 = inlined_call_operand.vmem [shape: bf16[32,288], index: 0, kind: input, shape index: {}]
  %s1 = inlined_call_operand.vmem [shape: bf16[288,32], index: 1, kind: input, shape index: {}]
  %s2 = inlined_call_operand.vmem [shape: bf16[32,32], index: 2, kind: output, shape index: {0}]
  %s3 = inlined_call_operand.vmem [shape: f32[2,1,32], index: 3, kind: output, shape index: {1}]
  %s4 = inlined_call_operand.vmem [shape: f32[2,1,32], index: 4, kind: output, shape index: {2}]
  %5 = xla_tuple %s2, %s3, %s4
  %s6 = sld [smem:[#allocation0]]
  $region61: #{unet_forward.14} parent=0
    _
  %s8 = ssub.s32 1, %s6
  %s9 = scalar_select 0, %s8, %s6
  loop: start=0, step=1, limit=4
  $region2: #{unet_forward.14} parent=0 // loop_pre_header
    _
  $region3: #{unet_forward.14} parent=0 // loop_header
    %s11 = sphi 0, %s15
    %p12 = scmp.ge.s32.totalorder %s11, 4
    %s18 = sphi 0, %s30
    %s19 = sphi 0, %s26
    %s20 = sphi 0, %s18
    %s21 = sphi 0, %s19
    %s22 = sphi 0, %s20
    %s23 = sphi 0, %s21
    %s35 = sphi 0, %s37
    %s38 = sphi 0, %s35
    %s39 = sphi 0, %s38
    %s55 = sphi 0, %s39
    %s59 = sphi 0, %s59
    %s61 = sphi 0, %s59
    %s62 = sphi 0, %s61
    %s76 = sphi 0, %s62
    %s84 = sphi 0, %s86
    %s87 = sphi 0, %s84
    %s88 = sphi 0, %s87
    %s104 = sphi 0, %s88
    %s110 = sphi 0, %s112
    %s113 = sphi 0, %s110
    %s114 = sphi 0, %s113
    %s130 = sphi 0, %s114
    %s136 = sphi 0, %s138
    %s139 = sphi 0, %s136
    %s140 = sphi 0, %s139
    %s156 = sphi 0, %s140
  $region4: #{unet_forward.14} parent=0 // loop_header_branch
    %14 = sbr.rel (%p12) target = $region8
  $region5: #{unet_forward.14} parent=0 // loop_body
    %s16 = ssub.s32 %s11, 1
    %s17 = ssub.s32 %s11, 2
    %s24 = sadd.s32 1, %s19
    %p25 = scmp.ge.s32.totalorder %s24, 1
    %s26 = scalar_select %p25, 0, %s24
    %s27 = sadd.s32 1, %s18
    %s28 = scalar_select %p25, %s27, %s18
    %p29 = scmp.ge.s32.totalorder %s28, 2
    %s30 = scalar_select %p29, 0, %s28
    %s31 = sadd.s32 %s18, %s19
    %s32 = sadd.s32 %s30, %s26
    %s33 = ssub.s32 %s31, %s32
    %p34 = scmp.eq.s32.totalorder %s33, 0
    %s36 = sadd.s32 %s35, 1
    %s37 = scalar_select %p34, %s35, %s36
    %p40 = pneg %p34
    %p41 = scmp.eq.s32.totalorder %s11, 1
    %p42 = por %p40, %p41
    %p43 = scmp.ne.s32.totalorder %s35, %s38
    %p44 = scmp.eq.s32.totalorder %s11, 0
    %p45 = por %p43, %p44
    %p46 = scmp.ne.s32.totalorder %s35, %s38
    %p47 = scmp.eq.s32.totalorder %s16, 1
    %p48 = por %p46, %p47
    %p49 = scmp.ne.s32.totalorder %s38, %s39
    %p50 = scmp.eq.s32.totalorder %s16, 0
    %p51 = por %p49, %p50
    %p52 = scmp.ne.s32.totalorder %s38, %s39
    %p53 = scmp.eq.s32.totalorder %s17, 1
    %p54 = por %p52, %p53
    %p56 = scmp.ne.s32.totalorder %s39, %s55
    %p57 = scmp.eq.s32.totalorder %s17, 0
    %p58 = por %p56, %p57
    %s60 = sadd.s32 %s59, 1
    %p63 = scmp.eq.s32.totalorder %s11, 1
    %p64 = scmp.ne.s32.totalorder %s59, %s61
    %p65 = scmp.eq.s32.totalorder %s11, 0
    %p66 = por %p64, %p65
    %p67 = scmp.ne.s32.totalorder %s59, %s61
    %p68 = scmp.eq.s32.totalorder %s16, 1
    %p69 = por %p67, %p68
    %p70 = scmp.ne.s32.totalorder %s61, %s62
    %p71 = scmp.eq.s32.totalorder %s16, 0
    %p72 = por %p70, %p71
    %p73 = scmp.ne.s32.totalorder %s61, %s62
    %p74 = scmp.eq.s32.totalorder %s17, 1
    %p75 = por %p73, %p74
    %p77 = scmp.ne.s32.totalorder %s62, %s76
    %p78 = scmp.eq.s32.totalorder %s17, 0
    %p79 = por %p77, %p78
    %s80 = sadd.s32 %s18, %s19
    %s81 = sadd.s32 %s30, %s26
    %s82 = ssub.s32 %s80, %s81
    %p83 = scmp.eq.s32.totalorder %s82, 0
    %s85 = sadd.s32 %s84, 1
    %s86 = scalar_select %p83, %s84, %s85
    %p89 = pneg %p83
    %p90 = scmp.eq.s32.totalorder %s11, 1
    %p91 = por %p89, %p90
    %p92 = scmp.ne.s32.totalorder %s84, %s87
    %p93 = scmp.eq.s32.totalorder %s11, 0
    %p94 = por %p92, %p93
    %p95 = scmp.ne.s32.totalorder %s84, %s87
    %p96 = scmp.eq.s32.totalorder %s16, 1
    %p97 = por %p95, %p96
    %p98 = scmp.ne.s32.totalorder %s87, %s88
    %p99 = scmp.eq.s32.totalorder %s16, 0
    %p100 = por %p98, %p99
    %p101 = scmp.ne.s32.totalorder %s87, %s88
    %p102 = scmp.eq.s32.totalorder %s17, 1
    %p103 = por %p101, %p102
    %p105 = scmp.ne.s32.totalorder %s88, %s104
    %p106 = scmp.eq.s32.totalorder %s17, 0
    %p107 = por %p105, %p106
    %s108 = ssub.s32 %s18, %s30
    %p109 = scmp.eq.s32.totalorder %s108, 0
    %s111 = sadd.s32 %s110, 1
    %s112 = scalar_select %p109, %s110, %s111
    %p115 = pneg %p109
    %p116 = scmp.eq.s32.totalorder %s11, 1
    %p117 = por %p115, %p116
    %p118 = scmp.ne.s32.totalorder %s110, %s113
    %p119 = scmp.eq.s32.totalorder %s11, 0
    %p120 = por %p118, %p119
    %p121 = scmp.ne.s32.totalorder %s110, %s113
    %p122 = scmp.eq.s32.totalorder %s16, 1
    %p123 = por %p121, %p122
    %p124 = scmp.ne.s32.totalorder %s113, %s114
    %p125 = scmp.eq.s32.totalorder %s16, 0
    %p126 = por %p124, %p125
    %p127 = scmp.ne.s32.totalorder %s113, %s114
    %p128 = scmp.eq.s32.totalorder %s17, 1
    %p129 = por %p127, %p128
    %p131 = scmp.ne.s32.totalorder %s114, %s130
    %p132 = scmp.eq.s32.totalorder %s17, 0
    %p133 = por %p131, %p132
    %s134 = ssub.s32 %s18, %s30
    %p135 = scmp.eq.s32.totalorder %s134, 0
    %s137 = sadd.s32 %s136, 1
    %s138 = scalar_select %p135, %s136, %s137
    %p141 = pneg %p135
    %p142 = scmp.eq.s32.totalorder %s11, 1
    %p143 = por %p141, %p142
    %p144 = scmp.ne.s32.totalorder %s136, %s139
    %p145 = scmp.eq.s32.totalorder %s11, 0
    %p146 = por %p144, %p145
    %p147 = scmp.ne.s32.totalorder %s136, %s139
    %p148 = scmp.eq.s32.totalorder %s16, 1
    %p149 = por %p147, %p148
    %p150 = scmp.ne.s32.totalorder %s139, %s140
    %p151 = scmp.eq.s32.totalorder %s16, 0
    %p152 = por %p150, %p151
    %p153 = scmp.ne.s32.totalorder %s139, %s140
    %p154 = scmp.eq.s32.totalorder %s17, 1
    %p155 = por %p153, %p154
    %p157 = scmp.ne.s32.totalorder %s140, %s156
    %p158 = scmp.eq.s32.totalorder %s17, 0
    %p159 = por %p157, %p158
    %p160 = scmp.le.s32.totalorder 1, %s11
    %p161 = scmp.lt.s32.totalorder %s11, 3
    %p162 = pnand %p160, %p161
    %p163 = pneg %p162
    // Predicated region
    $region9: #{unet_forward.14} parent=5 // pred_check
      _
    $region10: #{unet_forward.14} parent=5 // pred_check_branch
      %165 = sbr.rel (%p162) target = $region12
    $region11: #{unet_forward.14} parent=5 // pred_region
      %s166 = ssub.s32 %s11, 1
      // Predicated region
      $region13: #{unet_forward.14} parent=11 // pred_check
        %p167 = pneg %p72
      $region14: #{unet_forward.14} parent=11 // pred_check_branch
        %169 = sbr.rel (%p167) target = $region16
      $region15: #{unet_forward.14} parent=11 // pred_region
        _
      $region16: #{unet_forward.14} parent=11 // pred_fallthru
        _
    $region12: #{unet_forward.14} parent=5 // pred_fallthru
      _
    %p170 = scmp.lt.s32.totalorder %s11, 2
    // Predicated region
    $region17: #{unet_forward.14} parent=5 // pred_check
      %p171 = pneg %p170
    $region18: #{unet_forward.14} parent=5 // pred_check_branch
      %173 = sbr.rel (%p171) target = $region20
    $region19: #{unet_forward.14} parent=5 // pred_region
      // Predicated region
      $region21: #{unet_forward.14} parent=19 // pred_check
        %p174 = pneg %p45
      $region22: #{unet_forward.14} parent=19 // pred_check_branch
        %176 = sbr.rel (%p174) target = $region24
      $region23: #{unet_forward.14} parent=19 // pred_region
        %s177 = sadd.s32 %s18, %s19
        %s178 = smul.u32 2, %s177
        %p179 = scmp.lt.s32.totalorder %s178, 3
        %s180 = scalar_select %p179, %s178, 3
        %s181 = smul.addr %s180, 3
        %s182 = smul.addr %s181, 4
        %s183 = scalar_lea.vmem %s0, %s182
        %s184 = sadd.s32 %s18, %s19
        %s185 = smul.u32 2, %s184
      $region24: #{unet_forward.14} parent=19 // pred_fallthru
        _
    $region20: #{unet_forward.14} parent=5 // pred_fallthru
      _
    %p186 = scmp.le.s32.totalorder 1, %s11
    %p187 = scmp.lt.s32.totalorder %s11, 3
    %p188 = pnand %p186, %p187
    %p189 = pneg %p188
    // Predicated region
    $region25: #{unet_forward.14} parent=5 // pred_check
      _
    $region26: #{unet_forward.14} parent=5 // pred_check_branch
      %191 = sbr.rel (%p188) target = $region28
    $region27: #{unet_forward.14} parent=5 // pred_region
      %s192 = ssub.s32 %s11, 1
      %s193 = sadd.s32 %s20, %s21
      %s194 = smul.u32 2, %s193
      %p195 = scmp.lt.s32.totalorder %s194, 3
      %s196 = scalar_select %p195, %s194, 3
      %s197 = smul.addr %s196, 3
      %s198 = smul.addr %s197, 4
      %s199 = scalar_lea.vmem %s0, %s198
      %p200 = pneg %p51
      %p201 = pneg %p48
      %p202 = pneg %p72
      %p203 = pneg %p69
      %p204 = pneg %p100
      %p205 = pneg %p97
      %s206 = sadd.s32 %s20, %s21
      %s207 = smul.u32 2, %s206
      %p208 = scmp.lt.s32.totalorder %s207, 3
      %s209 = scalar_select %p208, %s207, 3
      %s210 = smul.addr %s209, 4
      %s211 = scalar_lea.vmem %s2, %s210
      %p212 = pneg %p126
      %p213 = pneg %p123
      %p214 = scmp.lt.s32.totalorder %s20, 1
      %s215 = scalar_select %p214, %s20, 1
      %s216 = scalar_lea.vmem %s3, %s215
      %p217 = pneg %p152
      %p218 = pneg %p149
      %p219 = scmp.lt.s32.totalorder %s20, 1
      %s220 = scalar_select %p219, %s20, 1
      %s221 = scalar_lea.vmem %s4, %s220
      %s222 = sadd.s32 %s20, %s21
      %s223 = smul.u32 2, %s222
      %p224 = scmp.lt.s32.totalorder %s223, 3
      %s225 = scalar_select %p224, %s223, 3
      %s226 = smul.addr %s225, 3
      %s227 = smul.addr %s226, 4
      %s228 = scalar_lea.vmem %s0, %s227
      %s229 = sadd.s32 %s20, %s21
      %s230 = smul.u32 2, %s229
      %s231 = sadd.s32 %s20, %s21
      %s232 = smul.u32 2, %s231
      %p233 = scmp.lt.s32.totalorder %s232, 3
      %s234 = scalar_select %p233, %s232, 3
      %s235 = smul.addr %s234, 4
      %s236 = scalar_lea.vmem %s2, %s235
      %s237 = sadd.s32 %s20, %s21
      %s238 = smul.u32 2, %s237
      %p239 = scmp.lt.s32.totalorder %s20, 1
      %s240 = scalar_select %p239, %s20, 1
      %s241 = scalar_lea.vmem %s3, %s240
      %p242 = scmp.lt.s32.totalorder %s20, 1
      %s243 = scalar_select %p242, %s20, 1
      %s244 = scalar_lea.vmem %s4, %s243
      %p246 = scmp.eq.s32.totalorder %s21, 0
      // Predicated region
      $region29: #{unet_forward.14} parent=27 // pred_check
        %p247 = pneg %p246
      $region30: #{unet_forward.14} parent=27 // pred_check_branch
        %249 = sbr.rel (%p247) target = $region32
      $region31: #{unet_forward.14} parent=27 // pred_region
        %vm250 = vcmask 253952
        %251 = vst.msk [vmem:[%s241] sm:$0x1] %vm250, 0.0
        %252 = vst.msk [vmem:[%s244] sm:$0x1] %vm250, 0.0
      $region32: #{unet_forward.14} parent=27 // pred_fallthru
        _
      %v253 = vld [vmem:[%s228] sm:$0xff]
      %v254 = vld [vmem:[%s228 + $0x8] sm:$0xf]
      %v255 = vld [vmem:[%s228 + $0xc] sm:$0xff]
      %v256 = vld [vmem:[%s228 + $0x14] sm:$0xf]
      %v257 = vld [vmem:[%s1] sm:$0xf]
      %v258 = vld [vmem:[%s1 + $0x4] sm:$0xf]
      %v259 = vld [vmem:[%s1 + $0x8] sm:$0xf]
      %v260 = vld [vmem:[%s1 + $0xc] sm:$0xf]
      %v261 = vld [vmem:[%s1 + $0x10] sm:$0xf]
      %v262 = vld [vmem:[%s1 + $0x14] sm:$0xf]
      %v263 = vld [vmem:[%s1 + $0x18] sm:$0xf]
      %v264 = vld [vmem:[%s1 + $0x1c] sm:$0xf]
      %v265 = vld [vmem:[%s1 + $0x20] sm:$0xf]
      %v266 = vld [vmem:[%s1 + $0x24] sm:$0xf]
      %v267 = vld [vmem:[%s1 + $0x28] sm:$0xf]
      %v268 = vld [vmem:[%s1 + $0x2c] sm:$0xf]
      %v269 = vld [vmem:[%s1 + $0x30] sm:$0xf]
      %v270 = vld [vmem:[%s1 + $0x34] sm:$0xf]
      %v271 = vld [vmem:[%s1 + $0x38] sm:$0xf]
      %v272 = vld [vmem:[%s1 + $0x3c] sm:$0xf]
      %v273 = vld [vmem:[%s1 + $0x40] sm:$0xf]
      %v274 = vld [vmem:[%s1 + $0x44] sm:$0xf]
      %v275 = vld [vmem:[%s1 + $0x48] sm:$0xf]
      %v276 = vld [vmem:[%s1 + $0x4c] sm:$0xf]
      %v277 = vld [vmem:[%s1 + $0x50] sm:$0xf]
      %v278 = vld [vmem:[%s1 + $0x54] sm:$0xf]
      %v279 = vld [vmem:[%s1 + $0x58] sm:$0xf]
      %v280 = vld [vmem:[%s1 + $0x5c] sm:$0xf]
      %v281 = vld [vmem:[%s1 + $0x60] sm:$0xf]
      %v282 = vld [vmem:[%s1 + $0x64] sm:$0xf]
      %v283 = vld [vmem:[%s1 + $0x68] sm:$0xf]
      %v284 = vld [vmem:[%s1 + $0x6c] sm:$0xf]
      %v285 = vld [vmem:[%s1 + $0x70] sm:$0xf]
      %v286 = vld [vmem:[%s1 + $0x74] sm:$0xf]
      %v287 = vld [vmem:[%s1 + $0x78] sm:$0xf]
      %v288 = vld [vmem:[%s1 + $0x7c] sm:$0xf]
      %v289 = vld [vmem:[%s1 + $0x80] sm:$0xf]
      %v290 = vld [vmem:[%s1 + $0x84] sm:$0xf]
      %v291 = vld [vmem:[%s1 + $0x88] sm:$0xf]
      %v292 = vld [vmem:[%s1 + $0x8c] sm:$0xf]
      %v297 = vunpack.c.l.b16 %v253
      %v298 = vunpack.c.h.b16 %v253
      %v299 = vunpack.c.l.b16 %v254
      %v300 = vunpack.c.l.b16 %v255
      %v301 = vunpack.c.h.b16 %v255
      %v302 = vunpack.c.l.b16 %v256
      %v303 = vpack.c.b16 %v300, %v297
      %v304 = vpack.c.b16 %v301, %v298
      %v305 = vpack.c.b16 %v302, %v299
      %v344 = vunpack.c.l.b16 %v257
      %v345 = vunpack.c.l.b16 %v258
      %v346 = vunpack.c.l.b16 %v259
      %v347 = vunpack.c.l.b16 %v260
      %v348 = vunpack.c.l.b16 %v261
      %v349 = vunpack.c.l.b16 %v262
      %v350 = vunpack.c.l.b16 %v263
      %v351 = vunpack.c.l.b16 %v264
      %v352 = vunpack.c.l.b16 %v265
      %v353 = vunpack.c.l.b16 %v266
      %v354 = vunpack.c.l.b16 %v267
      %v355 = vunpack.c.l.b16 %v268
      %v356 = vunpack.c.l.b16 %v269
      %v357 = vunpack.c.l.b16 %v270
      %v358 = vunpack.c.l.b16 %v271
      %v359 = vunpack.c.l.b16 %v272
      %v360 = vunpack.c.l.b16 %v273
      %v361 = vunpack.c.l.b16 %v274
      %v362 = vunpack.c.l.b16 %v275
      %v363 = vunpack.c.l.b16 %v276
      %v364 = vunpack.c.l.b16 %v277
      %v365 = vunpack.c.l.b16 %v278
      %v366 = vunpack.c.l.b16 %v279
      %v367 = vunpack.c.l.b16 %v280
      %v368 = vunpack.c.l.b16 %v281
      %v369 = vunpack.c.l.b16 %v282
      %v370 = vunpack.c.l.b16 %v283
      %v371 = vunpack.c.l.b16 %v284
      %v372 = vunpack.c.l.b16 %v285
      %v373 = vunpack.c.l.b16 %v286
      %v374 = vunpack.c.l.b16 %v287
      %v375 = vunpack.c.l.b16 %v288
      %v376 = vunpack.c.l.b16 %v289
      %v377 = vunpack.c.l.b16 %v290
      %v378 = vunpack.c.l.b16 %v291
      %v379 = vunpack.c.l.b16 %v292
      %v380 = vpack.c.b16 %v345, %v344
      %v381 = vpack.c.b16 %v347, %v346
      %v382 = vpack.c.b16 %v349, %v348
      %v383 = vpack.c.b16 %v351, %v350
      %v384 = vpack.c.b16 %v353, %v352
      %v385 = vpack.c.b16 %v355, %v354
      %v386 = vpack.c.b16 %v357, %v356
      %v387 = vpack.c.b16 %v359, %v358
      %v388 = vpack.c.b16 %v361, %v360
      %v389 = vpack.c.b16 %v363, %v362
      %v390 = vpack.c.b16 %v365, %v364
      %v391 = vpack.c.b16 %v367, %v366
      %v392 = vpack.c.b16 %v369, %v368
      %v393 = vpack.c.b16 %v371, %v370
      %v394 = vpack.c.b16 %v373, %v372
      %v395 = vpack.c.b16 %v375, %v374
      %v396 = vpack.c.b16 %v377, %v376
      %v397 = vpack.c.b16 %v379, %v378
      %vm416 = vcmask 261120
      %v418 = vsel %vm416, %v305, 0
      %420 = vmatpush.bf16.msra.mxu0 %v387
      %421 = vmatpush.bf16.msra.mxu0 %v386
      %422 = vmatpush.bf16.msra.mxu0 %v385
      %423 = vmatpush.bf16.msra.mxu0 %v384
      %424 = vmatpush.bf16.msra.mxu0 %v383
      %425 = vmatpush.bf16.msra.mxu0 %v382
      %426 = vmatpush.bf16.msra.mxu0 %v381
      %427 = vmatpush.bf16.msra.mxu0 %v380
      %428 = vmatmul.bf16.gmra.mxu0 %v303
      %v429 = vpop.f32.mrf.mxu0
      %v430 = vadd.f32 0.0, %v429
      %v431 = vpop.f32.mrf.mxu0
      %v432 = vadd.f32 0.0, %v431
      %433 = vdwg.mxu0
      %434 = vmatpush.bf16.msra.mxu0 %v395
      %435 = vmatpush.bf16.msra.mxu0 %v394
      %436 = vmatpush.bf16.msra.mxu0 %v393
      %437 = vmatpush.bf16.msra.mxu0 %v392
      %438 = vmatpush.bf16.msra.mxu0 %v391
      %439 = vmatpush.bf16.msra.mxu0 %v390
      %440 = vmatpush.bf16.msra.mxu0 %v389
      %441 = vmatpush.bf16.msra.mxu0 %v388
      %442 = vmatmul.bf16.gmra.mxu0 %v304
      %v443 = vpop.f32.mrf.mxu0
      %v444 = vadd.f32 %v430, %v443
      %v445 = vpop.f32.mrf.mxu0
      %v446 = vadd.f32 %v432, %v445
      %447 = vdwg.mxu0
      %448 = vmatpush.bf16.msra.mxu0 0
      %449 = vmatpush.bf16.msra.mxu0 0
      %450 = vmatpush.bf16.msra.mxu0 0
      %451 = vmatpush.bf16.msra.mxu0 0
      %452 = vmatpush.bf16.msra.mxu0 0
      %453 = vmatpush.bf16.msra.mxu0 0
      %454 = vmatpush.bf16.msra.mxu0 %v397
      %455 = vmatpush.bf16.msra.mxu0 %v396
      %456 = vmatmul.bf16.gmra.mxu0 %v418
      %v457 = vpop.f32.mrf.mxu0
      %v458 = vadd.f32 %v444, %v457
      %v459 = vpop.f32.mrf.mxu0
      %v460 = vadd.f32 %v446, %v459
      %461 = vdwg.mxu0
      %v462 = vld [vmem:[%s241] sm:$0x1]
      %v463 = vsel %vm416, %v458, 0.0
      %v464 = vsel %vm416, %v460, 0.0
      %v465 = vadd.f32 %v463, %v464
      %v466 = vrot.slane %v465, 4
      %v467 = vadd.f32 %v465, %v466
      %v468 = vrot.slane %v467, 2
      %v469 = vadd.f32 %v467, %v468
      %v470 = vrot.slane %v469, 1
      %v471 = vadd.f32 %v469, %v470
      %v472 = vadd.f32 %v462, %v471
      %vm473 = vcmask 253952
      %474 = vst.msk [vmem:[%s241] sm:$0x1] %vm473, %v472
      %v475 = vld [vmem:[%s244] sm:$0x1]
      %v476 = vmul.f32 %v458, %v458
      %v477 = vmul.f32 %v460, %v460
      %v478 = vsel %vm416, %v476, 0.0
      %v479 = vsel %vm416, %v477, 0.0
      %v480 = vadd.f32 %v478, %v479
      %v481 = vrot.slane %v480, 4
      %v482 = vadd.f32 %v480, %v481
      %v483 = vrot.slane %v482, 2
      %v484 = vadd.f32 %v482, %v483
      %v485 = vrot.slane %v484, 1
      %v486 = vadd.f32 %v484, %v485
      %v487 = vadd.f32 %v475, %v486
      %488 = vst.msk [vmem:[%s244] sm:$0x1] %vm473, %v487
      %v489 = vpack.c.bf16 %v458, %v458
      %v490 = vpack.c.bf16 %v460, %v460
      %vm491 = vcmask 257024
      %492 = vst.msk [vmem:[%s236] sm:$0xf] %vm491, %v489
      %493 = vst.msk [vmem:[%s236 + $0x4] sm:$0xf] %vm491, %v490
      %s494 = sadd.s32 %s20, %s21
      %s495 = smul.u32 2, %s494
      %p496 = scmp.lt.s32.totalorder %s495, 3
      %s497 = scalar_select %p496, %s495, 3
      %s498 = smul.addr %s497, 4
      %s499 = scalar_lea.vmem %s2, %s498
      %p500 = scmp.lt.s32.totalorder %s20, 1
      %s501 = scalar_select %p500, %s20, 1
      %s502 = scalar_lea.vmem %s3, %s501
      %p503 = scmp.lt.s32.totalorder %s20, 1
      %s504 = scalar_select %p503, %s20, 1
      %s505 = scalar_lea.vmem %s4, %s504
      // Predicated region
      $region33: #{unet_forward.14} parent=27 // pred_check
        %p506 = pneg %p97
      $region34: #{unet_forward.14} parent=27 // pred_check_branch
        %508 = sbr.rel (%p506) target = $region36
      $region35: #{unet_forward.14} parent=27 // pred_region
        %s509 = sadd.s32 %s20, %s21
        %s510 = smul.u32 2, %s509
      $region36: #{unet_forward.14} parent=27 // pred_fallthru
        _
      // Predicated region
      $region37: #{unet_forward.14} parent=27 // pred_check
        %p511 = pneg %p123
      $region38: #{unet_forward.14} parent=27 // pred_check_branch
        %513 = sbr.rel (%p511) target = $region40
      $region39: #{unet_forward.14} parent=27 // pred_region
        _
      $region40: #{unet_forward.14} parent=27 // pred_fallthru
        _
      // Predicated region
      $region41: #{unet_forward.14} parent=27 // pred_check
        %p514 = pneg %p149
      $region42: #{unet_forward.14} parent=27 // pred_check_branch
        %516 = sbr.rel (%p514) target = $region44
      $region43: #{unet_forward.14} parent=27 // pred_region
        _
      $region44: #{unet_forward.14} parent=27 // pred_fallthru
        _
    $region28: #{unet_forward.14} parent=5 // pred_fallthru
      _
    %p517 = scmp.le.s32.totalorder 2, %s11
    // Predicated region
    $region45: #{unet_forward.14} parent=5 // pred_check
      %p518 = pneg %p517
    $region46: #{unet_forward.14} parent=5 // pred_check_branch
      %520 = sbr.rel (%p518) target = $region48
    $region47: #{unet_forward.14} parent=5 // pred_region
      %s521 = ssub.s32 %s11, 2
      // Predicated region
      $region49: #{unet_forward.14} parent=47 // pred_check
        %p522 = pneg %p103
      $region50: #{unet_forward.14} parent=47 // pred_check_branch
        %524 = sbr.rel (%p522) target = $region52
      $region51: #{unet_forward.14} parent=47 // pred_region
        %s525 = sadd.s32 %s22, %s23
        %s526 = smul.u32 2, %s525
        %p527 = scmp.lt.s32.totalorder %s526, 3
        %s528 = scalar_select %p527, %s526, 3
        %s529 = smul.addr %s528, 4
        %s530 = scalar_lea.vmem %s2, %s529
      $region52: #{unet_forward.14} parent=47 // pred_fallthru
        _
      // Predicated region
      $region53: #{unet_forward.14} parent=47 // pred_check
        %p531 = pneg %p129
      $region54: #{unet_forward.14} parent=47 // pred_check_branch
        %533 = sbr.rel (%p531) target = $region56
      $region55: #{unet_forward.14} parent=47 // pred_region
        %p534 = scmp.lt.s32.totalorder %s22, 1
        %s535 = scalar_select %p534, %s22, 1
        %s536 = scalar_lea.vmem %s3, %s535
      $region56: #{unet_forward.14} parent=47 // pred_fallthru
        _
      // Predicated region
      $region57: #{unet_forward.14} parent=47 // pred_check
        %p537 = pneg %p155
      $region58: #{unet_forward.14} parent=47 // pred_check_branch
        %539 = sbr.rel (%p537) target = $region60
      $region59: #{unet_forward.14} parent=47 // pred_region
        %p540 = scmp.lt.s32.totalorder %s22, 1
        %s541 = scalar_select %p540, %s22, 1
        %s542 = scalar_lea.vmem %s4, %s541
      $region60: #{unet_forward.14} parent=47 // pred_fallthru
        _
    $region48: #{unet_forward.14} parent=5 // pred_fallthru
      _
  $region6: #{unet_forward.14} parent=0 // loop_footer
    %s15 = sadd.s32 1, %s11
  $region7: #{unet_forward.14} parent=0 // loop_footer_branch
    %10 = sbr.rel target = $region3
  $region8: #{unet_forward.14} parent=0 // loop_exit
    _

// kernel: tile.8
$region0: #{tile.8}
  #allocation0 [shape = 's32[1]{0}', space=sflag, size = 0x4, scoped, tag = 'scoped memory for tile.8']
  %s0 = inlined_call_operand.vmem [shape: f32[3], index: 0, kind: input, shape index: {}]
  %s1 = inlined_call_operand.vmem [shape: f32[4,3], index: 1, kind: output, shape index: {}]
  // Predicated region
  $region2: #{tile.8} parent=0 // pred_check
    _
  $region3: #{tile.8} parent=0 // pred_check_branch
    %3 = sbr.rel (0) target = $region5
  $region4: #{tile.8} parent=0 // pred_region
    _
  $region5: #{tile.8} parent=0 // pred_fallthru
    _
  %v4 = vld [vmem:[%s0] ss:$0 sm:$0xff]
  %5 = vst [vmem:[%s1] sm:$0xf] %v4

// kernel: tile.9
$region0: #{tile.9}
  %s0 = inlined_call_operand.vmem [shape: f32[4,3], index: 0, kind: input, shape index: {}]
  %s1 = inlined_call_operand.vmem [shape: f32[1,12], index: 1, kind: output, shape index: {}]
  $region1: #{tile.9} parent=0
    #allocation0 [shape = 'u8[4096]{0}', space=vmem, size = 0x1000, scoped, tag = 'scoped mem for output reshape']
    #allocation1 [shape = 'u8[4096]{0}', space=vmem, size = 0x1000, scoped, tag = 'scoped mem for input reshape']
    %s3 = ssub.s32 16, 1
    %v4 = vld [vmem:[%s0] sm:%s3]
    %5 = vst [vmem:[#allocation1] sm:%s3] %v4
    %v6 = vld [vmem:[#allocation1] sm:$0x1]
    %vm7 = vcmask 23552
    %8 = vst.msk [vmem:[#allocation0] sm:$0x1] %vm7, %v6
    %s9 = scalar_lea.vmem [#allocation1], 3
    %v10 = vld [vmem:[%s9] sm:$0x1]
    %11 = vrot.lane.b32.xlu0 %v10, 9
    %v12 = vpop.permute.xlu0 %11
    %vm13 = vcmask 97352
    %14 = vst.msk [vmem:[#allocation0] sm:$0x1] %vm13, %v12
    %s15 = scalar_lea.vmem [#allocation1], 2
    %v16 = vld [vmem:[%s15] sm:$0x1]
    %17 = vrot.lane.b32.xlu0 %v16, 6
    %v18 = vpop.permute.xlu0 %17
    %vm19 = vcmask 72752
    %20 = vst.msk [vmem:[#allocation0] sm:$0x1] %vm19, %v18
    %s21 = scalar_lea.vmem [#allocation1], 1
    %v22 = vld [vmem:[%s21] sm:$0x1]
    %23 = vrot.lane.b32.xlu0 %v22, 3
    %v24 = vpop.permute.xlu0 %23
    %vm25 = vcmask 48152
    %26 = vst.msk [vmem:[#allocation0] sm:$0x1] %vm25, %v24
    %s28 = ssub.s32 2, 1
    %v29 = vld [vmem:[#allocation0] sm:%s28]
    %s31 = ssub.s32 2, 1
    %32 = vst [vmem:[%s1] sm:%s31] %v29

// kernel: unet_forward.15
$region0: #{unet_forward.15}
  #allocation0 [shape = 'u32[]', space=smem, size = 0x4, offset = 0x4, fixed_abs, tag = 'smem constant byte address 0x4 - core index']
  #allocation1 [shape = 'u32[72,128]{1,0:T(1,128)}', space=vmem, size = 0x9000, scoped, tag = 'internal scratch']
  %s0 = inlined_call_operand.vmem [shape: bf16[128,144], index: 0, kind: input, shape index: {}]
  %s1 = inlined_call_operand.vmem [shape: bf16[144,12], index: 1, kind: input, shape index: {}]
  %s2 = inlined_call_operand.vmem [shape: f32[1,12], index: 2, kind: input, shape index: {}]
  %s3 = inlined_call_operand.vmem [shape: f32[128,12], index: 3, kind: output, shape index: {}]
  %s4 = sld [smem:[#allocation0]]
  $region45: #{unet_forward.15} parent=0
    _
  %s6 = ssub.s32 1, %s4
  %s7 = scalar_select 0, %s6, %s4
  loop: start=0, step=1, limit=4
  $region2: #{unet_forward.15} parent=0 // loop_pre_header
    _
  $region3: #{unet_forward.15} parent=0 // loop_header
    %s9 = sphi 0, %s13
    %p10 = scmp.ge.s32.totalorder %s9, 4
    %s16 = sphi 0, %s28
    %s17 = sphi 0, %s24
    %s18 = sphi 0, %s16
    %s19 = sphi 0, %s17
    %s20 = sphi 0, %s18
    %s21 = sphi 0, %s19
    %s33 = sphi 0, %s35
    %s36 = sphi 0, %s33
    %s37 = sphi 0, %s36
    %s53 = sphi 0, %s37
    %s57 = sphi 0, %s57
    %s59 = sphi 0, %s57
    %s60 = sphi 0, %s59
    %s74 = sphi 0, %s60
    %s78 = sphi 0, %s78
    %s80 = sphi 0, %s78
    %s81 = sphi 0, %s80
    %s95 = sphi 0, %s81
    %s103 = sphi 0, %s105
    %s106 = sphi 0, %s103
    %s107 = sphi 0, %s106
    %s123 = sphi 0, %s107
  $region4: #{unet_forward.15} parent=0 // loop_header_branch
    %12 = sbr.rel (%p10) target = $region8
  $region5: #{unet_forward.15} parent=0 // loop_body
    %s14 = ssub.s32 %s9, 1
    %s15 = ssub.s32 %s9, 2
    %s22 = sadd.s32 1, %s17
    %p23 = scmp.ge.s32.totalorder %s22, 1
    %s24 = scalar_select %p23, 0, %s22
    %s25 = sadd.s32 1, %s16
    %s26 = scalar_select %p23, %s25, %s16
    %p27 = scmp.ge.s32.totalorder %s26, 2
    %s28 = scalar_select %p27, 0, %s26
    %s29 = sadd.s32 %s16, %s17
    %s30 = sadd.s32 %s28, %s24
    %s31 = ssub.s32 %s29, %s30
    %p32 = scmp.eq.s32.totalorder %s31, 0
    %s34 = sadd.s32 %s33, 1
    %s35 = scalar_select %p32, %s33, %s34
    %p38 = pneg %p32
    %p39 = scmp.eq.s32.totalorder %s9, 1
    %p40 = por %p38, %p39
    %p41 = scmp.ne.s32.totalorder %s33, %s36
    %p42 = scmp.eq.s32.totalorder %s9, 0
    %p43 = por %p41, %p42
    %p44 = scmp.ne.s32.totalorder %s33, %s36
    %p45 = scmp.eq.s32.totalorder %s14, 1
    %p46 = por %p44, %p45
    %p47 = scmp.ne.s32.totalorder %s36, %s37
    %p48 = scmp.eq.s32.totalorder %s14, 0
    %p49 = por %p47, %p48
    %p50 = scmp.ne.s32.totalorder %s36, %s37
    %p51 = scmp.eq.s32.totalorder %s15, 1
    %p52 = por %p50, %p51
    %p54 = scmp.ne.s32.totalorder %s37, %s53
    %p55 = scmp.eq.s32.totalorder %s15, 0
    %p56 = por %p54, %p55
    %s58 = sadd.s32 %s57, 1
    %p61 = scmp.eq.s32.totalorder %s9, 1
    %p62 = scmp.ne.s32.totalorder %s57, %s59
    %p63 = scmp.eq.s32.totalorder %s9, 0
    %p64 = por %p62, %p63
    %p65 = scmp.ne.s32.totalorder %s57, %s59
    %p66 = scmp.eq.s32.totalorder %s14, 1
    %p67 = por %p65, %p66
    %p68 = scmp.ne.s32.totalorder %s59, %s60
    %p69 = scmp.eq.s32.totalorder %s14, 0
    %p70 = por %p68, %p69
    %p71 = scmp.ne.s32.totalorder %s59, %s60
    %p72 = scmp.eq.s32.totalorder %s15, 1
    %p73 = por %p71, %p72
    %p75 = scmp.ne.s32.totalorder %s60, %s74
    %p76 = scmp.eq.s32.totalorder %s15, 0
    %p77 = por %p75, %p76
    %s79 = sadd.s32 %s78, 1
    %p82 = scmp.eq.s32.totalorder %s9, 1
    %p83 = scmp.ne.s32.totalorder %s78, %s80
    %p84 = scmp.eq.s32.totalorder %s9, 0
    %p85 = por %p83, %p84
    %p86 = scmp.ne.s32.totalorder %s78, %s80
    %p87 = scmp.eq.s32.totalorder %s14, 1
    %p88 = por %p86, %p87
    %p89 = scmp.ne.s32.totalorder %s80, %s81
    %p90 = scmp.eq.s32.totalorder %s14, 0
    %p91 = por %p89, %p90
    %p92 = scmp.ne.s32.totalorder %s80, %s81
    %p93 = scmp.eq.s32.totalorder %s15, 1
    %p94 = por %p92, %p93
    %p96 = scmp.ne.s32.totalorder %s81, %s95
    %p97 = scmp.eq.s32.totalorder %s15, 0
    %p98 = por %p96, %p97
    %s99 = sadd.s32 %s16, %s17
    %s100 = sadd.s32 %s28, %s24
    %s101 = ssub.s32 %s99, %s100
    %p102 = scmp.eq.s32.totalorder %s101, 0
    %s104 = sadd.s32 %s103, 1
    %s105 = scalar_select %p102, %s103, %s104
    %p108 = pneg %p102
    %p109 = scmp.eq.s32.totalorder %s9, 1
    %p110 = por %p108, %p109
    %p111 = scmp.ne.s32.totalorder %s103, %s106
    %p112 = scmp.eq.s32.totalorder %s9, 0
    %p113 = por %p111, %p112
    %p114 = scmp.ne.s32.totalorder %s103, %s106
    %p115 = scmp.eq.s32.totalorder %s14, 1
    %p116 = por %p114, %p115
    %p117 = scmp.ne.s32.totalorder %s106, %s107
    %p118 = scmp.eq.s32.totalorder %s14, 0
    %p119 = por %p117, %p118
    %p120 = scmp.ne.s32.totalorder %s106, %s107
    %p121 = scmp.eq.s32.totalorder %s15, 1
    %p122 = por %p120, %p121
    %p124 = scmp.ne.s32.totalorder %s107, %s123
    %p125 = scmp.eq.s32.totalorder %s15, 0
    %p126 = por %p124, %p125
    %p127 = scmp.le.s32.totalorder 1, %s9
    %p128 = scmp.lt.s32.totalorder %s9, 3
    %p129 = pnand %p127, %p128
    %p130 = pneg %p129
    // Predicated region
    $region9: #{unet_forward.15} parent=5 // pred_check
      _
    $region10: #{unet_forward.15} parent=5 // pred_check_branch
      %132 = sbr.rel (%p129) target = $region12
    $region11: #{unet_forward.15} parent=5 // pred_region
      %s133 = ssub.s32 %s9, 1
      // Predicated region
      $region13: #{unet_forward.15} parent=11 // pred_check
        %p134 = pneg %p70
      $region14: #{unet_forward.15} parent=11 // pred_check_branch
        %136 = sbr.rel (%p134) target = $region16
      $region15: #{unet_forward.15} parent=11 // pred_region
        _
      $region16: #{unet_forward.15} parent=11 // pred_fallthru
        _
      // Predicated region
      $region17: #{unet_forward.15} parent=11 // pred_check
        %p137 = pneg %p91
      $region18: #{unet_forward.15} parent=11 // pred_check_branch
        %139 = sbr.rel (%p137) target = $region20
      $region19: #{unet_forward.15} parent=11 // pred_region
        _
      $region20: #{unet_forward.15} parent=11 // pred_fallthru
        _
    $region12: #{unet_forward.15} parent=5 // pred_fallthru
      _
    %p140 = scmp.lt.s32.totalorder %s9, 2
    // Predicated region
    $region21: #{unet_forward.15} parent=5 // pred_check
      %p141 = pneg %p140
    $region22: #{unet_forward.15} parent=5 // pred_check_branch
      %143 = sbr.rel (%p141) target = $region24
    $region23: #{unet_forward.15} parent=5 // pred_region
      // Predicated region
      $region25: #{unet_forward.15} parent=23 // pred_check
        %p144 = pneg %p43
      $region26: #{unet_forward.15} parent=23 // pred_check_branch
        %146 = sbr.rel (%p144) target = $region28
      $region27: #{unet_forward.15} parent=23 // pred_region
        %s147 = sadd.s32 %s16, %s17
        %s148 = smul.u32 8, %s147
        %p149 = scmp.lt.s32.totalorder %s148, 15
        %s150 = scalar_select %p149, %s148, 15
        %s151 = smul.addr %s150, 2
        %s152 = smul.addr %s151, 4
        %s153 = scalar_lea.vmem %s0, %s152
        %s154 = sadd.s32 %s16, %s17
        %s155 = smul.u32 8, %s154
      $region28: #{unet_forward.15} parent=23 // pred_fallthru
        _
    $region24: #{unet_forward.15} parent=5 // pred_fallthru
      _
    %p156 = scmp.le.s32.totalorder 1, %s9
    %p157 = scmp.lt.s32.totalorder %s9, 3
    %p158 = pnand %p156, %p157
    %p159 = pneg %p158
    // Predicated region
    $region29: #{unet_forward.15} parent=5 // pred_check
      _
    $region30: #{unet_forward.15} parent=5 // pred_check_branch
      %161 = sbr.rel (%p158) target = $region32
    $region31: #{unet_forward.15} parent=5 // pred_region
      %s162 = ssub.s32 %s9, 1
      %s163 = sadd.s32 %s18, %s19
      %s164 = smul.u32 8, %s163
      %p165 = scmp.lt.s32.totalorder %s164, 15
      %s166 = scalar_select %p165, %s164, 15
      %s167 = smul.addr %s166, 2
      %s168 = smul.addr %s167, 4
      %s169 = scalar_lea.vmem %s0, %s168
      %p170 = pneg %p49
      %p171 = pneg %p46
      %p172 = pneg %p70
      %p173 = pneg %p67
      %p174 = pneg %p91
      %p175 = pneg %p88
      %p176 = pneg %p119
      %p177 = pneg %p116
      %s178 = sadd.s32 %s18, %s19
      %s179 = smul.u32 8, %s178
      %p180 = scmp.lt.s32.totalorder %s179, 15
      %s181 = scalar_select %p180, %s179, 15
      %s182 = smul.addr %s181, 8
      %s183 = scalar_lea.vmem %s3, %s182
      %s184 = sadd.s32 %s18, %s19
      %s185 = smul.u32 8, %s184
      %p186 = scmp.lt.s32.totalorder %s185, 15
      %s187 = scalar_select %p186, %s185, 15
      %s188 = smul.addr %s187, 2
      %s189 = smul.addr %s188, 4
      %s190 = scalar_lea.vmem %s0, %s189
      %s191 = sadd.s32 %s18, %s19
      %s192 = smul.u32 8, %s191
      %s193 = sadd.s32 %s18, %s19
      %s194 = smul.u32 8, %s193
      %p195 = scmp.lt.s32.totalorder %s194, 15
      %s196 = scalar_select %p195, %s194, 15
      %s197 = smul.addr %s196, 8
      %s198 = scalar_lea.vmem %s3, %s197
      %s199 = sadd.s32 %s18, %s19
      %s200 = smul.u32 8, %s199
      %v202 = vld [vmem:[%s190] sm:$0xff]
      %v203 = vld [vmem:[%s190 + $0x8] sm:$0xff]
      %v204 = vld [vmem:[%s190 + $0x10] sm:$0xff]
      %v205 = vld [vmem:[%s190 + $0x18] sm:$0xff]
      %v206 = vld [vmem:[%s190 + $0x20] sm:$0xff]
      %v207 = vld [vmem:[%s190 + $0x28] sm:$0xff]
      %v208 = vld [vmem:[%s190 + $0x30] sm:$0xff]
      %v209 = vld [vmem:[%s190 + $0x38] sm:$0xff]
      %v210 = vld [vmem:[%s1] sm:$0xf]
      %v211 = vld [vmem:[%s1 + $0x4] sm:$0xf]
      %v212 = vld [vmem:[%s1 + $0x8] sm:$0xf]
      %v213 = vld [vmem:[%s1 + $0xc] sm:$0xf]
      %v214 = vld [vmem:[%s1 + $0x10] sm:$0xf]
      %v215 = vld [vmem:[%s1 + $0x14] sm:$0xf]
      %v216 = vld [vmem:[%s1 + $0x18] sm:$0xf]
      %v217 = vld [vmem:[%s1 + $0x1c] sm:$0xf]
      %v218 = vld [vmem:[%s1 + $0x20] sm:$0xf]
      %v219 = vld [vmem:[%s1 + $0x24] sm:$0xf]
      %v220 = vld [vmem:[%s1 + $0x28] sm:$0xf]
      %v221 = vld [vmem:[%s1 + $0x2c] sm:$0xf]
      %v222 = vld [vmem:[%s1 + $0x30] sm:$0xf]
      %v223 = vld [vmem:[%s1 + $0x34] sm:$0xf]
      %v224 = vld [vmem:[%s1 + $0x38] sm:$0xf]
      %v225 = vld [vmem:[%s1 + $0x3c] sm:$0xf]
      %v226 = vld [vmem:[%s1 + $0x40] sm:$0xf]
      %v227 = vld [vmem:[%s1 + $0x44] sm:$0xf]
      %v228 = vld [vmem:[%s2] sm:$0x1]
      %v230 = vperm.slane %v228, 0
      %v240 = vunpack.c.l.b16 %v202
      %v241 = vunpack.c.h.b16 %v202
      %v242 = vunpack.c.l.b16 %v203
      %v243 = vunpack.c.h.b16 %v203
      %v244 = vunpack.c.l.b16 %v204
      %v245 = vunpack.c.h.b16 %v204
      %v246 = vunpack.c.l.b16 %v205
      %v247 = vunpack.c.h.b16 %v205
      %v248 = vunpack.c.l.b16 %v206
      %v249 = vunpack.c.h.b16 %v206
      %v250 = vunpack.c.l.b16 %v207
      %v251 = vunpack.c.h.b16 %v207
      %v252 = vunpack.c.l.b16 %v208
      %v253 = vunpack.c.h.b16 %v208
      %v254 = vunpack.c.l.b16 %v209
      %v255 = vunpack.c.h.b16 %v209
      %v256 = vpack.c.b16 %v242, %v240
      %v257 = vpack.c.b16 %v243, %v241
      %v258 = vpack.c.b16 %v246, %v244
      %v259 = vpack.c.b16 %v247, %v245
      %v260 = vpack.c.b16 %v250, %v248
      %v261 = vpack.c.b16 %v251, %v249
      %v262 = vpack.c.b16 %v254, %v252
      %v263 = vpack.c.b16 %v255, %v253
      %v286 = vunpack.c.l.b16 %v210
      %v287 = vunpack.c.l.b16 %v211
      %v288 = vunpack.c.l.b16 %v212
      %v289 = vunpack.c.l.b16 %v213
      %v290 = vunpack.c.l.b16 %v214
      %v291 = vunpack.c.l.b16 %v215
      %v292 = vunpack.c.l.b16 %v216
      %v293 = vunpack.c.l.b16 %v217
      %v294 = vunpack.c.l.b16 %v218
      %v295 = vunpack.c.l.b16 %v219
      %v296 = vunpack.c.l.b16 %v220
      %v297 = vunpack.c.l.b16 %v221
      %v298 = vunpack.c.l.b16 %v222
      %v299 = vunpack.c.l.b16 %v223
      %v300 = vunpack.c.l.b16 %v224
      %v301 = vunpack.c.l.b16 %v225
      %v302 = vunpack.c.l.b16 %v226
      %v303 = vunpack.c.l.b16 %v227
      %v304 = vpack.c.b16 %v287, %v286
      %v305 = vpack.c.b16 %v289, %v288
      %v306 = vpack.c.b16 %v291, %v290
      %v307 = vpack.c.b16 %v293, %v292
      %v308 = vpack.c.b16 %v295, %v294
      %v309 = vpack.c.b16 %v297, %v296
      %v310 = vpack.c.b16 %v299, %v298
      %v311 = vpack.c.b16 %v301, %v300
      %v312 = vpack.c.b16 %v303, %v302
      %vm322 = vcmask 130048
      %v324 = vsel %vm322, %v257, 0
      %v327 = vsel %vm322, %v259, 0
      %v330 = vsel %vm322, %v261, 0
      %v333 = vsel %vm322, %v263, 0
      %335 = vmatpush.bf16.msra.mxu0 %v311
      %336 = vmatpush.bf16.msra.mxu0 %v310
      %337 = vmatpush.bf16.msra.mxu0 %v309
      %338 = vmatpush.bf16.msra.mxu0 %v308
      %339 = vmatpush.bf16.msra.mxu0 %v307
      %340 = vmatpush.bf16.msra.mxu0 %v306
      %341 = vmatpush.bf16.msra.mxu0 %v305
      %342 = vmatpush.bf16.msra.mxu0 %v304
      %343 = vmatmul.bf16.gmra.mxu0 %v256
      %v344 = vpop.f32.mrf.mxu0
      %v345 = vadd.f32 %v230, %v344
      %v346 = vpop.f32.mrf.mxu0
      %v347 = vadd.f32 %v230, %v346
      %348 = vmatmul.bf16.gmra.mxu0 %v258
      %v349 = vpop.f32.mrf.mxu0
      %v350 = vadd.f32 %v230, %v349
      %v351 = vpop.f32.mrf.mxu0
      %v352 = vadd.f32 %v230, %v351
      %353 = vmatmul.bf16.gmra.mxu0 %v260
      %v354 = vpop.f32.mrf.mxu0
      %v355 = vadd.f32 %v230, %v354
      %v356 = vpop.f32.mrf.mxu0
      %v357 = vadd.f32 %v230, %v356
      %358 = vmatmul.bf16.gmra.mxu0 %v262
      %v359 = vpop.f32.mrf.mxu0
      %v360 = vadd.f32 %v230, %v359
      %v361 = vpop.f32.mrf.mxu0
      %v362 = vadd.f32 %v230, %v361
      %363 = vdwg.mxu0
      %364 = vmatpush.bf16.msra.mxu0 0
      %365 = vmatpush.bf16.msra.mxu0 0
      %366 = vmatpush.bf16.msra.mxu0 0
      %367 = vmatpush.bf16.msra.mxu0 0
      %368 = vmatpush.bf16.msra.mxu0 0
      %369 = vmatpush.bf16.msra.mxu0 0
      %370 = vmatpush.bf16.msra.mxu0 0
      %371 = vmatpush.bf16.msra.mxu0 %v312
      %372 = vmatmul.bf16.gmra.mxu0 %v324
      %v373 = vpop.f32.mrf.mxu0
      %v374 = vadd.f32 %v345, %v373
      %v375 = vpop.f32.mrf.mxu0
      %v376 = vadd.f32 %v347, %v375
      %377 = vmatmul.bf16.gmra.mxu0 %v327
      %v378 = vpop.f32.mrf.mxu0
      %v379 = vadd.f32 %v350, %v378
      %v380 = vpop.f32.mrf.mxu0
      %v381 = vadd.f32 %v352, %v380
      %382 = vmatmul.bf16.gmra.mxu0 %v330
      %v383 = vpop.f32.mrf.mxu0
      %v384 = vadd.f32 %v355, %v383
      %v385 = vpop.f32.mrf.mxu0
      %v386 = vadd.f32 %v357, %v385
      %387 = vmatmul.bf16.gmra.mxu0 %v333
      %v388 = vpop.f32.mrf.mxu0
      %v389 = vadd.f32 %v360, %v388
      %v390 = vpop.f32.mrf.mxu0
      %v391 = vadd.f32 %v362, %v390
      %392 = vdwg.mxu0
      %v393 = vtanh.pop %v374
      %v394 = vtanh.pop %v376
      %v395 = vtanh.pop %v379
      %v396 = vtanh.pop %v381
      %v397 = vtanh.pop %v384
      %v398 = vtanh.pop %v386
      %v399 = vtanh.pop %v389
      %v400 = vtanh.pop %v391
      %vm401 = vcmask 97280
      %402 = vst.msk [vmem:[%s198] sm:$0xff] %vm401, %v393
      %403 = vst.msk [vmem:[%s198 + $0x8] sm:$0xff] %vm401, %v394
      %404 = vst.msk [vmem:[%s198 + $0x10] sm:$0xff] %vm401, %v395
      %405 = vst.msk [vmem:[%s198 + $0x18] sm:$0xff] %vm401, %v396
      %406 = vst.msk [vmem:[%s198 + $0x20] sm:$0xff] %vm401, %v397
      %407 = vst.msk [vmem:[%s198 + $0x28] sm:$0xff] %vm401, %v398
      %408 = vst.msk [vmem:[%s198 + $0x30] sm:$0xff] %vm401, %v399
      %409 = vst.msk [vmem:[%s198 + $0x38] sm:$0xff] %vm401, %v400
      %s410 = sadd.s32 %s18, %s19
      %s411 = smul.u32 8, %s410
      %p412 = scmp.lt.s32.totalorder %s411, 15
      %s413 = scalar_select %p412, %s411, 15
      %s414 = smul.addr %s413, 8
      %s415 = scalar_lea.vmem %s3, %s414
      // Predicated region
      $region33: #{unet_forward.15} parent=31 // pred_check
        %p416 = pneg %p116
      $region34: #{unet_forward.15} parent=31 // pred_check_branch
        %418 = sbr.rel (%p416) target = $region36
      $region35: #{unet_forward.15} parent=31 // pred_region
        %s419 = sadd.s32 %s18, %s19
        %s420 = smul.u32 8, %s419
      $region36: #{unet_forward.15} parent=31 // pred_fallthru
        _
    $region32: #{unet_forward.15} parent=5 // pred_fallthru
      _
    %p421 = scmp.le.s32.totalorder 2, %s9
    // Predicated region
    $region37: #{unet_forward.15} parent=5 // pred_check
      %p422 = pneg %p421
    $region38: #{unet_forward.15} parent=5 // pred_check_branch
      %424 = sbr.rel (%p422) target = $region40
    $region39: #{unet_forward.15} parent=5 // pred_region
      %s425 = ssub.s32 %s9, 2
      // Predicated region
      $region41: #{unet_forward.15} parent=39 // pred_check
        %p426 = pneg %p122
      $region42: #{unet_forward.15} parent=39 // pred_check_branch
        %428 = sbr.rel (%p426) target = $region44
      $region43: #{unet_forward.15} parent=39 // pred_region
        %s429 = sadd.s32 %s20, %s21
        %s430 = smul.u32 8, %s429
        %p431 = scmp.lt.s32.totalorder %s430, 15
        %s432 = scalar_select %p431, %s430, 15
        %s433 = smul.addr %s432, 8
        %s434 = scalar_lea.vmem %s3, %s433
      $region44: #{unet_forward.15} parent=39 // pred_fallthru
        _
    $region40: #{unet_forward.15} parent=5 // pred_fallthru
      _
  $region6: #{unet_forward.15} parent=0 // loop_footer
    %s13 = sadd.s32 1, %s9
  $region7: #{unet_forward.15} parent=0 // loop_footer_branch
    %8 = sbr.rel target = $region3
  $region8: #{unet_forward.15} parent=0 // loop_exit
    _

</llo_original>
